<compile_context>
chip_gen: v7x
topology: tpu7x:2x2x1
jax: 0.10.0
libtpu: 0.0.40
codegen_flags: <defaults>
</compile_context>

<pallas_src>
import functools

import jax
import jax.numpy as jnp
from jax import lax
from jax.experimental import pallas as pl
from jax.experimental.pallas import tpu as pltpu


def _round_up(x, m):
    return (x + m - 1) // m * m


# ----------------------------------------------------------------------------
# Fused 3x3x3 "same" conv kernel (stride 1), channels-last, tap accumulation.
# x_ref  : (Hp*Wp, Cin)  one padded depth slice (depth index d + kd)
# w_ref  : (9, Cin, Np)  the 9 in-plane taps of depth tap kd
# b_ref  : (1, Np)
# o_ref  : (M2, Np)      flattened output plane (includes wrap-around garbage
#                        columns, sliced off outside the kernel)
# acc_ref: (M2, Np) f32  accumulator, zeroed at kd==0, written at kd==k-1
# ----------------------------------------------------------------------------
def _tap_conv_kernel(x_ref, w_ref, b_ref, o_ref, acc_ref, *, k, wp, m2, apply_relu):
    kd = pl.program_id(2)

    @pl.when(kd == 0)
    def _init():
        acc_ref[...] = jnp.zeros_like(acc_ref)

    contrib = None
    for kh in range(k):
        for kw in range(k):
            off = kh * wp + kw                                   # static offset
            lhs = x_ref[off:off + m2, :]                         # (M2, Cin)
            part = jnp.dot(lhs, w_ref[kh * k + kw],
                           preferred_element_type=jnp.float32)   # (M2, Np)
            contrib = part if contrib is None else contrib + part
    acc_ref[...] += contrib

    @pl.when(kd == k - 1)
    def _finalize():
        res = acc_ref[...] + b_ref[...]
        if apply_relu:
            res = jnp.maximum(res, 0.0)
        o_ref[...] = res.astype(o_ref.dtype)


def fused_conv3d_same(x, w_taps, bias, *, apply_relu, compute_dtype=jnp.float32):
    """Stride-1 'same' 3D conv + bias (+ReLU), channels-last, fused in Pallas.

    x:      (B, D, H, W, Cin)
    w_taps: (3, 3, 3, Cin, N)   tap-major weights (kd, kh, kw, cin, cout)
    bias:   (N,)
    returns (B, D, H, W, N) float32
    """
    k = 3
    B, D, H, W, Cin = x.shape
    N = w_taps.shape[-1]
    assert w_taps.shape == (k, k, k, Cin, N)
    assert bias.shape == (N,)

    Np = _round_up(N, 128)                     # lane-dense matmul / store N
    Dp, Hp, Wp = D + 2, H + 2, W + 2
    M2 = (H - 1) * Wp + W                      # valid rows of the flat plane

    # pad once, cast to compute dtype (bf16 on v6e/v7x), flatten (H, W) plane
    x_pad = jnp.pad(x.astype(compute_dtype),
                    ((0, 0), (1, 1), (1, 1), (1, 1), (0, 0)))
    x_flat = x_pad.reshape(B, Dp, Hp * Wp, Cin)

    w_p = jnp.pad(w_taps.astype(compute_dtype),
                  ((0, 0), (0, 0), (0, 0), (0, 0), (0, Np - N)))
    w_packed = w_p.reshape(k, k * k, Cin, Np)
    b_packed = jnp.pad(bias.astype(jnp.float32), (0, Np - N)).reshape(1, Np)

    itemsize = jnp.dtype(compute_dtype).itemsize
    x_blk = Hp * Wp * Cin * itemsize
    w_blk = k * k * Cin * Np * itemsize
    o_blk = M2 * Np * 4
    vmem_est = 2 * (x_blk + w_blk + o_blk + Np * 4) + o_blk
    vmem_limit = int(min(48 * 2 ** 20, max(16 * 2 ** 20, 2 * vmem_est)))

    flops = int(2 * B * D * (k ** 3) * M2 * Cin * Np)
    bytes_accessed = int(k * B * Dp * Hp * Wp * Cin * itemsize   # slices read ~k times
                         + (k ** 3) * Cin * Np * itemsize
                         + B * D * M2 * Np * 4)

    out = pl.pallas_call(
        functools.partial(_tap_conv_kernel, k=k, wp=Wp, m2=M2,
                          apply_relu=apply_relu),
        out_shape=jax.ShapeDtypeStruct((B, D, M2, Np), jnp.float32),
        grid=(B, D, k),
        in_specs=[
            # one padded depth slice per step, shifted by the depth tap kd
            pl.BlockSpec((None, None, Hp * Wp, Cin),
                         lambda b, d, kd: (b, d + kd, 0, 0)),
            # 9 in-plane taps of the current depth tap
            pl.BlockSpec((None, k * k, Cin, Np),
                         lambda b, d, kd: (kd, 0, 0, 0)),
            pl.BlockSpec((1, Np), lambda b, d, kd: (0, 0)),
        ],
        out_specs=pl.BlockSpec((None, None, M2, Np),
                               lambda b, d, kd: (b, d, 0, 0)),
        scratch_shapes=[pltpu.VMEM((M2, Np), jnp.float32)],
        compiler_params=pltpu.CompilerParams(
            dimension_semantics=("parallel", "parallel", "arbitrary"),
            vmem_limit_bytes=vmem_limit),
        cost_estimate=pl.CostEstimate(flops=flops, transcendentals=0,
                                      bytes_accessed=bytes_accessed),
    )(x_flat, w_packed, b_packed)

    # drop channel padding, restore (H, W) from the flattened plane
    out = out[..., :N]
    out = jnp.pad(out, ((0, 0), (0, 0), (0, H * Wp - M2), (0, 0)))
    out = out.reshape(B, D, H, Wp, N)[:, :, :, :W, :]
    return out


# ----------------------------------------------------------------------------
# ConvTranspose3d(k=4, s=2, p=1) as a sub-pixel 3x3x3 conv + pixel shuffle
# ----------------------------------------------------------------------------
def _subpixel_deconv_taps(wt, bias):
    """Build effective (3,3,3,Cin,8*Cout) weights: output parity (rd,rh,rw) at
    base voxel q uses x_pad[q + r + j], j in {0,1}, with transposed-conv kernel
    index kmap[r][j]."""
    Cin, Cout = wt.shape[0], wt.shape[1]
    kmap = ((3, 1), (2, 0))
    w_eff = jnp.zeros((3, 3, 3, Cin, 2, 2, 2, Cout), wt.dtype)
    for rd in range(2):
        for rh in range(2):
            for rw in range(2):
                for jd in range(2):
                    for jh in range(2):
                        for jw in range(2):
                            w_eff = w_eff.at[rd + jd, rh + jh, rw + jw, :,
                                             rd, rh, rw, :].set(
                                wt[:, :, kmap[rd][jd], kmap[rh][jh], kmap[rw][jw]])
    return w_eff.reshape(3, 3, 3, Cin, 8 * Cout), jnp.tile(bias, 8)


def _pixel_shuffle_3d(y, cout):
    # y: (B, D, H, W, 8*Cout), channel layout (rd, rh, rw, cout)
    B, D, H, W, _ = y.shape
    y = y.reshape(B, D, H, W, 2, 2, 2, cout)
    y = jnp.transpose(y, (0, 1, 4, 2, 5, 3, 6, 7))
    return y.reshape(B, 2 * D, 2 * H, 2 * W, cout)


# ----------------------------------------------------------------------------
# unetUp_origin (is_deconv=True path)
# ----------------------------------------------------------------------------
class UnetUpOriginPallas:
    def __init__(self, in_size, out_size, is_deconv=True, n_concat=2, key=None):
        if not is_deconv:
            # TODO(synk): nn.UpsamplingBilinear3d does not exist in PyTorch; only
            # the is_deconv=True branch is implemented.
            raise NotImplementedError("only is_deconv=True is supported")
        conv_in = in_size + (n_concat - 2) * out_size
        self.in_size, self.out_size, self.conv_in = in_size, out_size, conv_in

        key = jax.random.PRNGKey(0) if key is None else key
        k0, k1, k2, k3 = jax.random.split(key, 4)
        # PyTorch-layout parameters
        self.up_w = 0.1 * jax.random.normal(k0, (in_size, out_size, 4, 4, 4), jnp.float32)
        self.up_b = 0.1 * jax.random.normal(k1, (out_size,), jnp.float32)
        self.conv_w = 0.1 * jax.random.normal(k2, (out_size, conv_in, 3, 3, 3), jnp.float32)
        self.conv_b = 0.1 * jax.random.normal(k3, (out_size,), jnp.float32)
        # kernel-ready tap weights, computed once
        self.up_w_taps, self.up_b_taps = _subpixel_deconv_taps(self.up_w, self.up_b)
        self.conv_w_taps = jnp.transpose(self.conv_w, (2, 3, 4, 1, 0))  # (kd,kh,kw,cin,cout)

    def __call__(self, inputs0, *skips, compute_dtype=jnp.float32):
        # NCDHW -> NDHWC once at the boundary; stay channels-last throughout.
        x = jnp.transpose(inputs0, (0, 2, 3, 4, 1))
        y = fused_conv3d_same(x, self.up_w_taps, self.up_b_taps,
                              apply_relu=False, compute_dtype=compute_dtype)
        y = _pixel_shuffle_3d(y, self.out_size)              # (B, 2D, 2H, 2W, out)
        for s in skips:
            y = jnp.concatenate([y, jnp.transpose(s, (0, 2, 3, 4, 1))], axis=-1)
        z = fused_conv3d_same(y, self.conv_w_taps, self.conv_b,
                              apply_relu=True, compute_dtype=compute_dtype)
        return jnp.transpose(z, (0, 4, 1, 2, 3))             # NDHWC -> NCDHW


# ----------------------------------------------------------------------------
# pure-JAX reference (lax conv) for numerical sanity checks
# ----------------------------------------------------------------------------
def _ref_forward(mod, inputs0, skip):
    dn = ('NCDHW', 'OIDHW', 'NCDHW')
    w_conv = jnp.transpose(mod.up_w[:, :, ::-1, ::-1, ::-1], (1, 0, 2, 3, 4))
    y = lax.conv_general_dilated(inputs0, w_conv, window_strides=(1, 1, 1),
                                 padding=[(2, 2)] * 3, lhs_dilation=(2, 2, 2),
                                 dimension_numbers=dn,
                                 precision=lax.Precision.HIGHEST)
    y = y + mod.up_b.reshape(1, -1, 1, 1, 1)
    y = jnp.concatenate([y, skip], axis=1)
    z = lax.conv_general_dilated(y, mod.conv_w, window_strides=(1, 1, 1),
                                 padding=[(1, 1)] * 3, dimension_numbers=dn,
                                 precision=lax.Precision.HIGHEST)
    return jnp.maximum(z + mod.conv_b.reshape(1, -1, 1, 1, 1), 0.0)


if __name__ == "__main__":
    in_size, out_size = 8, 4
    B, D = 2, 8
    key = jax.random.PRNGKey(0)
    k_in, k_skip, k_par = jax.random.split(key, 3)

    inputs0 = jax.random.normal(k_in, (B, in_size, D, D, D), jnp.float32)
    # skip connection at 2x resolution; channels chosen so concat matches conv in_ch
    skip = jax.random.normal(k_skip, (B, out_size, 2 * D, 2 * D, 2 * D), jnp.float32)

    mod = UnetUpOriginPallas(in_size, out_size, is_deconv=True, n_concat=2, key=k_par)
    ref = jax.block_until_ready(_ref_forward(mod, inputs0, skip))
    ref_scale = float(jnp.max(jnp.abs(ref))) + 1.0

    # float32 compute path: tight check against the lax reference
    fwd_f32 = jax.jit(functools.partial(mod.__call__, compute_dtype=jnp.float32))
    out = jax.block_until_ready(fwd_f32(inputs0, skip))
    assert out.shape == (B, out_size, 2 * D, 2 * D, 2 * D), out.shape
    assert bool(jnp.all(jnp.isfinite(out)))
    err = float(jnp.max(jnp.abs(out - ref)))
    assert err < 1e-3 * ref_scale, err

    # bf16 MXU path (v6e/v7x): bf16 operands, f32 accumulation, loose check
    fwd_bf16 = jax.jit(functools.partial(mod.__call__, compute_dtype=jnp.bfloat16))
    out_bf16 = jax.block_until_ready(fwd_bf16(inputs0, skip))
    assert out_bf16.shape == out.shape
    assert bool(jnp.all(jnp.isfinite(out_bf16)))
    err_bf16 = float(jnp.max(jnp.abs(out_bf16 - ref)))
    assert err_bf16 < 5e-2 * ref_scale, err_bf16

    print("KERNEL_OK")
</pallas_src>

<mosaic_0001>
module attributes {stable_mosaic.version = 11 : i64} {
  func.func @_tap_conv_kernel(%arg0: i32, %arg1: i32, %arg2: i32, %arg3: memref<1x1x100x8xf32, #tpu.memory_space<vmem>>, %arg4: memref<1x9x8x128xf32, #tpu.memory_space<vmem>>, %arg5: memref<1x128xf32, #tpu.memory_space<vmem>>, %arg6: memref<1x1x78x128xf32, #tpu.memory_space<vmem>>, %arg7: memref<78x128xf32, #tpu.memory_space<vmem>>) attributes {dimension_semantics = [#tpu.dimension_semantics<parallel>, #tpu.dimension_semantics<parallel>, #tpu.dimension_semantics<arbitrary>], iteration_bounds = array<i64: 2, 8, 3>, scalar_prefetch = 0 : i64, scratch_operands = 1 : i64, tpu.core_type = #tpu.core_type<tc>, window_params = [{transform_indices = @transform_0, window_bounds = array<i64: 1, 1, 100, 8>}, {transform_indices = @transform_1, window_bounds = array<i64: 1, 9, 8, 128>}, {pipeline_mode = #tpu.pipeline_mode<synchronous>, transform_indices = @transform_2, window_bounds = array<i64: 1, 128>}, {transform_indices = @transform_3, window_bounds = array<i64: 1, 1, 78, 128>}]} {
    %c0_i32 = arith.constant 0 : i32
    %0 = arith.cmpi eq, %arg2, %c0_i32 : i32
    %1 = arith.extui %0 : i1 to i32
    %c0_i32_0 = arith.constant 0 : i32
    %2 = arith.cmpi ne, %1, %c0_i32_0 : i32
    scf.if %2 {
      %cst_71 = arith.constant 0.000000e+00 : f32
      %62 = vector.broadcast %cst_71 : f32 to vector<78x128xf32>
      %c0_72 = arith.constant 0 : index
      %c0_73 = arith.constant 0 : index
      %63 = vector.load %arg7[%c0_72, %c0_73] : memref<78x128xf32, #tpu.memory_space<vmem>>, vector<78x128xf32>
      tpu.vector_store %arg7[%c0_72, %c0_73], %62 {strides = array<i32>} : memref<78x128xf32, #tpu.memory_space<vmem>>, vector<78x128xf32>,
    } else {
    }
    %c0 = arith.constant 0 : index
    %c0_1 = arith.constant 0 : index
    %c0_2 = arith.constant 0 : index
    %c0_3 = arith.constant 0 : index
    %3 = vector.load %arg3[%c0, %c0_1, %c0_2, %c0_3] : memref<1x1x100x8xf32, #tpu.memory_space<vmem>>, vector<1x1x78x8xf32>
    %4 = vector.shape_cast %3 : vector<1x1x78x8xf32> to vector<78x8xf32>
    %c0_4 = arith.constant 0 : index
    %c0_5 = arith.constant 0 : index
    %c0_6 = arith.constant 0 : index
    %c0_7 = arith.constant 0 : index
    %5 = vector.load %arg4[%c0_4, %c0_5, %c0_6, %c0_7] : memref<1x9x8x128xf32, #tpu.memory_space<vmem>>, vector<1x1x8x128xf32>
    %6 = vector.shape_cast %5 : vector<1x1x8x128xf32> to vector<8x128xf32>
    %cst = arith.constant dense<0.000000e+00> : vector<78x128xf32>
    %7 = tpu.matmul %4, %6, %cst {dimension_numbers = #tpu.dot_dimension_numbers<[1], [0], [0], [1], [0, 0, 1, 1], [], []>} : vector<78x8xf32>, vector<8x128xf32>, vector<78x128xf32> -> vector<78x128xf32>
    %c0_8 = arith.constant 0 : index
    %c0_9 = arith.constant 0 : index
    %c1 = arith.constant 1 : index
    %c0_10 = arith.constant 0 : index
    %8 = vector.load %arg3[%c0_8, %c0_9, %c1, %c0_10] : memref<1x1x100x8xf32, #tpu.memory_space<vmem>>, vector<1x1x78x8xf32>
    %9 = vector.shape_cast %8 : vector<1x1x78x8xf32> to vector<78x8xf32>
    %c0_11 = arith.constant 0 : index
    %c1_12 = arith.constant 1 : index
    %c0_13 = arith.constant 0 : index
    %c0_14 = arith.constant 0 : index
    %10 = vector.load %arg4[%c0_11, %c1_12, %c0_13, %c0_14] : memref<1x9x8x128xf32, #tpu.memory_space<vmem>>, vector<1x1x8x128xf32>
    %11 = vector.shape_cast %10 : vector<1x1x8x128xf32> to vector<8x128xf32>
    %cst_15 = arith.constant dense<0.000000e+00> : vector<78x128xf32>
    %12 = tpu.matmul %9, %11, %cst_15 {dimension_numbers = #tpu.dot_dimension_numbers<[1], [0], [0], [1], [0, 0, 1, 1], [], []>} : vector<78x8xf32>, vector<8x128xf32>, vector<78x128xf32> -> vector<78x128xf32>
    %13 = arith.addf %7, %12 : vector<78x128xf32>
    %c0_16 = arith.constant 0 : index
    %c0_17 = arith.constant 0 : index
    %c2 = arith.constant 2 : index
    %c0_18 = arith.constant 0 : index
    %14 = vector.load %arg3[%c0_16, %c0_17, %c2, %c0_18] : memref<1x1x100x8xf32, #tpu.memory_space<vmem>>, vector<1x1x78x8xf32>
    %15 = vector.shape_cast %14 : vector<1x1x78x8xf32> to vector<78x8xf32>
    %c0_19 = arith.constant 0 : index
    %c2_20 = arith.constant 2 : index
    %c0_21 = arith.constant 0 : index
    %c0_22 = arith.constant 0 : index
    %16 = vector.load %arg4[%c0_19, %c2_20, %c0_21, %c0_22] : memref<1x9x8x128xf32, #tpu.memory_space<vmem>>, vector<1x1x8x128xf32>
    %17 = vector.shape_cast %16 : vector<1x1x8x128xf32> to vector<8x128xf32>
    %cst_23 = arith.constant dense<0.000000e+00> : vector<78x128xf32>
    %18 = tpu.matmul %15, %17, %cst_23 {dimension_numbers = #tpu.dot_dimension_numbers<[1], [0], [0], [1], [0, 0, 1, 1], [], []>} : vector<78x8xf32>, vector<8x128xf32>, vector<78x128xf32> -> vector<78x128xf32>
    %19 = arith.addf %13, %18 : vector<78x128xf32>
    %c0_24 = arith.constant 0 : index
    %c0_25 = arith.constant 0 : index
    %c10 = arith.constant 10 : index
    %c0_26 = arith.constant 0 : index
    %20 = vector.load %arg3[%c0_24, %c0_25, %c10, %c0_26] : memref<1x1x100x8xf32, #tpu.memory_space<vmem>>, vector<1x1x78x8xf32>
    %21 = vector.shape_cast %20 : vector<1x1x78x8xf32> to vector<78x8xf32>
    %c0_27 = arith.constant 0 : index
    %c3 = arith.constant 3 : index
    %c0_28 = arith.constant 0 : index
    %c0_29 = arith.constant 0 : index
    %22 = vector.load %arg4[%c0_27, %c3, %c0_28, %c0_29] : memref<1x9x8x128xf32, #tpu.memory_space<vmem>>, vector<1x1x8x128xf32>
    %23 = vector.shape_cast %22 : vector<1x1x8x128xf32> to vector<8x128xf32>
    %cst_30 = arith.constant dense<0.000000e+00> : vector<78x128xf32>
    %24 = tpu.matmul %21, %23, %cst_30 {dimension_numbers = #tpu.dot_dimension_numbers<[1], [0], [0], [1], [0, 0, 1, 1], [], []>} : vector<78x8xf32>, vector<8x128xf32>, vector<78x128xf32> -> vector<78x128xf32>
    %25 = arith.addf %19, %24 : vector<78x128xf32>
    %c0_31 = arith.constant 0 : index
    %c0_32 = arith.constant 0 : index
    %c11 = arith.constant 11 : index
    %c0_33 = arith.constant 0 : index
    %26 = vector.load %arg3[%c0_31, %c0_32, %c11, %c0_33] : memref<1x1x100x8xf32, #tpu.memory_space<vmem>>, vector<1x1x78x8xf32>
    %27 = vector.shape_cast %26 : vector<1x1x78x8xf32> to vector<78x8xf32>
    %c0_34 = arith.constant 0 : index
    %c4 = arith.constant 4 : index
    %c0_35 = arith.constant 0 : index
    %c0_36 = arith.constant 0 : index
    %28 = vector.load %arg4[%c0_34, %c4, %c0_35, %c0_36] : memref<1x9x8x128xf32, #tpu.memory_space<vmem>>, vector<1x1x8x128xf32>
    %29 = vector.shape_cast %28 : vector<1x1x8x128xf32> to vector<8x128xf32>
    %cst_37 = arith.constant dense<0.000000e+00> : vector<78x128xf32>
    %30 = tpu.matmul %27, %29, %cst_37 {dimension_numbers = #tpu.dot_dimension_numbers<[1], [0], [0], [1], [0, 0, 1, 1], [], []>} : vector<78x8xf32>, vector<8x128xf32>, vector<78x128xf32> -> vector<78x128xf32>
    %31 = arith.addf %25, %30 : vector<78x128xf32>
    %c0_38 = arith.constant 0 : index
    %c0_39 = arith.constant 0 : index
    %c12 = arith.constant 12 : index
    %c0_40 = arith.constant 0 : index
    %32 = vector.load %arg3[%c0_38, %c0_39, %c12, %c0_40] : memref<1x1x100x8xf32, #tpu.memory_space<vmem>>, vector<1x1x78x8xf32>
    %33 = vector.shape_cast %32 : vector<1x1x78x8xf32> to vector<78x8xf32>
    %c0_41 = arith.constant 0 : index
    %c5 = arith.constant 5 : index
    %c0_42 = arith.constant 0 : index
    %c0_43 = arith.constant 0 : index
    %34 = vector.load %arg4[%c0_41, %c5, %c0_42, %c0_43] : memref<1x9x8x128xf32, #tpu.memory_space<vmem>>, vector<1x1x8x128xf32>
    %35 = vector.shape_cast %34 : vector<1x1x8x128xf32> to vector<8x128xf32>
    %cst_44 = arith.constant dense<0.000000e+00> : vector<78x128xf32>
    %36 = tpu.matmul %33, %35, %cst_44 {dimension_numbers = #tpu.dot_dimension_numbers<[1], [0], [0], [1], [0, 0, 1, 1], [], []>} : vector<78x8xf32>, vector<8x128xf32>, vector<78x128xf32> -> vector<78x128xf32>
    %37 = arith.addf %31, %36 : vector<78x128xf32>
    %c0_45 = arith.constant 0 : index
    %c0_46 = arith.constant 0 : index
    %c20 = arith.constant 20 : index
    %c0_47 = arith.constant 0 : index
    %38 = vector.load %arg3[%c0_45, %c0_46, %c20, %c0_47] : memref<1x1x100x8xf32, #tpu.memory_space<vmem>>, vector<1x1x78x8xf32>
    %39 = vector.shape_cast %38 : vector<1x1x78x8xf32> to vector<78x8xf32>
    %c0_48 = arith.constant 0 : index
    %c6 = arith.constant 6 : index
    %c0_49 = arith.constant 0 : index
    %c0_50 = arith.constant 0 : index
    %40 = vector.load %arg4[%c0_48, %c6, %c0_49, %c0_50] : memref<1x9x8x128xf32, #tpu.memory_space<vmem>>, vector<1x1x8x128xf32>
    %41 = vector.shape_cast %40 : vector<1x1x8x128xf32> to vector<8x128xf32>
    %cst_51 = arith.constant dense<0.000000e+00> : vector<78x128xf32>
    %42 = tpu.matmul %39, %41, %cst_51 {dimension_numbers = #tpu.dot_dimension_numbers<[1], [0], [0], [1], [0, 0, 1, 1], [], []>} : vector<78x8xf32>, vector<8x128xf32>, vector<78x128xf32> -> vector<78x128xf32>
    %43 = arith.addf %37, %42 : vector<78x128xf32>
    %c0_52 = arith.constant 0 : index
    %c0_53 = arith.constant 0 : index
    %c21 = arith.constant 21 : index
    %c0_54 = arith.constant 0 : index
    %44 = vector.load %arg3[%c0_52, %c0_53, %c21, %c0_54] : memref<1x1x100x8xf32, #tpu.memory_space<vmem>>, vector<1x1x78x8xf32>
    %45 = vector.shape_cast %44 : vector<1x1x78x8xf32> to vector<78x8xf32>
    %c0_55 = arith.constant 0 : index
    %c7 = arith.constant 7 : index
    %c0_56 = arith.constant 0 : index
    %c0_57 = arith.constant 0 : index
    %46 = vector.load %arg4[%c0_55, %c7, %c0_56, %c0_57] : memref<1x9x8x128xf32, #tpu.memory_space<vmem>>, vector<1x1x8x128xf32>
    %47 = vector.shape_cast %46 : vector<1x1x8x128xf32> to vector<8x128xf32>
    %cst_58 = arith.constant dense<0.000000e+00> : vector<78x128xf32>
    %48 = tpu.matmul %45, %47, %cst_58 {dimension_numbers = #tpu.dot_dimension_numbers<[1], [0], [0], [1], [0, 0, 1, 1], [], []>} : vector<78x8xf32>, vector<8x128xf32>, vector<78x128xf32> -> vector<78x128xf32>
    %49 = arith.addf %43, %48 : vector<78x128xf32>
    %c0_59 = arith.constant 0 : index
    %c0_60 = arith.constant 0 : index
    %c22 = arith.constant 22 : index
    %c0_61 = arith.constant 0 : index
    %50 = vector.load %arg3[%c0_59, %c0_60, %c22, %c0_61] : memref<1x1x100x8xf32, #tpu.memory_space<vmem>>, vector<1x1x78x8xf32>
    %51 = vector.shape_cast %50 : vector<1x1x78x8xf32> to vector<78x8xf32>
    %c0_62 = arith.constant 0 : index
    %c8 = arith.constant 8 : index
    %c0_63 = arith.constant 0 : index
    %c0_64 = arith.constant 0 : index
    %52 = vector.load %arg4[%c0_62, %c8, %c0_63, %c0_64] : memref<1x9x8x128xf32, #tpu.memory_space<vmem>>, vector<1x1x8x128xf32>
    %53 = vector.shape_cast %52 : vector<1x1x8x128xf32> to vector<8x128xf32>
    %cst_65 = arith.constant dense<0.000000e+00> : vector<78x128xf32>
    %54 = tpu.matmul %51, %53, %cst_65 {dimension_numbers = #tpu.dot_dimension_numbers<[1], [0], [0], [1], [0, 0, 1, 1], [], []>} : vector<78x8xf32>, vector<8x128xf32>, vector<78x128xf32> -> vector<78x128xf32>
    %55 = arith.addf %49, %54 : vector<78x128xf32>
    %c0_66 = arith.constant 0 : index
    %c0_67 = arith.constant 0 : index
    %56 = vector.load %arg7[%c0_66, %c0_67] : memref<78x128xf32, #tpu.memory_space<vmem>>, vector<78x128xf32>
    %57 = arith.addf %56, %55 : vector<78x128xf32>
    %c0_68 = arith.constant 0 : index
    %c0_69 = arith.constant 0 : index
    %58 = vector.load %arg7[%c0_68, %c0_69] : memref<78x128xf32, #tpu.memory_space<vmem>>, vector<78x128xf32>
    tpu.vector_store %arg7[%c0_68, %c0_69], %57 {strides = array<i32>} : memref<78x128xf32, #tpu.memory_space<vmem>>, vector<78x128xf32>,
    %c2_i32 = arith.constant 2 : i32
    %59 = arith.cmpi eq, %arg2, %c2_i32 : i32
    %60 = arith.extui %59 : i1 to i32
    %c0_i32_70 = arith.constant 0 : i32
    %61 = arith.cmpi ne, %60, %c0_i32_70 : i32
    scf.if %61 {
      %c0_71 = arith.constant 0 : index
      %c0_72 = arith.constant 0 : index
      %62 = vector.load %arg7[%c0_71, %c0_72] : memref<78x128xf32, #tpu.memory_space<vmem>>, vector<78x128xf32>
      %c0_73 = arith.constant 0 : index
      %c0_74 = arith.constant 0 : index
      %63 = vector.load %arg5[%c0_73, %c0_74] : memref<1x128xf32, #tpu.memory_space<vmem>>, vector<1x128xf32>
      %64 = vector.broadcast %63 : vector<1x128xf32> to vector<78x128xf32>
      %65 = arith.addf %62, %64 : vector<78x128xf32>
      %c0_75 = arith.constant 0 : index
      %c0_76 = arith.constant 0 : index
      %c0_77 = arith.constant 0 : index
      %c0_78 = arith.constant 0 : index
      %66 = vector.load %arg6[%c0_75, %c0_76, %c0_77, %c0_78] : memref<1x1x78x128xf32, #tpu.memory_space<vmem>>, vector<1x1x78x128xf32>
      %67 = vector.shape_cast %66 : vector<1x1x78x128xf32> to vector<78x128xf32>
      %68 = vector.shape_cast %65 : vector<78x128xf32> to vector<1x1x78x128xf32>
      tpu.vector_store %arg6[%c0_75, %c0_76, %c0_77, %c0_78], %68 {strides = array<i32>} : memref<1x1x78x128xf32, #tpu.memory_space<vmem>>, vector<1x1x78x128xf32>,
    } else {
    }
    return
  }
  func.func @transform_0(%arg0: i32, %arg1: i32, %arg2: i32) -> (i32, i32, i32, i32) {
    %0 = arith.addi %arg1, %arg2 : i32
    %c0_i32 = arith.constant 0 : i32
    %c0_i32_0 = arith.constant 0 : i32
    %c0_i32_1 = arith.constant 0 : i32
    return %arg0, %0, %c0_i32, %c0_i32_0 : i32, i32, i32, i32
  }
  func.func @transform_1(%arg0: i32, %arg1: i32, %arg2: i32) -> (i32, i32, i32, i32) {
    %c0_i32 = arith.constant 0 : i32
    %c0_i32_0 = arith.constant 0 : i32
    %c0_i32_1 = arith.constant 0 : i32
    %c0_i32_2 = arith.constant 0 : i32
    return %arg2, %c0_i32, %c0_i32_0, %c0_i32_1 : i32, i32, i32, i32
  }
  func.func @transform_2(%arg0: i32, %arg1: i32, %arg2: i32) -> (i32, i32) {
    %c0_i32 = arith.constant 0 : i32
    %c0_i32_0 = arith.constant 0 : i32
    %c0_i32_1 = arith.constant 0 : i32
    return %c0_i32, %c0_i32_0 : i32, i32
  }
  func.func @transform_3(%arg0: i32, %arg1: i32, %arg2: i32) -> (i32, i32, i32, i32) {
    %c0_i32 = arith.constant 0 : i32
    %c0_i32_0 = arith.constant 0 : i32
    %c0_i32_1 = arith.constant 0 : i32
    return %arg0, %arg1, %c0_i32, %c0_i32_0 : i32, i32, i32, i32
  }
}

module attributes {stable_mosaic.version = 11 : i64} {
  func.func @_tap_conv_kernel(%arg0: i32, %arg1: i32, %arg2: i32, %arg3: memref<1x1x324x8xf32, #tpu.memory_space<vmem>>, %arg4: memref<1x9x8x128xf32, #tpu.memory_space<vmem>>, %arg5: memref<1x128xf32, #tpu.memory_space<vmem>>, %arg6: memref<1x1x286x128xf32, #tpu.memory_space<vmem>>, %arg7: memref<286x128xf32, #tpu.memory_space<vmem>>) attributes {dimension_semantics = [#tpu.dimension_semantics<parallel>, #tpu.dimension_semantics<parallel>, #tpu.dimension_semantics<arbitrary>], iteration_bounds = array<i64: 2, 16, 3>, scalar_prefetch = 0 : i64, scratch_operands = 1 : i64, tpu.core_type = #tpu.core_type<tc>, window_params = [{transform_indices = @transform_0, window_bounds = array<i64: 1, 1, 324, 8>}, {transform_indices = @transform_1, window_bounds = array<i64: 1, 9, 8, 128>}, {pipeline_mode = #tpu.pipeline_mode<synchronous>, transform_indices = @transform_2, window_bounds = array<i64: 1, 128>}, {transform_indices = @transform_3, window_bounds = array<i64: 1, 1, 286, 128>}]} {
    %c0_i32 = arith.constant 0 : i32
    %0 = arith.cmpi eq, %arg2, %c0_i32 : i32
    %1 = arith.extui %0 : i1 to i32
    %c0_i32_0 = arith.constant 0 : i32
    %2 = arith.cmpi ne, %1, %c0_i32_0 : i32
    scf.if %2 {
      %cst_71 = arith.constant 0.000000e+00 : f32
      %62 = vector.broadcast %cst_71 : f32 to vector<286x128xf32>
      %c0_72 = arith.constant 0 : index
      %c0_73 = arith.constant 0 : index
      %63 = vector.load %arg7[%c0_72, %c0_73] : memref<286x128xf32, #tpu.memory_space<vmem>>, vector<286x128xf32>
      tpu.vector_store %arg7[%c0_72, %c0_73], %62 {strides = array<i32>} : memref<286x128xf32, #tpu.memory_space<vmem>>, vector<286x128xf32>,
    } else {
    }
    %c0 = arith.constant 0 : index
    %c0_1 = arith.constant 0 : index
    %c0_2 = arith.constant 0 : index
    %c0_3 = arith.constant 0 : index
    %3 = vector.load %arg3[%c0, %c0_1, %c0_2, %c0_3] : memref<1x1x324x8xf32, #tpu.memory_space<vmem>>, vector<1x1x286x8xf32>
    %4 = vector.shape_cast %3 : vector<1x1x286x8xf32> to vector<286x8xf32>
    %c0_4 = arith.constant 0 : index
    %c0_5 = arith.constant 0 : index
    %c0_6 = arith.constant 0 : index
    %c0_7 = arith.constant 0 : index
    %5 = vector.load %arg4[%c0_4, %c0_5, %c0_6, %c0_7] : memref<1x9x8x128xf32, #tpu.memory_space<vmem>>, vector<1x1x8x128xf32>
    %6 = vector.shape_cast %5 : vector<1x1x8x128xf32> to vector<8x128xf32>
    %cst = arith.constant dense<0.000000e+00> : vector<286x128xf32>
    %7 = tpu.matmul %4, %6, %cst {dimension_numbers = #tpu.dot_dimension_numbers<[1], [0], [0], [1], [0, 0, 1, 1], [], []>} : vector<286x8xf32>, vector<8x128xf32>, vector<286x128xf32> -> vector<286x128xf32>
    %c0_8 = arith.constant 0 : index
    %c0_9 = arith.constant 0 : index
    %c1 = arith.constant 1 : index
    %c0_10 = arith.constant 0 : index
    %8 = vector.load %arg3[%c0_8, %c0_9, %c1, %c0_10] : memref<1x1x324x8xf32, #tpu.memory_space<vmem>>, vector<1x1x286x8xf32>
    %9 = vector.shape_cast %8 : vector<1x1x286x8xf32> to vector<286x8xf32>
    %c0_11 = arith.constant 0 : index
    %c1_12 = arith.constant 1 : index
    %c0_13 = arith.constant 0 : index
    %c0_14 = arith.constant 0 : index
    %10 = vector.load %arg4[%c0_11, %c1_12, %c0_13, %c0_14] : memref<1x9x8x128xf32, #tpu.memory_space<vmem>>, vector<1x1x8x128xf32>
    %11 = vector.shape_cast %10 : vector<1x1x8x128xf32> to vector<8x128xf32>
    %cst_15 = arith.constant dense<0.000000e+00> : vector<286x128xf32>
    %12 = tpu.matmul %9, %11, %cst_15 {dimension_numbers = #tpu.dot_dimension_numbers<[1], [0], [0], [1], [0, 0, 1, 1], [], []>} : vector<286x8xf32>, vector<8x128xf32>, vector<286x128xf32> -> vector<286x128xf32>
    %13 = arith.addf %7, %12 : vector<286x128xf32>
    %c0_16 = arith.constant 0 : index
    %c0_17 = arith.constant 0 : index
    %c2 = arith.constant 2 : index
    %c0_18 = arith.constant 0 : index
    %14 = vector.load %arg3[%c0_16, %c0_17, %c2, %c0_18] : memref<1x1x324x8xf32, #tpu.memory_space<vmem>>, vector<1x1x286x8xf32>
    %15 = vector.shape_cast %14 : vector<1x1x286x8xf32> to vector<286x8xf32>
    %c0_19 = arith.constant 0 : index
    %c2_20 = arith.constant 2 : index
    %c0_21 = arith.constant 0 : index
    %c0_22 = arith.constant 0 : index
    %16 = vector.load %arg4[%c0_19, %c2_20, %c0_21, %c0_22] : memref<1x9x8x128xf32, #tpu.memory_space<vmem>>, vector<1x1x8x128xf32>
    %17 = vector.shape_cast %16 : vector<1x1x8x128xf32> to vector<8x128xf32>
    %cst_23 = arith.constant dense<0.000000e+00> : vector<286x128xf32>
    %18 = tpu.matmul %15, %17, %cst_23 {dimension_numbers = #tpu.dot_dimension_numbers<[1], [0], [0], [1], [0, 0, 1, 1], [], []>} : vector<286x8xf32>, vector<8x128xf32>, vector<286x128xf32> -> vector<286x128xf32>
    %19 = arith.addf %13, %18 : vector<286x128xf32>
    %c0_24 = arith.constant 0 : index
    %c0_25 = arith.constant 0 : index
    %c18 = arith.constant 18 : index
    %c0_26 = arith.constant 0 : index
    %20 = vector.load %arg3[%c0_24, %c0_25, %c18, %c0_26] : memref<1x1x324x8xf32, #tpu.memory_space<vmem>>, vector<1x1x286x8xf32>
    %21 = vector.shape_cast %20 : vector<1x1x286x8xf32> to vector<286x8xf32>
    %c0_27 = arith.constant 0 : index
    %c3 = arith.constant 3 : index
    %c0_28 = arith.constant 0 : index
    %c0_29 = arith.constant 0 : index
    %22 = vector.load %arg4[%c0_27, %c3, %c0_28, %c0_29] : memref<1x9x8x128xf32, #tpu.memory_space<vmem>>, vector<1x1x8x128xf32>
    %23 = vector.shape_cast %22 : vector<1x1x8x128xf32> to vector<8x128xf32>
    %cst_30 = arith.constant dense<0.000000e+00> : vector<286x128xf32>
    %24 = tpu.matmul %21, %23, %cst_30 {dimension_numbers = #tpu.dot_dimension_numbers<[1], [0], [0], [1], [0, 0, 1, 1], [], []>} : vector<286x8xf32>, vector<8x128xf32>, vector<286x128xf32> -> vector<286x128xf32>
    %25 = arith.addf %19, %24 : vector<286x128xf32>
    %c0_31 = arith.constant 0 : index
    %c0_32 = arith.constant 0 : index
    %c19 = arith.constant 19 : index
    %c0_33 = arith.constant 0 : index
    %26 = vector.load %arg3[%c0_31, %c0_32, %c19, %c0_33] : memref<1x1x324x8xf32, #tpu.memory_space<vmem>>, vector<1x1x286x8xf32>
    %27 = vector.shape_cast %26 : vector<1x1x286x8xf32> to vector<286x8xf32>
    %c0_34 = arith.constant 0 : index
    %c4 = arith.constant 4 : index
    %c0_35 = arith.constant 0 : index
    %c0_36 = arith.constant 0 : index
    %28 = vector.load %arg4[%c0_34, %c4, %c0_35, %c0_36] : memref<1x9x8x128xf32, #tpu.memory_space<vmem>>, vector<1x1x8x128xf32>
    %29 = vector.shape_cast %28 : vector<1x1x8x128xf32> to vector<8x128xf32>
    %cst_37 = arith.constant dense<0.000000e+00> : vector<286x128xf32>
    %30 = tpu.matmul %27, %29, %cst_37 {dimension_numbers = #tpu.dot_dimension_numbers<[1], [0], [0], [1], [0, 0, 1, 1], [], []>} : vector<286x8xf32>, vector<8x128xf32>, vector<286x128xf32> -> vector<286x128xf32>
    %31 = arith.addf %25, %30 : vector<286x128xf32>
    %c0_38 = arith.constant 0 : index
    %c0_39 = arith.constant 0 : index
    %c20 = arith.constant 20 : index
    %c0_40 = arith.constant 0 : index
    %32 = vector.load %arg3[%c0_38, %c0_39, %c20, %c0_40] : memref<1x1x324x8xf32, #tpu.memory_space<vmem>>, vector<1x1x286x8xf32>
    %33 = vector.shape_cast %32 : vector<1x1x286x8xf32> to vector<286x8xf32>
    %c0_41 = arith.constant 0 : index
    %c5 = arith.constant 5 : index
    %c0_42 = arith.constant 0 : index
    %c0_43 = arith.constant 0 : index
    %34 = vector.load %arg4[%c0_41, %c5, %c0_42, %c0_43] : memref<1x9x8x128xf32, #tpu.memory_space<vmem>>, vector<1x1x8x128xf32>
    %35 = vector.shape_cast %34 : vector<1x1x8x128xf32> to vector<8x128xf32>
    %cst_44 = arith.constant dense<0.000000e+00> : vector<286x128xf32>
    %36 = tpu.matmul %33, %35, %cst_44 {dimension_numbers = #tpu.dot_dimension_numbers<[1], [0], [0], [1], [0, 0, 1, 1], [], []>} : vector<286x8xf32>, vector<8x128xf32>, vector<286x128xf32> -> vector<286x128xf32>
    %37 = arith.addf %31, %36 : vector<286x128xf32>
    %c0_45 = arith.constant 0 : index
    %c0_46 = arith.constant 0 : index
    %c36 = arith.constant 36 : index
    %c0_47 = arith.constant 0 : index
    %38 = vector.load %arg3[%c0_45, %c0_46, %c36, %c0_47] : memref<1x1x324x8xf32, #tpu.memory_space<vmem>>, vector<1x1x286x8xf32>
    %39 = vector.shape_cast %38 : vector<1x1x286x8xf32> to vector<286x8xf32>
    %c0_48 = arith.constant 0 : index
    %c6 = arith.constant 6 : index
    %c0_49 = arith.constant 0 : index
    %c0_50 = arith.constant 0 : index
    %40 = vector.load %arg4[%c0_48, %c6, %c0_49, %c0_50] : memref<1x9x8x128xf32, #tpu.memory_space<vmem>>, vector<1x1x8x128xf32>
    %41 = vector.shape_cast %40 : vector<1x1x8x128xf32> to vector<8x128xf32>
    %cst_51 = arith.constant dense<0.000000e+00> : vector<286x128xf32>
    %42 = tpu.matmul %39, %41, %cst_51 {dimension_numbers = #tpu.dot_dimension_numbers<[1], [0], [0], [1], [0, 0, 1, 1], [], []>} : vector<286x8xf32>, vector<8x128xf32>, vector<286x128xf32> -> vector<286x128xf32>
    %43 = arith.addf %37, %42 : vector<286x128xf32>
    %c0_52 = arith.constant 0 : index
    %c0_53 = arith.constant 0 : index
    %c37 = arith.constant 37 : index
    %c0_54 = arith.constant 0 : index
    %44 = vector.load %arg3[%c0_52, %c0_53, %c37, %c0_54] : memref<1x1x324x8xf32, #tpu.memory_space<vmem>>, vector<1x1x286x8xf32>
    %45 = vector.shape_cast %44 : vector<1x1x286x8xf32> to vector<286x8xf32>
    %c0_55 = arith.constant 0 : index
    %c7 = arith.constant 7 : index
    %c0_56 = arith.constant 0 : index
    %c0_57 = arith.constant 0 : index
    %46 = vector.load %arg4[%c0_55, %c7, %c0_56, %c0_57] : memref<1x9x8x128xf32, #tpu.memory_space<vmem>>, vector<1x1x8x128xf32>
    %47 = vector.shape_cast %46 : vector<1x1x8x128xf32> to vector<8x128xf32>
    %cst_58 = arith.constant dense<0.000000e+00> : vector<286x128xf32>
    %48 = tpu.matmul %45, %47, %cst_58 {dimension_numbers = #tpu.dot_dimension_numbers<[1], [0], [0], [1], [0, 0, 1, 1], [], []>} : vector<286x8xf32>, vector<8x128xf32>, vector<286x128xf32> -> vector<286x128xf32>
    %49 = arith.addf %43, %48 : vector<286x128xf32>
    %c0_59 = arith.constant 0 : index
    %c0_60 = arith.constant 0 : index
    %c38 = arith.constant 38 : index
    %c0_61 = arith.constant 0 : index
    %50 = vector.load %arg3[%c0_59, %c0_60, %c38, %c0_61] : memref<1x1x324x8xf32, #tpu.memory_space<vmem>>, vector<1x1x286x8xf32>
    %51 = vector.shape_cast %50 : vector<1x1x286x8xf32> to vector<286x8xf32>
    %c0_62 = arith.constant 0 : index
    %c8 = arith.constant 8 : index
    %c0_63 = arith.constant 0 : index
    %c0_64 = arith.constant 0 : index
    %52 = vector.load %arg4[%c0_62, %c8, %c0_63, %c0_64] : memref<1x9x8x128xf32, #tpu.memory_space<vmem>>, vector<1x1x8x128xf32>
    %53 = vector.shape_cast %52 : vector<1x1x8x128xf32> to vector<8x128xf32>
    %cst_65 = arith.constant dense<0.000000e+00> : vector<286x128xf32>
    %54 = tpu.matmul %51, %53, %cst_65 {dimension_numbers = #tpu.dot_dimension_numbers<[1], [0], [0], [1], [0, 0, 1, 1], [], []>} : vector<286x8xf32>, vector<8x128xf32>, vector<286x128xf32> -> vector<286x128xf32>
    %55 = arith.addf %49, %54 : vector<286x128xf32>
    %c0_66 = arith.constant 0 : index
    %c0_67 = arith.constant 0 : index
    %56 = vector.load %arg7[%c0_66, %c0_67] : memref<286x128xf32, #tpu.memory_space<vmem>>, vector<286x128xf32>
    %57 = arith.addf %56, %55 : vector<286x128xf32>
    %c0_68 = arith.constant 0 : index
    %c0_69 = arith.constant 0 : index
    %58 = vector.load %arg7[%c0_68, %c0_69] : memref<286x128xf32, #tpu.memory_space<vmem>>, vector<286x128xf32>
    tpu.vector_store %arg7[%c0_68, %c0_69], %57 {strides = array<i32>} : memref<286x128xf32, #tpu.memory_space<vmem>>, vector<286x128xf32>,
    %c2_i32 = arith.constant 2 : i32
    %59 = arith.cmpi eq, %arg2, %c2_i32 : i32
    %60 = arith.extui %59 : i1 to i32
    %c0_i32_70 = arith.constant 0 : i32
    %61 = arith.cmpi ne, %60, %c0_i32_70 : i32
    scf.if %61 {
      %c0_71 = arith.constant 0 : index
      %c0_72 = arith.constant 0 : index
      %62 = vector.load %arg7[%c0_71, %c0_72] : memref<286x128xf32, #tpu.memory_space<vmem>>, vector<286x128xf32>
      %c0_73 = arith.constant 0 : index
      %c0_74 = arith.constant 0 : index
      %63 = vector.load %arg5[%c0_73, %c0_74] : memref<1x128xf32, #tpu.memory_space<vmem>>, vector<1x128xf32>
      %64 = vector.broadcast %63 : vector<1x128xf32> to vector<286x128xf32>
      %65 = arith.addf %62, %64 : vector<286x128xf32>
      %cst_75 = arith.constant 0.000000e+00 : f32
      %66 = vector.broadcast %cst_75 : f32 to vector<286x128xf32>
      %67 = arith.maximumf %65, %66 : vector<286x128xf32>
      %c0_76 = arith.constant 0 : index
      %c0_77 = arith.constant 0 : index
      %c0_78 = arith.constant 0 : index
      %c0_79 = arith.constant 0 : index
      %68 = vector.load %arg6[%c0_76, %c0_77, %c0_78, %c0_79] : memref<1x1x286x128xf32, #tpu.memory_space<vmem>>, vector<1x1x286x128xf32>
      %69 = vector.shape_cast %68 : vector<1x1x286x128xf32> to vector<286x128xf32>
      %70 = vector.shape_cast %67 : vector<286x128xf32> to vector<1x1x286x128xf32>
      tpu.vector_store %arg6[%c0_76, %c0_77, %c0_78, %c0_79], %70 {strides = array<i32>} : memref<1x1x286x128xf32, #tpu.memory_space<vmem>>, vector<1x1x286x128xf32>,
    } else {
    }
    return
  }
  func.func @transform_0(%arg0: i32, %arg1: i32, %arg2: i32) -> (i32, i32, i32, i32) {
    %0 = arith.addi %arg1, %arg2 : i32
    %c0_i32 = arith.constant 0 : i32
    %c0_i32_0 = arith.constant 0 : i32
    %c0_i32_1 = arith.constant 0 : i32
    return %arg0, %0, %c0_i32, %c0_i32_0 : i32, i32, i32, i32
  }
  func.func @transform_1(%arg0: i32, %arg1: i32, %arg2: i32) -> (i32, i32, i32, i32) {
    %c0_i32 = arith.constant 0 : i32
    %c0_i32_0 = arith.constant 0 : i32
    %c0_i32_1 = arith.constant 0 : i32
    %c0_i32_2 = arith.constant 0 : i32
    return %arg2, %c0_i32, %c0_i32_0, %c0_i32_1 : i32, i32, i32, i32
  }
  func.func @transform_2(%arg0: i32, %arg1: i32, %arg2: i32) -> (i32, i32) {
    %c0_i32 = arith.constant 0 : i32
    %c0_i32_0 = arith.constant 0 : i32
    %c0_i32_1 = arith.constant 0 : i32
    return %c0_i32, %c0_i32_0 : i32, i32
  }
  func.func @transform_3(%arg0: i32, %arg1: i32, %arg2: i32) -> (i32, i32, i32, i32) {
    %c0_i32 = arith.constant 0 : i32
    %c0_i32_0 = arith.constant 0 : i32
    %c0_i32_1 = arith.constant 0 : i32
    return %arg0, %arg1, %c0_i32, %c0_i32_0 : i32, i32, i32, i32
  }
}

</mosaic_0001>

<llo_original>
// kernel: a_call__.2
$region0: #{a_call__.2}
  #allocation0 [shape = 'u32[]', space=smem, size = 0x4, offset = 0x4, fixed_abs, tag = 'smem constant byte address 0x4 - core index']
  #allocation1 [shape = 'u32[144,128]{1,0:T(1,128)}', space=vmem, size = 0x12000, scoped, tag = 'internal scratch']
  #allocation2 [shape = 'f32[78,128]{1,0:T(8,128)}', space=vmem, size = 0xa000, scoped, tag = 'scratch operand']
  %s0 = inlined_call_operand.vmem [shape: f32[2,10,100,8], index: 0, kind: input, shape index: {}]
  %s1 = inlined_call_operand.hbm [shape: f32[3,9,8,128], index: 1, kind: input, shape index: {}]
  %s2 = inlined_call_operand.hbm [shape: f32[1,128], index: 2, kind: input, shape index: {}]
  %s3 = inlined_call_operand.vmem [shape: f32[2,8,78,128], index: 3, kind: output, shape index: {}]
  %s4 = sld [smem:[#allocation0]]
  $region61: #{a_call__.2} parent=0
    _
  %s6 = ssub.s32 1, %s4
  %s7 = scalar_select 0, %s6, %s4
  $region1: #{a_call__.2} parent=0
    #allocation3 [shape = 'u8[73728]{0}', space=vmem, size = 0x12000, scoped, tag = 'input window, operand 1']
    #allocation4 [shape = 's32[2]{0}', space=sflag, size = 0x8, scoped, tag = 'scoped memory for a_call__.2']
    #allocation5 [shape = 'u8[512]{0}', space=vmem, size = 0x400, scoped, tag = 'input window, operand 2, single buffered']
    #allocation6 [shape = 's32[1]{0}', space=sflag, size = 0x4, scoped, tag = 'scoped memory for a_call__.2']
    %8 = vsyncpa [#allocation4], 0
    %s9 = scalar_lea.sflag [#allocation4], 1
    %10 = vsyncpa %s9, 0
    %11 = vsyncpa [#allocation6], 0
    loop: start=0, step=1, limit=50
    $region2: #{a_call__.2} parent=1 // loop_pre_header
      _
    $region3: #{a_call__.2} parent=1 // loop_header
      %s13 = sphi 0, %s17
      %p14 = scmp.ge.s32.totalorder %s13, 50
      %s20 = sphi 0, %s39
      %s21 = sphi 0, %s35
      %s22 = sphi 0, %s31
      %s23 = sphi 0, %s20
      %s24 = sphi 0, %s21
      %s25 = sphi 0, %s22
      %s26 = sphi 0, %s23
      %s27 = sphi 0, %s24
      %s28 = sphi 0, %s25
      %s46 = sphi 0, %s48
      %s49 = sphi 0, %s46
      %s50 = sphi 0, %s49
      %s66 = sphi 0, %s50
      %s72 = sphi 0, %s74
      %s75 = sphi 0, %s72
      %s76 = sphi 0, %s75
      %s92 = sphi 0, %s76
      %s96 = sphi 0, %s96
      %s98 = sphi 0, %s96
      %s99 = sphi 0, %s98
      %s113 = sphi 0, %s99
      %s121 = sphi 0, %s123
      %s124 = sphi 0, %s121
      %s125 = sphi 0, %s124
      %s141 = sphi 0, %s125
    $region4: #{a_call__.2} parent=1 // loop_header_branch
      %16 = sbr.rel (%p14) target = $region8
    $region5: #{a_call__.2} parent=1 // loop_body
      %s18 = ssub.s32 %s13, 1
      %s19 = ssub.s32 %s13, 2
      %s29 = sadd.s32 1, %s22
      %p30 = scmp.ge.s32.totalorder %s29, 3
      %s31 = scalar_select %p30, 0, %s29
      %s32 = sadd.s32 1, %s21
      %s33 = scalar_select %p30, %s32, %s21
      %p34 = scmp.ge.s32.totalorder %s33, 8
      %s35 = scalar_select %p34, 0, %s33
      %s36 = sadd.s32 1, %s20
      %s37 = scalar_select %p34, %s36, %s20
      %p38 = scmp.ge.s32.totalorder %s37, 2
      %s39 = scalar_select %p38, 0, %s37
      %s40 = sadd.s32 %s21, %s22
      %s41 = sadd.s32 %s35, %s31
      %s42 = ssub.s32 %s20, %s39
      %s43 = ssub.s32 %s40, %s41
      %s44 = sor.u32 %s42, %s43
      %p45 = scmp.eq.s32.totalorder %s44, 0
      %s47 = sadd.s32 %s46, 1
      %s48 = scalar_select %p45, %s46, %s47
      %p51 = pneg %p45
      %p52 = scmp.eq.s32.totalorder %s13, 47
      %p53 = por %p51, %p52
      %p54 = scmp.ne.s32.totalorder %s46, %s49
      %p55 = scmp.eq.s32.totalorder %s13, 0
      %p56 = por %p54, %p55
      %p57 = scmp.ne.s32.totalorder %s46, %s49
      %p58 = scmp.eq.s32.totalorder %s18, 47
      %p59 = por %p57, %p58
      %p60 = scmp.ne.s32.totalorder %s49, %s50
      %p61 = scmp.eq.s32.totalorder %s18, 0
      %p62 = por %p60, %p61
      %p63 = scmp.ne.s32.totalorder %s49, %s50
      %p64 = scmp.eq.s32.totalorder %s19, 47
      %p65 = por %p63, %p64
      %p67 = scmp.ne.s32.totalorder %s50, %s66
      %p68 = scmp.eq.s32.totalorder %s19, 0
      %p69 = por %p67, %p68
      %s70 = ssub.s32 %s22, %s31
      %p71 = scmp.eq.s32.totalorder %s70, 0
      %s73 = sadd.s32 %s72, 1
      %s74 = scalar_select %p71, %s72, %s73
      %p77 = pneg %p71
      %p78 = scmp.eq.s32.totalorder %s13, 47
      %p79 = por %p77, %p78
      %p80 = scmp.ne.s32.totalorder %s72, %s75
      %p81 = scmp.eq.s32.totalorder %s13, 0
      %p82 = por %p80, %p81
      %p83 = scmp.ne.s32.totalorder %s72, %s75
      %p84 = scmp.eq.s32.totalorder %s18, 47
      %p85 = por %p83, %p84
      %p86 = scmp.ne.s32.totalorder %s75, %s76
      %p87 = scmp.eq.s32.totalorder %s18, 0
      %p88 = por %p86, %p87
      %p89 = scmp.ne.s32.totalorder %s75, %s76
      %p90 = scmp.eq.s32.totalorder %s19, 47
      %p91 = por %p89, %p90
      %p93 = scmp.ne.s32.totalorder %s76, %s92
      %p94 = scmp.eq.s32.totalorder %s19, 0
      %p95 = por %p93, %p94
      %s97 = sadd.s32 %s96, 1
      %p100 = scmp.eq.s32.totalorder %s13, 47
      %p101 = scmp.ne.s32.totalorder %s96, %s98
      %p102 = scmp.eq.s32.totalorder %s13, 0
      %p103 = por %p101, %p102
      %p104 = scmp.ne.s32.totalorder %s96, %s98
      %p105 = scmp.eq.s32.totalorder %s18, 47
      %p106 = por %p104, %p105
      %p107 = scmp.ne.s32.totalorder %s98, %s99
      %p108 = scmp.eq.s32.totalorder %s18, 0
      %p109 = por %p107, %p108
      %p110 = scmp.ne.s32.totalorder %s98, %s99
      %p111 = scmp.eq.s32.totalorder %s19, 47
      %p112 = por %p110, %p111
      %p114 = scmp.ne.s32.totalorder %s99, %s113
      %p115 = scmp.eq.s32.totalorder %s19, 0
      %p116 = por %p114, %p115
      %s117 = ssub.s32 %s20, %s39
      %s118 = ssub.s32 %s21, %s35
      %s119 = sor.u32 %s117, %s118
      %p120 = scmp.eq.s32.totalorder %s119, 0
      %s122 = sadd.s32 %s121, 1
      %s123 = scalar_select %p120, %s121, %s122
      %p126 = pneg %p120
      %p127 = scmp.eq.s32.totalorder %s13, 47
      %p128 = por %p126, %p127
      %p129 = scmp.ne.s32.totalorder %s121, %s124
      %p130 = scmp.eq.s32.totalorder %s13, 0
      %p131 = por %p129, %p130
      %p132 = scmp.ne.s32.totalorder %s121, %s124
      %p133 = scmp.eq.s32.totalorder %s18, 47
      %p134 = por %p132, %p133
      %p135 = scmp.ne.s32.totalorder %s124, %s125
      %p136 = scmp.eq.s32.totalorder %s18, 0
      %p137 = por %p135, %p136
      %p138 = scmp.ne.s32.totalorder %s124, %s125
      %p139 = scmp.eq.s32.totalorder %s19, 47
      %p140 = por %p138, %p139
      %p142 = scmp.ne.s32.totalorder %s125, %s141
      %p143 = scmp.eq.s32.totalorder %s19, 0
      %p144 = por %p142, %p143
      %p145 = scmp.le.s32.totalorder 1, %s13
      %p146 = scmp.lt.s32.totalorder %s13, 49
      %p147 = pnand %p145, %p146
      %p148 = pneg %p147
      // Predicated region
      $region9: #{a_call__.2} parent=5 // pred_check
        _
      $region10: #{a_call__.2} parent=5 // pred_check_branch
        %150 = sbr.rel (%p147) target = $region12
      $region11: #{a_call__.2} parent=5 // pred_region
        %s151 = ssub.s32 %s13, 1
        // Predicated region
        $region13: #{a_call__.2} parent=11 // pred_check
          %p152 = pneg %p109
        $region14: #{a_call__.2} parent=11 // pred_check_branch
          %154 = sbr.rel (%p152) target = $region16
        $region15: #{a_call__.2} parent=11 // pred_region
          %s156 = ssub.s32 16, 16
          %157 = vsyncadd [#allocation6], %s156
          %s159 = sshll.u32 [#allocation5], 4
          %s160 = int_to_ptr.vmem [resolvable:$true] %s159
          %162 = dma.hbm_to_vmem [thread:$0]  %s2, 16, %s160, [#allocation6]
        $region16: #{a_call__.2} parent=11 // pred_fallthru
          _
      $region12: #{a_call__.2} parent=5 // pred_fallthru
        _
      %p163 = scmp.lt.s32.totalorder %s13, 48
      // Predicated region
      $region17: #{a_call__.2} parent=5 // pred_check
        %p164 = pneg %p163
      $region18: #{a_call__.2} parent=5 // pred_check_branch
        %166 = sbr.rel (%p164) target = $region20
      $region19: #{a_call__.2} parent=5 // pred_region
        // Predicated region
        $region21: #{a_call__.2} parent=19 // pred_check
          %p167 = pneg %p56
        $region22: #{a_call__.2} parent=19 // pred_check_branch
          %169 = sbr.rel (%p167) target = $region24
        $region23: #{a_call__.2} parent=19 // pred_region
          %s170 = sadd.s32 %s21, %s22
          %p171 = scmp.lt.s32.totalorder %s20, 1
          %s172 = scalar_select %p171, %s20, 1
          %p173 = scmp.lt.s32.totalorder %s170, 9
          %s174 = scalar_select %p173, %s170, 9
          %s175 = smul.addr %s174, 13
          %s176 = smul.addr %s172, 130
          %s177 = sadd.s32 %s175, %s176
          %s178 = smul.addr %s177, 8
          %s179 = scalar_lea.vmem %s0, %s178
          %s180 = sadd.s32 %s21, %s22
        $region24: #{a_call__.2} parent=19 // pred_fallthru
          _
        // Predicated region
        $region25: #{a_call__.2} parent=19 // pred_check
          %p181 = pneg %p82
        $region26: #{a_call__.2} parent=19 // pred_check_branch
          %183 = sbr.rel (%p181) target = $region28
        $region27: #{a_call__.2} parent=19 // pred_region
          %s184 = sand.u32 %s72, 1
          %s185 = scalar_lea.sflag [#allocation4], %s184
          %s186 = sand.u32 %s72, 1
          %s187 = smul.addr %s186, 72
          %s188 = scalar_lea.vmem [#allocation3], %s187
          %s190 = ssub.s32 1152, 1152
          %191 = vsyncadd %s185, %s190
          %s192 = smul.addr %s22, 9
          %s193 = smul.addr %s192, 128
          %s194 = scalar_lea.hbm %s1, %s193
          %s195 = sshll.u32 %s188, 4
          %s196 = int_to_ptr.vmem [resolvable:$true] %s195
          %201 = dma.hbm_to_vmem [thread:$0]  %s194, 1152, %s196, %s185, 128, 128, 8
        $region28: #{a_call__.2} parent=19 // pred_fallthru
          _
      $region20: #{a_call__.2} parent=5 // pred_fallthru
        _
      %p202 = scmp.le.s32.totalorder 1, %s13
      %p203 = scmp.lt.s32.totalorder %s13, 49
      %p204 = pnand %p202, %p203
      %p205 = pneg %p204
      // Predicated region
      $region29: #{a_call__.2} parent=5 // pred_check
        _
      $region30: #{a_call__.2} parent=5 // pred_check_branch
        %207 = sbr.rel (%p204) target = $region32
      $region31: #{a_call__.2} parent=5 // pred_region
        %s208 = ssub.s32 %s13, 1
        %s209 = sand.u32 %s75, 1
        %s210 = scalar_lea.sflag [#allocation4], %s209
        %s211 = sand.u32 %s75, 1
        %s212 = smul.addr %s211, 72
        %s213 = scalar_lea.vmem [#allocation3], %s212
        // Predicated region
        $region33: #{a_call__.2} parent=31 // pred_check
          %p214 = pneg %p88
        $region34: #{a_call__.2} parent=31 // pred_check_branch
          %216 = sbr.rel (%p214) target = $region36
        $region35: #{a_call__.2} parent=31 // pred_region
          %217 = dma.done %s210, 1152
        $region36: #{a_call__.2} parent=31 // pred_fallthru
          _
        // Predicated region
        $region37: #{a_call__.2} parent=31 // pred_check
          %p218 = pneg %p109
        $region38: #{a_call__.2} parent=31 // pred_check_branch
          %220 = sbr.rel (%p218) target = $region40
        $region39: #{a_call__.2} parent=31 // pred_region
          %221 = dma.done [#allocation6], 16
        $region40: #{a_call__.2} parent=31 // pred_fallthru
          _
        %s222 = sadd.s32 %s24, %s25
        %p223 = scmp.lt.s32.totalorder %s23, 1
        %s224 = scalar_select %p223, %s23, 1
        %p225 = scmp.lt.s32.totalorder %s222, 9
        %s226 = scalar_select %p225, %s222, 9
        %s227 = smul.addr %s226, 13
        %s228 = smul.addr %s224, 130
        %s229 = sadd.s32 %s227, %s228
        %s230 = smul.addr %s229, 8
        %s231 = scalar_lea.vmem %s0, %s230
        %p232 = pneg %p62
        %p233 = pneg %p59
        %s234 = sand.u32 %s75, 1
        %s235 = scalar_lea.sflag [#allocation4], %s234
        %s236 = sand.u32 %s75, 1
        %s237 = smul.addr %s236, 72
        %s238 = scalar_lea.vmem [#allocation3], %s237
        %p239 = pneg %p88
        %p240 = pneg %p85
        %p241 = pneg %p109
        %p242 = pneg %p106
        %p243 = pneg %p137
        %p244 = pneg %p134
        %p245 = scmp.lt.s32.totalorder %s23, 1
        %s246 = scalar_select %p245, %s23, 1
        %p247 = scmp.lt.s32.totalorder %s24, 7
        %s248 = scalar_select %p247, %s24, 7
        %s249 = smul.addr %s248, 10
        %s250 = smul.addr %s246, 80
        %s251 = sadd.s32 %s249, %s250
        %s252 = smul.addr %s251, 8
        %s253 = scalar_lea.vmem %s3, %s252
        %s254 = sadd.s32 %s24, %s25
        %p255 = scmp.lt.s32.totalorder %s23, 1
        %s256 = scalar_select %p255, %s23, 1
        %p257 = scmp.lt.s32.totalorder %s254, 9
        %s258 = scalar_select %p257, %s254, 9
        %s259 = smul.addr %s258, 13
        %s260 = smul.addr %s256, 130
        %s261 = sadd.s32 %s259, %s260
        %s262 = smul.addr %s261, 8
        %s263 = scalar_lea.vmem %s0, %s262
        %s264 = sadd.s32 %s24, %s25
        %p265 = scmp.lt.s32.totalorder %s23, 1
        %s266 = scalar_select %p265, %s23, 1
        %p267 = scmp.lt.s32.totalorder %s24, 7
        %s268 = scalar_select %p267, %s24, 7
        %s269 = smul.addr %s268, 10
        %s270 = smul.addr %s266, 80
        %s271 = sadd.s32 %s269, %s270
        %s272 = smul.addr %s271, 8
        %s273 = scalar_lea.vmem %s3, %s272
        %p274 = scmp.eq.s32.totalorder %s25, 0
        // Predicated region
        $region41: #{a_call__.2} parent=31 // pred_check
          %p275 = pneg %p274
        $region42: #{a_call__.2} parent=31 // pred_check_branch
          %277 = sbr.rel (%p275) target = $region44
        $region43: #{a_call__.2} parent=31 // pred_region
          %278 = vst [vmem:[#allocation2] sm:$0xff] 0.0
          %279 = vst [vmem:[#allocation2 + $0x8] sm:$0xff] 0.0
          %280 = vst [vmem:[#allocation2 + $0x10] sm:$0xff] 0.0
          %281 = vst [vmem:[#allocation2 + $0x18] sm:$0xff] 0.0
          %282 = vst [vmem:[#allocation2 + $0x20] sm:$0xff] 0.0
          %283 = vst [vmem:[#allocation2 + $0x28] sm:$0xff] 0.0
          %284 = vst [vmem:[#allocation2 + $0x30] sm:$0xff] 0.0
          %285 = vst [vmem:[#allocation2 + $0x38] sm:$0xff] 0.0
          %286 = vst [vmem:[#allocation2 + $0x40] sm:$0xff] 0.0
          %287 = vst [vmem:[#allocation2 + $0x48] sm:$0x3f] 0.0
        $region44: #{a_call__.2} parent=31 // pred_fallthru
          _
        %v288 = vld [vmem:[%s263] sm:$0xff]
        %v289 = vld [vmem:[%s263 + $0x8] sm:$0xff]
        %v290 = vld [vmem:[%s263 + $0x10] sm:$0xff]
        %v291 = vld [vmem:[%s263 + $0x18] sm:$0xff]
        %v292 = vld [vmem:[%s263 + $0x20] sm:$0xff]
        %v293 = vld [vmem:[%s263 + $0x28] sm:$0xff]
        %v294 = vld [vmem:[%s263 + $0x30] sm:$0xff]
        %v295 = vld [vmem:[%s263 + $0x38] sm:$0xff]
        %v296 = vld [vmem:[%s263 + $0x40] sm:$0xff]
        %v297 = vld [vmem:[%s263 + $0x48] sm:$0x3f]
        %v298 = vld [vmem:[%s213] sm:$0xff]
        %v299 = vld [vmem:[%s263 + $0x1] sm:$0xff]
        %v300 = vld [vmem:[%s263 + $0x9] sm:$0xff]
        %v301 = vld [vmem:[%s263 + $0x11] sm:$0xff]
        %v302 = vld [vmem:[%s263 + $0x19] sm:$0xff]
        %v303 = vld [vmem:[%s263 + $0x21] sm:$0xff]
        %v304 = vld [vmem:[%s263 + $0x29] sm:$0xff]
        %v305 = vld [vmem:[%s263 + $0x31] sm:$0xff]
        %v306 = vld [vmem:[%s263 + $0x39] sm:$0xff]
        %v307 = vld [vmem:[%s263 + $0x41] sm:$0xff]
        %v308 = vld [vmem:[%s263 + $0x49] sm:$0x3f]
        %s309 = scalar_lea.vmem %s213, 8 [#allocation3]
        %v310 = vld [vmem:[%s309] sm:$0xff]
        %vm311 = vcmask 64512
        %v313 = vsel %vm311, %v299, 0
        %v316 = vsel %vm311, %v300, 0
        %v319 = vsel %vm311, %v301, 0
        %v322 = vsel %vm311, %v302, 0
        %v325 = vsel %vm311, %v303, 0
        %v328 = vsel %vm311, %v304, 0
        %v331 = vsel %vm311, %v305, 0
        %v334 = vsel %vm311, %v306, 0
        %v337 = vsel %vm311, %v307, 0
        %v340 = vsel %vm311, %v308, 0
        %342 = vmatprep.subr.mxu0 0.0
        %343 = vmatpush1.msra.mxu0 %v310
        %344 = vmatprep.subr.mxu0 0.0
        %345 = vmatpush1.msra.mxu0 0.0
        %346 = vmatprep.subr.mxu0 0.0
        %347 = vmatpush1.msra.mxu0 0.0
        %348 = vmatprep.subr.mxu0 0.0
        %349 = vmatpush1.msra.mxu0 0.0
        %350 = vmatprep.subr.mxu0 0.0
        %351 = vmatpush1.msra.mxu0 0.0
        %352 = vmatprep.subr.mxu0 0.0
        %353 = vmatpush1.msra.mxu0 0.0
        %354 = vmatprep.subr.mxu0 0.0
        %355 = vmatpush1.msra.mxu0 0.0
        %356 = vmatprep.subr.mxu0 0.0
        %357 = vmatpush1.msra.mxu0 0.0
        %358 = vmatprep.subr.mxu0 0.0
        %359 = vmatpush1.msra.mxu0 0.0
        %360 = vmatprep.subr.mxu0 0.0
        %361 = vmatpush1.msra.mxu0 0.0
        %362 = vmatprep.subr.mxu0 0.0
        %363 = vmatpush1.msra.mxu0 0.0
        %364 = vmatprep.subr.mxu0 0.0
        %365 = vmatpush1.msra.mxu0 0.0
        %366 = vmatprep.subr.mxu0 0.0
        %367 = vmatpush1.msra.mxu0 0.0
        %368 = vmatprep.subr.mxu0 0.0
        %369 = vmatpush1.msra.mxu0 0.0
        %370 = vmatprep.subr.mxu0 0.0
        %371 = vmatpush1.msra.mxu0 0.0
        %372 = vmatprep.subr.mxu0 0.0
        %373 = vmatpush1.msra.mxu0 0.0
        %374 = vmatprep.subr.mxu0 0.0
        %375 = vmatpush1.msra.mxu0 0.0
        %376 = vmatprep.subr.mxu0 0.0
        %377 = vmatpush1.msra.mxu0 0.0
        %378 = vmatprep.subr.mxu0 0.0
        %379 = vmatpush1.msra.mxu0 0.0
        %380 = vmatprep.subr.mxu0 0.0
        %381 = vmatpush1.msra.mxu0 0.0
        %382 = vmatprep.subr.mxu0 0.0
        %383 = vmatpush1.msra.mxu0 0.0
        %384 = vmatprep.subr.mxu0 0.0
        %385 = vmatpush1.msra.mxu0 0.0
        %386 = vmatprep.subr.mxu0 0.0
        %387 = vmatpush1.msra.mxu0 0.0
        %388 = vmatprep.subr.mxu0 0.0
        %389 = vmatpush1.msra.mxu0 0.0
        %390 = vmatprep.subr.mxu0 0.0
        %391 = vmatpush1.msra.mxu0 0.0
        %392 = vmatprep.subr.mxu0 0.0
        %393 = vmatpush1.msra.mxu0 0.0
        %394 = vmatprep.subr.mxu0 0.0
        %395 = vmatpush1.msra.mxu0 0.0
        %396 = vmatprep.subr.mxu0 0.0
        %397 = vmatpush1.msra.mxu0 0.0
        %398 = vmatprep.subr.mxu0 0.0
        %399 = vmatpush1.msra.mxu0 0.0
        %400 = vmatprep.subr.mxu0 0.0
        %401 = vmatpush1.msra.mxu0 0.0
        %402 = vmatprep.subr.mxu0 0.0
        %403 = vmatpush1.msra.mxu0 0.0
        %404 = vmatprep.subr.mxu0 0.0
        %405 = vmatpush1.msra.mxu0 0.0
        %406 = vmatprep.mubr.f32.mxu0 0.0
        %407 = vmatmul.mubr.f32.gmra.mrb[0].mxu0 %v313
        %v408 = vpop.f32.mrb[0].mxu0
        %v409 = vadd.f32 0.0, %v408
        %v410 = vpop.f32.mrb[0].mxu0
        %411 = vmatprep.mubr.f32.mxu0 0.0
        %412 = vmatmul.mubr.f32.gmra.mrb[0].mxu0 %v316
        %v413 = vpop.f32.mrb[0].mxu0
        %v414 = vadd.f32 0.0, %v413
        %v415 = vpop.f32.mrb[0].mxu0
        %416 = vmatprep.mubr.f32.mxu0 0.0
        %417 = vmatmul.mubr.f32.gmra.mrb[0].mxu0 %v319
        %v418 = vpop.f32.mrb[0].mxu0
        %v419 = vadd.f32 0.0, %v418
        %v420 = vpop.f32.mrb[0].mxu0
        %421 = vmatprep.mubr.f32.mxu0 0.0
        %422 = vmatmul.mubr.f32.gmra.mrb[0].mxu0 %v322
        %v423 = vpop.f32.mrb[0].mxu0
        %v424 = vadd.f32 0.0, %v423
        %v425 = vpop.f32.mrb[0].mxu0
        %426 = vmatprep.mubr.f32.mxu0 0.0
        %427 = vmatmul.mubr.f32.gmra.mrb[0].mxu0 %v325
        %v428 = vpop.f32.mrb[0].mxu0
        %v429 = vadd.f32 0.0, %v428
        %v430 = vpop.f32.mrb[0].mxu0
        %431 = vmatprep.mubr.f32.mxu0 0.0
        %432 = vmatmul.mubr.f32.gmra.mrb[0].mxu0 %v328
        %v433 = vpop.f32.mrb[0].mxu0
        %v434 = vadd.f32 0.0, %v433
        %v435 = vpop.f32.mrb[0].mxu0
        %436 = vmatprep.mubr.f32.mxu0 0.0
        %437 = vmatmul.mubr.f32.gmra.mrb[0].mxu0 %v331
        %v438 = vpop.f32.mrb[0].mxu0
        %v439 = vadd.f32 0.0, %v438
        %v440 = vpop.f32.mrb[0].mxu0
        %441 = vmatprep.mubr.f32.mxu0 0.0
        %442 = vmatmul.mubr.f32.gmra.mrb[0].mxu0 %v334
        %v443 = vpop.f32.mrb[0].mxu0
        %v444 = vadd.f32 0.0, %v443
        %v445 = vpop.f32.mrb[0].mxu0
        %446 = vmatprep.mubr.f32.mxu0 0.0
        %447 = vmatmul.mubr.f32.gmra.mrb[0].mxu0 %v337
        %v448 = vpop.f32.mrb[0].mxu0
        %v449 = vadd.f32 0.0, %v448
        %v450 = vpop.f32.mrb[0].mxu0
        %451 = vmatprep.mubr.f32.mxu0 0.0
        %452 = vmatmul.mubr.f32.gmra.mrb[0].mxu0 %v340
        %v453 = vpop.f32.mrb[0].mxu0
        %v454 = vadd.f32 0.0, %v453
        %v455 = vpop.f32.mrb[0].mxu0
        %456 = vdwg.mxu0
        %v458 = vsel %vm311, %v288, 0
        %v461 = vsel %vm311, %v289, 0
        %v464 = vsel %vm311, %v290, 0
        %v467 = vsel %vm311, %v291, 0
        %v470 = vsel %vm311, %v292, 0
        %v473 = vsel %vm311, %v293, 0
        %v476 = vsel %vm311, %v294, 0
        %v479 = vsel %vm311, %v295, 0
        %v482 = vsel %vm311, %v296, 0
        %v485 = vsel %vm311, %v297, 0
        %487 = vmatprep.subr.mxu0 0.0
        %488 = vmatpush1.msra.mxu0 %v298
        %489 = vmatprep.subr.mxu0 0.0
        %490 = vmatpush1.msra.mxu0 0.0
        %491 = vmatprep.subr.mxu0 0.0
        %492 = vmatpush1.msra.mxu0 0.0
        %493 = vmatprep.subr.mxu0 0.0
        %494 = vmatpush1.msra.mxu0 0.0
        %495 = vmatprep.subr.mxu0 0.0
        %496 = vmatpush1.msra.mxu0 0.0
        %497 = vmatprep.subr.mxu0 0.0
        %498 = vmatpush1.msra.mxu0 0.0
        %499 = vmatprep.subr.mxu0 0.0
        %500 = vmatpush1.msra.mxu0 0.0
        %501 = vmatprep.subr.mxu0 0.0
        %502 = vmatpush1.msra.mxu0 0.0
        %503 = vmatprep.subr.mxu0 0.0
        %504 = vmatpush1.msra.mxu0 0.0
        %505 = vmatprep.subr.mxu0 0.0
        %506 = vmatpush1.msra.mxu0 0.0
        %507 = vmatprep.subr.mxu0 0.0
        %508 = vmatpush1.msra.mxu0 0.0
        %509 = vmatprep.subr.mxu0 0.0
        %510 = vmatpush1.msra.mxu0 0.0
        %511 = vmatprep.subr.mxu0 0.0
        %512 = vmatpush1.msra.mxu0 0.0
        %513 = vmatprep.subr.mxu0 0.0
        %514 = vmatpush1.msra.mxu0 0.0
        %515 = vmatprep.subr.mxu0 0.0
        %516 = vmatpush1.msra.mxu0 0.0
        %517 = vmatprep.subr.mxu0 0.0
        %518 = vmatpush1.msra.mxu0 0.0
        %519 = vmatprep.subr.mxu0 0.0
        %520 = vmatpush1.msra.mxu0 0.0
        %521 = vmatprep.subr.mxu0 0.0
        %522 = vmatpush1.msra.mxu0 0.0
        %523 = vmatprep.subr.mxu0 0.0
        %524 = vmatpush1.msra.mxu0 0.0
        %525 = vmatprep.subr.mxu0 0.0
        %526 = vmatpush1.msra.mxu0 0.0
        %527 = vmatprep.subr.mxu0 0.0
        %528 = vmatpush1.msra.mxu0 0.0
        %529 = vmatprep.subr.mxu0 0.0
        %530 = vmatpush1.msra.mxu0 0.0
        %531 = vmatprep.subr.mxu0 0.0
        %532 = vmatpush1.msra.mxu0 0.0
        %533 = vmatprep.subr.mxu0 0.0
        %534 = vmatpush1.msra.mxu0 0.0
        %535 = vmatprep.subr.mxu0 0.0
        %536 = vmatpush1.msra.mxu0 0.0
        %537 = vmatprep.subr.mxu0 0.0
        %538 = vmatpush1.msra.mxu0 0.0
        %539 = vmatprep.subr.mxu0 0.0
        %540 = vmatpush1.msra.mxu0 0.0
        %541 = vmatprep.subr.mxu0 0.0
        %542 = vmatpush1.msra.mxu0 0.0
        %543 = vmatprep.subr.mxu0 0.0
        %544 = vmatpush1.msra.mxu0 0.0
        %545 = vmatprep.subr.mxu0 0.0
        %546 = vmatpush1.msra.mxu0 0.0
        %547 = vmatprep.subr.mxu0 0.0
        %548 = vmatpush1.msra.mxu0 0.0
        %549 = vmatprep.subr.mxu0 0.0
        %550 = vmatpush1.msra.mxu0 0.0
        %551 = vmatprep.mubr.f32.mxu0 0.0
        %552 = vmatmul.mubr.f32.gmra.mrb[0].mxu0 %v458
        %v553 = vpop.f32.mrb[0].mxu0
        %v554 = vadd.f32 %v409, %v553
        %v555 = vpop.f32.mrb[0].mxu0
        %556 = vmatprep.mubr.f32.mxu0 0.0
        %557 = vmatmul.mubr.f32.gmra.mrb[0].mxu0 %v461
        %v558 = vpop.f32.mrb[0].mxu0
        %v559 = vadd.f32 %v414, %v558
        %v560 = vpop.f32.mrb[0].mxu0
        %561 = vmatprep.mubr.f32.mxu0 0.0
        %562 = vmatmul.mubr.f32.gmra.mrb[0].mxu0 %v464
        %v563 = vpop.f32.mrb[0].mxu0
        %v564 = vadd.f32 %v419, %v563
        %v565 = vpop.f32.mrb[0].mxu0
        %566 = vmatprep.mubr.f32.mxu0 0.0
        %567 = vmatmul.mubr.f32.gmra.mrb[0].mxu0 %v467
        %v568 = vpop.f32.mrb[0].mxu0
        %v569 = vadd.f32 %v424, %v568
        %v570 = vpop.f32.mrb[0].mxu0
        %571 = vmatprep.mubr.f32.mxu0 0.0
        %572 = vmatmul.mubr.f32.gmra.mrb[0].mxu0 %v470
        %v573 = vpop.f32.mrb[0].mxu0
        %v574 = vadd.f32 %v429, %v573
        %v575 = vpop.f32.mrb[0].mxu0
        %576 = vmatprep.mubr.f32.mxu0 0.0
        %577 = vmatmul.mubr.f32.gmra.mrb[0].mxu0 %v473
        %v578 = vpop.f32.mrb[0].mxu0
        %v579 = vadd.f32 %v434, %v578
        %v580 = vpop.f32.mrb[0].mxu0
        %581 = vmatprep.mubr.f32.mxu0 0.0
        %582 = vmatmul.mubr.f32.gmra.mrb[0].mxu0 %v476
        %v583 = vpop.f32.mrb[0].mxu0
        %v584 = vadd.f32 %v439, %v583
        %v585 = vpop.f32.mrb[0].mxu0
        %586 = vmatprep.mubr.f32.mxu0 0.0
        %587 = vmatmul.mubr.f32.gmra.mrb[0].mxu0 %v479
        %v588 = vpop.f32.mrb[0].mxu0
        %v589 = vadd.f32 %v444, %v588
        %v590 = vpop.f32.mrb[0].mxu0
        %591 = vmatprep.mubr.f32.mxu0 0.0
        %592 = vmatmul.mubr.f32.gmra.mrb[0].mxu0 %v482
        %v593 = vpop.f32.mrb[0].mxu0
        %v594 = vadd.f32 %v449, %v593
        %v595 = vpop.f32.mrb[0].mxu0
        %596 = vmatprep.mubr.f32.mxu0 0.0
        %597 = vmatmul.mubr.f32.gmra.mrb[0].mxu0 %v485
        %v598 = vpop.f32.mrb[0].mxu0
        %v599 = vadd.f32 %v454, %v598
        %v600 = vpop.f32.mrb[0].mxu0
        %601 = vdwg.mxu0
        %v602 = vld [vmem:[%s263 + $0x2] sm:$0xff]
        %v603 = vld [vmem:[%s263 + $0xa] sm:$0xff]
        %v604 = vld [vmem:[%s263 + $0x12] sm:$0xff]
        %v605 = vld [vmem:[%s263 + $0x1a] sm:$0xff]
        %v606 = vld [vmem:[%s263 + $0x22] sm:$0xff]
        %v607 = vld [vmem:[%s263 + $0x2a] sm:$0xff]
        %v608 = vld [vmem:[%s263 + $0x32] sm:$0xff]
        %v609 = vld [vmem:[%s263 + $0x3a] sm:$0xff]
        %v610 = vld [vmem:[%s263 + $0x42] sm:$0xff]
        %v611 = vld [vmem:[%s263 + $0x4a] sm:$0x3f]
        %s612 = scalar_lea.vmem %s213, 16 [#allocation3]
        %v613 = vld [vmem:[%s612] sm:$0xff]
        %v615 = vsel %vm311, %v602, 0
        %v618 = vsel %vm311, %v603, 0
        %v621 = vsel %vm311, %v604, 0
        %v624 = vsel %vm311, %v605, 0
        %v627 = vsel %vm311, %v606, 0
        %v630 = vsel %vm311, %v607, 0
        %v633 = vsel %vm311, %v608, 0
        %v636 = vsel %vm311, %v609, 0
        %v639 = vsel %vm311, %v610, 0
        %v642 = vsel %vm311, %v611, 0
        %644 = vmatprep.subr.mxu0 0.0
        %645 = vmatpush1.msra.mxu0 %v613
        %646 = vmatprep.subr.mxu0 0.0
        %647 = vmatpush1.msra.mxu0 0.0
        %648 = vmatprep.subr.mxu0 0.0
        %649 = vmatpush1.msra.mxu0 0.0
        %650 = vmatprep.subr.mxu0 0.0
        %651 = vmatpush1.msra.mxu0 0.0
        %652 = vmatprep.subr.mxu0 0.0
        %653 = vmatpush1.msra.mxu0 0.0
        %654 = vmatprep.subr.mxu0 0.0
        %655 = vmatpush1.msra.mxu0 0.0
        %656 = vmatprep.subr.mxu0 0.0
        %657 = vmatpush1.msra.mxu0 0.0
        %658 = vmatprep.subr.mxu0 0.0
        %659 = vmatpush1.msra.mxu0 0.0
        %660 = vmatprep.subr.mxu0 0.0
        %661 = vmatpush1.msra.mxu0 0.0
        %662 = vmatprep.subr.mxu0 0.0
        %663 = vmatpush1.msra.mxu0 0.0
        %664 = vmatprep.subr.mxu0 0.0
        %665 = vmatpush1.msra.mxu0 0.0
        %666 = vmatprep.subr.mxu0 0.0
        %667 = vmatpush1.msra.mxu0 0.0
        %668 = vmatprep.subr.mxu0 0.0
        %669 = vmatpush1.msra.mxu0 0.0
        %670 = vmatprep.subr.mxu0 0.0
        %671 = vmatpush1.msra.mxu0 0.0
        %672 = vmatprep.subr.mxu0 0.0
        %673 = vmatpush1.msra.mxu0 0.0
        %674 = vmatprep.subr.mxu0 0.0
        %675 = vmatpush1.msra.mxu0 0.0
        %676 = vmatprep.subr.mxu0 0.0
        %677 = vmatpush1.msra.mxu0 0.0
        %678 = vmatprep.subr.mxu0 0.0
        %679 = vmatpush1.msra.mxu0 0.0
        %680 = vmatprep.subr.mxu0 0.0
        %681 = vmatpush1.msra.mxu0 0.0
        %682 = vmatprep.subr.mxu0 0.0
        %683 = vmatpush1.msra.mxu0 0.0
        %684 = vmatprep.subr.mxu0 0.0
        %685 = vmatpush1.msra.mxu0 0.0
        %686 = vmatprep.subr.mxu0 0.0
        %687 = vmatpush1.msra.mxu0 0.0
        %688 = vmatprep.subr.mxu0 0.0
        %689 = vmatpush1.msra.mxu0 0.0
        %690 = vmatprep.subr.mxu0 0.0
        %691 = vmatpush1.msra.mxu0 0.0
        %692 = vmatprep.subr.mxu0 0.0
        %693 = vmatpush1.msra.mxu0 0.0
        %694 = vmatprep.subr.mxu0 0.0
        %695 = vmatpush1.msra.mxu0 0.0
        %696 = vmatprep.subr.mxu0 0.0
        %697 = vmatpush1.msra.mxu0 0.0
        %698 = vmatprep.subr.mxu0 0.0
        %699 = vmatpush1.msra.mxu0 0.0
        %700 = vmatprep.subr.mxu0 0.0
        %701 = vmatpush1.msra.mxu0 0.0
        %702 = vmatprep.subr.mxu0 0.0
        %703 = vmatpush1.msra.mxu0 0.0
        %704 = vmatprep.subr.mxu0 0.0
        %705 = vmatpush1.msra.mxu0 0.0
        %706 = vmatprep.subr.mxu0 0.0
        %707 = vmatpush1.msra.mxu0 0.0
        %708 = vmatprep.mubr.f32.mxu0 0.0
        %709 = vmatmul.mubr.f32.gmra.mrb[0].mxu0 %v615
        %v710 = vpop.f32.mrb[0].mxu0
        %v711 = vadd.f32 0.0, %v710
        %v712 = vpop.f32.mrb[0].mxu0
        %713 = vmatprep.mubr.f32.mxu0 0.0
        %714 = vmatmul.mubr.f32.gmra.mrb[0].mxu0 %v618
        %v715 = vpop.f32.mrb[0].mxu0
        %v716 = vadd.f32 0.0, %v715
        %v717 = vpop.f32.mrb[0].mxu0
        %718 = vmatprep.mubr.f32.mxu0 0.0
        %719 = vmatmul.mubr.f32.gmra.mrb[0].mxu0 %v621
        %v720 = vpop.f32.mrb[0].mxu0
        %v721 = vadd.f32 0.0, %v720
        %v722 = vpop.f32.mrb[0].mxu0
        %723 = vmatprep.mubr.f32.mxu0 0.0
        %724 = vmatmul.mubr.f32.gmra.mrb[0].mxu0 %v624
        %v725 = vpop.f32.mrb[0].mxu0
        %v726 = vadd.f32 0.0, %v725
        %v727 = vpop.f32.mrb[0].mxu0
        %728 = vmatprep.mubr.f32.mxu0 0.0
        %729 = vmatmul.mubr.f32.gmra.mrb[0].mxu0 %v627
        %v730 = vpop.f32.mrb[0].mxu0
        %v731 = vadd.f32 0.0, %v730
        %v732 = vpop.f32.mrb[0].mxu0
        %733 = vmatprep.mubr.f32.mxu0 0.0
        %734 = vmatmul.mubr.f32.gmra.mrb[0].mxu0 %v630
        %v735 = vpop.f32.mrb[0].mxu0
        %v736 = vadd.f32 0.0, %v735
        %v737 = vpop.f32.mrb[0].mxu0
        %738 = vmatprep.mubr.f32.mxu0 0.0
        %739 = vmatmul.mubr.f32.gmra.mrb[0].mxu0 %v633
        %v740 = vpop.f32.mrb[0].mxu0
        %v741 = vadd.f32 0.0, %v740
        %v742 = vpop.f32.mrb[0].mxu0
        %743 = vmatprep.mubr.f32.mxu0 0.0
        %744 = vmatmul.mubr.f32.gmra.mrb[0].mxu0 %v636
        %v745 = vpop.f32.mrb[0].mxu0
        %v746 = vadd.f32 0.0, %v745
        %v747 = vpop.f32.mrb[0].mxu0
        %748 = vmatprep.mubr.f32.mxu0 0.0
        %749 = vmatmul.mubr.f32.gmra.mrb[0].mxu0 %v639
        %v750 = vpop.f32.mrb[0].mxu0
        %v751 = vadd.f32 0.0, %v750
        %v752 = vpop.f32.mrb[0].mxu0
        %753 = vmatprep.mubr.f32.mxu0 0.0
        %754 = vmatmul.mubr.f32.gmra.mrb[0].mxu0 %v642
        %v755 = vpop.f32.mrb[0].mxu0
        %v756 = vadd.f32 0.0, %v755
        %v757 = vpop.f32.mrb[0].mxu0
        %758 = vdwg.mxu0
        %v759 = vadd.f32 %v554, %v711
        %v760 = vadd.f32 %v559, %v716
        %v761 = vadd.f32 %v564, %v721
        %v762 = vadd.f32 %v569, %v726
        %v763 = vadd.f32 %v574, %v731
        %v764 = vadd.f32 %v579, %v736
        %v765 = vadd.f32 %v584, %v741
        %v766 = vadd.f32 %v589, %v746
        %v767 = vadd.f32 %v594, %v751
        %v768 = vadd.f32 %v599, %v756
        %v769 = vld [vmem:[%s263 + $0xa] sm:$0xff]
        %v770 = vld [vmem:[%s263 + $0x12] sm:$0xff]
        %v771 = vld [vmem:[%s263 + $0x1a] sm:$0xff]
        %v772 = vld [vmem:[%s263 + $0x22] sm:$0xff]
        %v773 = vld [vmem:[%s263 + $0x2a] sm:$0xff]
        %v774 = vld [vmem:[%s263 + $0x32] sm:$0xff]
        %v775 = vld [vmem:[%s263 + $0x3a] sm:$0xff]
        %v776 = vld [vmem:[%s263 + $0x42] sm:$0xff]
        %v777 = vld [vmem:[%s263 + $0x4a] sm:$0xff]
        %v778 = vld [vmem:[%s263 + $0x52] sm:$0x3f]
        %s779 = scalar_lea.vmem %s213, 24 [#allocation3]
        %v780 = vld [vmem:[%s779] sm:$0xff]
        %v782 = vsel %vm311, %v769, 0
        %v785 = vsel %vm311, %v770, 0
        %v788 = vsel %vm311, %v771, 0
        %v791 = vsel %vm311, %v772, 0
        %v794 = vsel %vm311, %v773, 0
        %v797 = vsel %vm311, %v774, 0
        %v800 = vsel %vm311, %v775, 0
        %v803 = vsel %vm311, %v776, 0
        %v806 = vsel %vm311, %v777, 0
        %v809 = vsel %vm311, %v778, 0
        %811 = vmatprep.subr.mxu0 0.0
        %812 = vmatpush1.msra.mxu0 %v780
        %813 = vmatprep.subr.mxu0 0.0
        %814 = vmatpush1.msra.mxu0 0.0
        %815 = vmatprep.subr.mxu0 0.0
        %816 = vmatpush1.msra.mxu0 0.0
        %817 = vmatprep.subr.mxu0 0.0
        %818 = vmatpush1.msra.mxu0 0.0
        %819 = vmatprep.subr.mxu0 0.0
        %820 = vmatpush1.msra.mxu0 0.0
        %821 = vmatprep.subr.mxu0 0.0
        %822 = vmatpush1.msra.mxu0 0.0
        %823 = vmatprep.subr.mxu0 0.0
        %824 = vmatpush1.msra.mxu0 0.0
        %825 = vmatprep.subr.mxu0 0.0
        %826 = vmatpush1.msra.mxu0 0.0
        %827 = vmatprep.subr.mxu0 0.0
        %828 = vmatpush1.msra.mxu0 0.0
        %829 = vmatprep.subr.mxu0 0.0
        %830 = vmatpush1.msra.mxu0 0.0
        %831 = vmatprep.subr.mxu0 0.0
        %832 = vmatpush1.msra.mxu0 0.0
        %833 = vmatprep.subr.mxu0 0.0
        %834 = vmatpush1.msra.mxu0 0.0
        %835 = vmatprep.subr.mxu0 0.0
        %836 = vmatpush1.msra.mxu0 0.0
        %837 = vmatprep.subr.mxu0 0.0
        %838 = vmatpush1.msra.mxu0 0.0
        %839 = vmatprep.subr.mxu0 0.0
        %840 = vmatpush1.msra.mxu0 0.0
        %841 = vmatprep.subr.mxu0 0.0
        %842 = vmatpush1.msra.mxu0 0.0
        %843 = vmatprep.subr.mxu0 0.0
        %844 = vmatpush1.msra.mxu0 0.0
        %845 = vmatprep.subr.mxu0 0.0
        %846 = vmatpush1.msra.mxu0 0.0
        %847 = vmatprep.subr.mxu0 0.0
        %848 = vmatpush1.msra.mxu0 0.0
        %849 = vmatprep.subr.mxu0 0.0
        %850 = vmatpush1.msra.mxu0 0.0
        %851 = vmatprep.subr.mxu0 0.0
        %852 = vmatpush1.msra.mxu0 0.0
        %853 = vmatprep.subr.mxu0 0.0
        %854 = vmatpush1.msra.mxu0 0.0
        %855 = vmatprep.subr.mxu0 0.0
        %856 = vmatpush1.msra.mxu0 0.0
        %857 = vmatprep.subr.mxu0 0.0
        %858 = vmatpush1.msra.mxu0 0.0
        %859 = vmatprep.subr.mxu0 0.0
        %860 = vmatpush1.msra.mxu0 0.0
        %861 = vmatprep.subr.mxu0 0.0
        %862 = vmatpush1.msra.mxu0 0.0
        %863 = vmatprep.subr.mxu0 0.0
        %864 = vmatpush1.msra.mxu0 0.0
        %865 = vmatprep.subr.mxu0 0.0
        %866 = vmatpush1.msra.mxu0 0.0
        %867 = vmatprep.subr.mxu0 0.0
        %868 = vmatpush1.msra.mxu0 0.0
        %869 = vmatprep.subr.mxu0 0.0
        %870 = vmatpush1.msra.mxu0 0.0
        %871 = vmatprep.subr.mxu0 0.0
        %872 = vmatpush1.msra.mxu0 0.0
        %873 = vmatprep.subr.mxu0 0.0
        %874 = vmatpush1.msra.mxu0 0.0
        %875 = vmatprep.mubr.f32.mxu0 0.0
        %876 = vmatmul.mubr.f32.gmra.mrb[0].mxu0 %v782
        %v877 = vpop.f32.mrb[0].mxu0
        %v878 = vadd.f32 0.0, %v877
        %v879 = vpop.f32.mrb[0].mxu0
        %880 = vmatprep.mubr.f32.mxu0 0.0
        %881 = vmatmul.mubr.f32.gmra.mrb[0].mxu0 %v785
        %v882 = vpop.f32.mrb[0].mxu0
        %v883 = vadd.f32 0.0, %v882
        %v884 = vpop.f32.mrb[0].mxu0
        %885 = vmatprep.mubr.f32.mxu0 0.0
        %886 = vmatmul.mubr.f32.gmra.mrb[0].mxu0 %v788
        %v887 = vpop.f32.mrb[0].mxu0
        %v888 = vadd.f32 0.0, %v887
        %v889 = vpop.f32.mrb[0].mxu0
        %890 = vmatprep.mubr.f32.mxu0 0.0
        %891 = vmatmul.mubr.f32.gmra.mrb[0].mxu0 %v791
        %v892 = vpop.f32.mrb[0].mxu0
        %v893 = vadd.f32 0.0, %v892
        %v894 = vpop.f32.mrb[0].mxu0
        %895 = vmatprep.mubr.f32.mxu0 0.0
        %896 = vmatmul.mubr.f32.gmra.mrb[0].mxu0 %v794
        %v897 = vpop.f32.mrb[0].mxu0
        %v898 = vadd.f32 0.0, %v897
        %v899 = vpop.f32.mrb[0].mxu0
        %900 = vmatprep.mubr.f32.mxu0 0.0
        %901 = vmatmul.mubr.f32.gmra.mrb[0].mxu0 %v797
        %v902 = vpop.f32.mrb[0].mxu0
        %v903 = vadd.f32 0.0, %v902
        %v904 = vpop.f32.mrb[0].mxu0
        %905 = vmatprep.mubr.f32.mxu0 0.0
        %906 = vmatmul.mubr.f32.gmra.mrb[0].mxu0 %v800
        %v907 = vpop.f32.mrb[0].mxu0
        %v908 = vadd.f32 0.0, %v907
        %v909 = vpop.f32.mrb[0].mxu0
        %910 = vmatprep.mubr.f32.mxu0 0.0
        %911 = vmatmul.mubr.f32.gmra.mrb[0].mxu0 %v803
        %v912 = vpop.f32.mrb[0].mxu0
        %v913 = vadd.f32 0.0, %v912
        %v914 = vpop.f32.mrb[0].mxu0
        %915 = vmatprep.mubr.f32.mxu0 0.0
        %916 = vmatmul.mubr.f32.gmra.mrb[0].mxu0 %v806
        %v917 = vpop.f32.mrb[0].mxu0
        %v918 = vadd.f32 0.0, %v917
        %v919 = vpop.f32.mrb[0].mxu0
        %920 = vmatprep.mubr.f32.mxu0 0.0
        %921 = vmatmul.mubr.f32.gmra.mrb[0].mxu0 %v809
        %v922 = vpop.f32.mrb[0].mxu0
        %v923 = vadd.f32 0.0, %v922
        %v924 = vpop.f32.mrb[0].mxu0
        %925 = vdwg.mxu0
        %v926 = vadd.f32 %v759, %v878
        %v927 = vadd.f32 %v760, %v883
        %v928 = vadd.f32 %v761, %v888
        %v929 = vadd.f32 %v762, %v893
        %v930 = vadd.f32 %v763, %v898
        %v931 = vadd.f32 %v764, %v903
        %v932 = vadd.f32 %v765, %v908
        %v933 = vadd.f32 %v766, %v913
        %v934 = vadd.f32 %v767, %v918
        %v935 = vadd.f32 %v768, %v923
        %v936 = vld [vmem:[%s263 + $0xb] sm:$0xff]
        %v937 = vld [vmem:[%s263 + $0x13] sm:$0xff]
        %v938 = vld [vmem:[%s263 + $0x1b] sm:$0xff]
        %v939 = vld [vmem:[%s263 + $0x23] sm:$0xff]
        %v940 = vld [vmem:[%s263 + $0x2b] sm:$0xff]
        %v941 = vld [vmem:[%s263 + $0x33] sm:$0xff]
        %v942 = vld [vmem:[%s263 + $0x3b] sm:$0xff]
        %v943 = vld [vmem:[%s263 + $0x43] sm:$0xff]
        %v944 = vld [vmem:[%s263 + $0x4b] sm:$0xff]
        %v945 = vld [vmem:[%s263 + $0x53] sm:$0x3f]
        %s946 = scalar_lea.vmem %s213, 32 [#allocation3]
        %v947 = vld [vmem:[%s946] sm:$0xff]
        %v949 = vsel %vm311, %v936, 0
        %v952 = vsel %vm311, %v937, 0
        %v955 = vsel %vm311, %v938, 0
        %v958 = vsel %vm311, %v939, 0
        %v961 = vsel %vm311, %v940, 0
        %v964 = vsel %vm311, %v941, 0
        %v967 = vsel %vm311, %v942, 0
        %v970 = vsel %vm311, %v943, 0
        %v973 = vsel %vm311, %v944, 0
        %v976 = vsel %vm311, %v945, 0
        %978 = vmatprep.subr.mxu0 0.0
        %979 = vmatpush1.msra.mxu0 %v947
        %980 = vmatprep.subr.mxu0 0.0
        %981 = vmatpush1.msra.mxu0 0.0
        %982 = vmatprep.subr.mxu0 0.0
        %983 = vmatpush1.msra.mxu0 0.0
        %984 = vmatprep.subr.mxu0 0.0
        %985 = vmatpush1.msra.mxu0 0.0
        %986 = vmatprep.subr.mxu0 0.0
        %987 = vmatpush1.msra.mxu0 0.0
        %988 = vmatprep.subr.mxu0 0.0
        %989 = vmatpush1.msra.mxu0 0.0
        %990 = vmatprep.subr.mxu0 0.0
        %991 = vmatpush1.msra.mxu0 0.0
        %992 = vmatprep.subr.mxu0 0.0
        %993 = vmatpush1.msra.mxu0 0.0
        %994 = vmatprep.subr.mxu0 0.0
        %995 = vmatpush1.msra.mxu0 0.0
        %996 = vmatprep.subr.mxu0 0.0
        %997 = vmatpush1.msra.mxu0 0.0
        %998 = vmatprep.subr.mxu0 0.0
        %999 = vmatpush1.msra.mxu0 0.0
        %1000 = vmatprep.subr.mxu0 0.0
        %1001 = vmatpush1.msra.mxu0 0.0
        %1002 = vmatprep.subr.mxu0 0.0
        %1003 = vmatpush1.msra.mxu0 0.0
        %1004 = vmatprep.subr.mxu0 0.0
        %1005 = vmatpush1.msra.mxu0 0.0
        %1006 = vmatprep.subr.mxu0 0.0
        %1007 = vmatpush1.msra.mxu0 0.0
        %1008 = vmatprep.subr.mxu0 0.0
        %1009 = vmatpush1.msra.mxu0 0.0
        %1010 = vmatprep.subr.mxu0 0.0
        %1011 = vmatpush1.msra.mxu0 0.0
        %1012 = vmatprep.subr.mxu0 0.0
        %1013 = vmatpush1.msra.mxu0 0.0
        %1014 = vmatprep.subr.mxu0 0.0
        %1015 = vmatpush1.msra.mxu0 0.0
        %1016 = vmatprep.subr.mxu0 0.0
        %1017 = vmatpush1.msra.mxu0 0.0
        %1018 = vmatprep.subr.mxu0 0.0
        %1019 = vmatpush1.msra.mxu0 0.0
        %1020 = vmatprep.subr.mxu0 0.0
        %1021 = vmatpush1.msra.mxu0 0.0
        %1022 = vmatprep.subr.mxu0 0.0
        %1023 = vmatpush1.msra.mxu0 0.0
        %1024 = vmatprep.subr.mxu0 0.0
        %1025 = vmatpush1.msra.mxu0 0.0
        %1026 = vmatprep.subr.mxu0 0.0
        %1027 = vmatpush1.msra.mxu0 0.0
        %1028 = vmatprep.subr.mxu0 0.0
        %1029 = vmatpush1.msra.mxu0 0.0
        %1030 = vmatprep.subr.mxu0 0.0
        %1031 = vmatpush1.msra.mxu0 0.0
        %1032 = vmatprep.subr.mxu0 0.0
        %1033 = vmatpush1.msra.mxu0 0.0
        %1034 = vmatprep.subr.mxu0 0.0
        %1035 = vmatpush1.msra.mxu0 0.0
        %1036 = vmatprep.subr.mxu0 0.0
        %1037 = vmatpush1.msra.mxu0 0.0
        %1038 = vmatprep.subr.mxu0 0.0
        %1039 = vmatpush1.msra.mxu0 0.0
        %1040 = vmatprep.subr.mxu0 0.0
        %1041 = vmatpush1.msra.mxu0 0.0
        %1042 = vmatprep.mubr.f32.mxu0 0.0
        %1043 = vmatmul.mubr.f32.gmra.mrb[0].mxu0 %v949
        %v1044 = vpop.f32.mrb[0].mxu0
        %v1045 = vadd.f32 0.0, %v1044
        %v1046 = vpop.f32.mrb[0].mxu0
        %1047 = vmatprep.mubr.f32.mxu0 0.0
        %1048 = vmatmul.mubr.f32.gmra.mrb[0].mxu0 %v952
        %v1049 = vpop.f32.mrb[0].mxu0
        %v1050 = vadd.f32 0.0, %v1049
        %v1051 = vpop.f32.mrb[0].mxu0
        %1052 = vmatprep.mubr.f32.mxu0 0.0
        %1053 = vmatmul.mubr.f32.gmra.mrb[0].mxu0 %v955
        %v1054 = vpop.f32.mrb[0].mxu0
        %v1055 = vadd.f32 0.0, %v1054
        %v1056 = vpop.f32.mrb[0].mxu0
        %1057 = vmatprep.mubr.f32.mxu0 0.0
        %1058 = vmatmul.mubr.f32.gmra.mrb[0].mxu0 %v958
        %v1059 = vpop.f32.mrb[0].mxu0
        %v1060 = vadd.f32 0.0, %v1059
        %v1061 = vpop.f32.mrb[0].mxu0
        %1062 = vmatprep.mubr.f32.mxu0 0.0
        %1063 = vmatmul.mubr.f32.gmra.mrb[0].mxu0 %v961
        %v1064 = vpop.f32.mrb[0].mxu0
        %v1065 = vadd.f32 0.0, %v1064
        %v1066 = vpop.f32.mrb[0].mxu0
        %1067 = vmatprep.mubr.f32.mxu0 0.0
        %1068 = vmatmul.mubr.f32.gmra.mrb[0].mxu0 %v964
        %v1069 = vpop.f32.mrb[0].mxu0
        %v1070 = vadd.f32 0.0, %v1069
        %v1071 = vpop.f32.mrb[0].mxu0
        %1072 = vmatprep.mubr.f32.mxu0 0.0
        %1073 = vmatmul.mubr.f32.gmra.mrb[0].mxu0 %v967
        %v1074 = vpop.f32.mrb[0].mxu0
        %v1075 = vadd.f32 0.0, %v1074
        %v1076 = vpop.f32.mrb[0].mxu0
        %1077 = vmatprep.mubr.f32.mxu0 0.0
        %1078 = vmatmul.mubr.f32.gmra.mrb[0].mxu0 %v970
        %v1079 = vpop.f32.mrb[0].mxu0
        %v1080 = vadd.f32 0.0, %v1079
        %v1081 = vpop.f32.mrb[0].mxu0
        %1082 = vmatprep.mubr.f32.mxu0 0.0
        %1083 = vmatmul.mubr.f32.gmra.mrb[0].mxu0 %v973
        %v1084 = vpop.f32.mrb[0].mxu0
        %v1085 = vadd.f32 0.0, %v1084
        %v1086 = vpop.f32.mrb[0].mxu0
        %1087 = vmatprep.mubr.f32.mxu0 0.0
        %1088 = vmatmul.mubr.f32.gmra.mrb[0].mxu0 %v976
        %v1089 = vpop.f32.mrb[0].mxu0
        %v1090 = vadd.f32 0.0, %v1089
        %v1091 = vpop.f32.mrb[0].mxu0
        %1092 = vdwg.mxu0
        %v1093 = vadd.f32 %v926, %v1045
        %v1094 = vadd.f32 %v927, %v1050
        %v1095 = vadd.f32 %v928, %v1055
        %v1096 = vadd.f32 %v929, %v1060
        %v1097 = vadd.f32 %v930, %v1065
        %v1098 = vadd.f32 %v931, %v1070
        %v1099 = vadd.f32 %v932, %v1075
        %v1100 = vadd.f32 %v933, %v1080
        %v1101 = vadd.f32 %v934, %v1085
        %v1102 = vadd.f32 %v935, %v1090
        %v1103 = vld [vmem:[%s263 + $0xc] sm:$0xff]
        %v1104 = vld [vmem:[%s263 + $0x14] sm:$0xff]
        %v1105 = vld [vmem:[%s263 + $0x1c] sm:$0xff]
        %v1106 = vld [vmem:[%s263 + $0x24] sm:$0xff]
        %v1107 = vld [vmem:[%s263 + $0x2c] sm:$0xff]
        %v1108 = vld [vmem:[%s263 + $0x34] sm:$0xff]
        %v1109 = vld [vmem:[%s263 + $0x3c] sm:$0xff]
        %v1110 = vld [vmem:[%s263 + $0x44] sm:$0xff]
        %v1111 = vld [vmem:[%s263 + $0x4c] sm:$0xff]
        %v1112 = vld [vmem:[%s263 + $0x54] sm:$0x3f]
        %s1113 = scalar_lea.vmem %s213, 40 [#allocation3]
        %v1114 = vld [vmem:[%s1113] sm:$0xff]
        %v1116 = vsel %vm311, %v1103, 0
        %v1119 = vsel %vm311, %v1104, 0
        %v1122 = vsel %vm311, %v1105, 0
        %v1125 = vsel %vm311, %v1106, 0
        %v1128 = vsel %vm311, %v1107, 0
        %v1131 = vsel %vm311, %v1108, 0
        %v1134 = vsel %vm311, %v1109, 0
        %v1137 = vsel %vm311, %v1110, 0
        %v1140 = vsel %vm311, %v1111, 0
        %v1143 = vsel %vm311, %v1112, 0
        %1145 = vmatprep.subr.mxu0 0.0
        %1146 = vmatpush1.msra.mxu0 %v1114
        %1147 = vmatprep.subr.mxu0 0.0
        %1148 = vmatpush1.msra.mxu0 0.0
        %1149 = vmatprep.subr.mxu0 0.0
        %1150 = vmatpush1.msra.mxu0 0.0
        %1151 = vmatprep.subr.mxu0 0.0
        %1152 = vmatpush1.msra.mxu0 0.0
        %1153 = vmatprep.subr.mxu0 0.0
        %1154 = vmatpush1.msra.mxu0 0.0
        %1155 = vmatprep.subr.mxu0 0.0
        %1156 = vmatpush1.msra.mxu0 0.0
        %1157 = vmatprep.subr.mxu0 0.0
        %1158 = vmatpush1.msra.mxu0 0.0
        %1159 = vmatprep.subr.mxu0 0.0
        %1160 = vmatpush1.msra.mxu0 0.0
        %1161 = vmatprep.subr.mxu0 0.0
        %1162 = vmatpush1.msra.mxu0 0.0
        %1163 = vmatprep.subr.mxu0 0.0
        %1164 = vmatpush1.msra.mxu0 0.0
        %1165 = vmatprep.subr.mxu0 0.0
        %1166 = vmatpush1.msra.mxu0 0.0
        %1167 = vmatprep.subr.mxu0 0.0
        %1168 = vmatpush1.msra.mxu0 0.0
        %1169 = vmatprep.subr.mxu0 0.0
        %1170 = vmatpush1.msra.mxu0 0.0
        %1171 = vmatprep.subr.mxu0 0.0
        %1172 = vmatpush1.msra.mxu0 0.0
        %1173 = vmatprep.subr.mxu0 0.0
        %1174 = vmatpush1.msra.mxu0 0.0
        %1175 = vmatprep.subr.mxu0 0.0
        %1176 = vmatpush1.msra.mxu0 0.0
        %1177 = vmatprep.subr.mxu0 0.0
        %1178 = vmatpush1.msra.mxu0 0.0
        %1179 = vmatprep.subr.mxu0 0.0
        %1180 = vmatpush1.msra.mxu0 0.0
        %1181 = vmatprep.subr.mxu0 0.0
        %1182 = vmatpush1.msra.mxu0 0.0
        %1183 = vmatprep.subr.mxu0 0.0
        %1184 = vmatpush1.msra.mxu0 0.0
        %1185 = vmatprep.subr.mxu0 0.0
        %1186 = vmatpush1.msra.mxu0 0.0
        %1187 = vmatprep.subr.mxu0 0.0
        %1188 = vmatpush1.msra.mxu0 0.0
        %1189 = vmatprep.subr.mxu0 0.0
        %1190 = vmatpush1.msra.mxu0 0.0
        %1191 = vmatprep.subr.mxu0 0.0
        %1192 = vmatpush1.msra.mxu0 0.0
        %1193 = vmatprep.subr.mxu0 0.0
        %1194 = vmatpush1.msra.mxu0 0.0
        %1195 = vmatprep.subr.mxu0 0.0
        %1196 = vmatpush1.msra.mxu0 0.0
        %1197 = vmatprep.subr.mxu0 0.0
        %1198 = vmatpush1.msra.mxu0 0.0
        %1199 = vmatprep.subr.mxu0 0.0
        %1200 = vmatpush1.msra.mxu0 0.0
        %1201 = vmatprep.subr.mxu0 0.0
        %1202 = vmatpush1.msra.mxu0 0.0
        %1203 = vmatprep.subr.mxu0 0.0
        %1204 = vmatpush1.msra.mxu0 0.0
        %1205 = vmatprep.subr.mxu0 0.0
        %1206 = vmatpush1.msra.mxu0 0.0
        %1207 = vmatprep.subr.mxu0 0.0
        %1208 = vmatpush1.msra.mxu0 0.0
        %1209 = vmatprep.mubr.f32.mxu0 0.0
        %1210 = vmatmul.mubr.f32.gmra.mrb[0].mxu0 %v1116
        %v1211 = vpop.f32.mrb[0].mxu0
        %v1212 = vadd.f32 0.0, %v1211
        %v1213 = vpop.f32.mrb[0].mxu0
        %1214 = vmatprep.mubr.f32.mxu0 0.0
        %1215 = vmatmul.mubr.f32.gmra.mrb[0].mxu0 %v1119
        %v1216 = vpop.f32.mrb[0].mxu0
        %v1217 = vadd.f32 0.0, %v1216
        %v1218 = vpop.f32.mrb[0].mxu0
        %1219 = vmatprep.mubr.f32.mxu0 0.0
        %1220 = vmatmul.mubr.f32.gmra.mrb[0].mxu0 %v1122
        %v1221 = vpop.f32.mrb[0].mxu0
        %v1222 = vadd.f32 0.0, %v1221
        %v1223 = vpop.f32.mrb[0].mxu0
        %1224 = vmatprep.mubr.f32.mxu0 0.0
        %1225 = vmatmul.mubr.f32.gmra.mrb[0].mxu0 %v1125
        %v1226 = vpop.f32.mrb[0].mxu0
        %v1227 = vadd.f32 0.0, %v1226
        %v1228 = vpop.f32.mrb[0].mxu0
        %1229 = vmatprep.mubr.f32.mxu0 0.0
        %1230 = vmatmul.mubr.f32.gmra.mrb[0].mxu0 %v1128
        %v1231 = vpop.f32.mrb[0].mxu0
        %v1232 = vadd.f32 0.0, %v1231
        %v1233 = vpop.f32.mrb[0].mxu0
        %1234 = vmatprep.mubr.f32.mxu0 0.0
        %1235 = vmatmul.mubr.f32.gmra.mrb[0].mxu0 %v1131
        %v1236 = vpop.f32.mrb[0].mxu0
        %v1237 = vadd.f32 0.0, %v1236
        %v1238 = vpop.f32.mrb[0].mxu0
        %1239 = vmatprep.mubr.f32.mxu0 0.0
        %1240 = vmatmul.mubr.f32.gmra.mrb[0].mxu0 %v1134
        %v1241 = vpop.f32.mrb[0].mxu0
        %v1242 = vadd.f32 0.0, %v1241
        %v1243 = vpop.f32.mrb[0].mxu0
        %1244 = vmatprep.mubr.f32.mxu0 0.0
        %1245 = vmatmul.mubr.f32.gmra.mrb[0].mxu0 %v1137
        %v1246 = vpop.f32.mrb[0].mxu0
        %v1247 = vadd.f32 0.0, %v1246
        %v1248 = vpop.f32.mrb[0].mxu0
        %1249 = vmatprep.mubr.f32.mxu0 0.0
        %1250 = vmatmul.mubr.f32.gmra.mrb[0].mxu0 %v1140
        %v1251 = vpop.f32.mrb[0].mxu0
        %v1252 = vadd.f32 0.0, %v1251
        %v1253 = vpop.f32.mrb[0].mxu0
        %1254 = vmatprep.mubr.f32.mxu0 0.0
        %1255 = vmatmul.mubr.f32.gmra.mrb[0].mxu0 %v1143
        %v1256 = vpop.f32.mrb[0].mxu0
        %v1257 = vadd.f32 0.0, %v1256
        %v1258 = vpop.f32.mrb[0].mxu0
        %1259 = vdwg.mxu0
        %v1260 = vadd.f32 %v1093, %v1212
        %v1261 = vadd.f32 %v1094, %v1217
        %v1262 = vadd.f32 %v1095, %v1222
        %v1263 = vadd.f32 %v1096, %v1227
        %v1264 = vadd.f32 %v1097, %v1232
        %v1265 = vadd.f32 %v1098, %v1237
        %v1266 = vadd.f32 %v1099, %v1242
        %v1267 = vadd.f32 %v1100, %v1247
        %v1268 = vadd.f32 %v1101, %v1252
        %v1269 = vadd.f32 %v1102, %v1257
        %v1270 = vld [vmem:[%s263 + $0x14] sm:$0xff]
        %v1271 = vld [vmem:[%s263 + $0x1c] sm:$0xff]
        %v1272 = vld [vmem:[%s263 + $0x24] sm:$0xff]
        %v1273 = vld [vmem:[%s263 + $0x2c] sm:$0xff]
        %v1274 = vld [vmem:[%s263 + $0x34] sm:$0xff]
        %v1275 = vld [vmem:[%s263 + $0x3c] sm:$0xff]
        %v1276 = vld [vmem:[%s263 + $0x44] sm:$0xff]
        %v1277 = vld [vmem:[%s263 + $0x4c] sm:$0xff]
        %v1278 = vld [vmem:[%s263 + $0x54] sm:$0xff]
        %v1279 = vld [vmem:[%s263 + $0x5c] sm:$0x3f]
        %s1280 = scalar_lea.vmem %s213, 48 [#allocation3]
        %v1281 = vld [vmem:[%s1280] sm:$0xff]
        %v1283 = vsel %vm311, %v1270, 0
        %v1286 = vsel %vm311, %v1271, 0
        %v1289 = vsel %vm311, %v1272, 0
        %v1292 = vsel %vm311, %v1273, 0
        %v1295 = vsel %vm311, %v1274, 0
        %v1298 = vsel %vm311, %v1275, 0
        %v1301 = vsel %vm311, %v1276, 0
        %v1304 = vsel %vm311, %v1277, 0
        %v1307 = vsel %vm311, %v1278, 0
        %v1310 = vsel %vm311, %v1279, 0
        %1312 = vmatprep.subr.mxu0 0.0
        %1313 = vmatpush1.msra.mxu0 %v1281
        %1314 = vmatprep.subr.mxu0 0.0
        %1315 = vmatpush1.msra.mxu0 0.0
        %1316 = vmatprep.subr.mxu0 0.0
        %1317 = vmatpush1.msra.mxu0 0.0
        %1318 = vmatprep.subr.mxu0 0.0
        %1319 = vmatpush1.msra.mxu0 0.0
        %1320 = vmatprep.subr.mxu0 0.0
        %1321 = vmatpush1.msra.mxu0 0.0
        %1322 = vmatprep.subr.mxu0 0.0
        %1323 = vmatpush1.msra.mxu0 0.0
        %1324 = vmatprep.subr.mxu0 0.0
        %1325 = vmatpush1.msra.mxu0 0.0
        %1326 = vmatprep.subr.mxu0 0.0
        %1327 = vmatpush1.msra.mxu0 0.0
        %1328 = vmatprep.subr.mxu0 0.0
        %1329 = vmatpush1.msra.mxu0 0.0
        %1330 = vmatprep.subr.mxu0 0.0
        %1331 = vmatpush1.msra.mxu0 0.0
        %1332 = vmatprep.subr.mxu0 0.0
        %1333 = vmatpush1.msra.mxu0 0.0
        %1334 = vmatprep.subr.mxu0 0.0
        %1335 = vmatpush1.msra.mxu0 0.0
        %1336 = vmatprep.subr.mxu0 0.0
        %1337 = vmatpush1.msra.mxu0 0.0
        %1338 = vmatprep.subr.mxu0 0.0
        %1339 = vmatpush1.msra.mxu0 0.0
        %1340 = vmatprep.subr.mxu0 0.0
        %1341 = vmatpush1.msra.mxu0 0.0
        %1342 = vmatprep.subr.mxu0 0.0
        %1343 = vmatpush1.msra.mxu0 0.0
        %1344 = vmatprep.subr.mxu0 0.0
        %1345 = vmatpush1.msra.mxu0 0.0
        %1346 = vmatprep.subr.mxu0 0.0
        %1347 = vmatpush1.msra.mxu0 0.0
        %1348 = vmatprep.subr.mxu0 0.0
        %1349 = vmatpush1.msra.mxu0 0.0
        %1350 = vmatprep.subr.mxu0 0.0
        %1351 = vmatpush1.msra.mxu0 0.0
        %1352 = vmatprep.subr.mxu0 0.0
        %1353 = vmatpush1.msra.mxu0 0.0
        %1354 = vmatprep.subr.mxu0 0.0
        %1355 = vmatpush1.msra.mxu0 0.0
        %1356 = vmatprep.subr.mxu0 0.0
        %1357 = vmatpush1.msra.mxu0 0.0
        %1358 = vmatprep.subr.mxu0 0.0
        %1359 = vmatpush1.msra.mxu0 0.0
        %1360 = vmatprep.subr.mxu0 0.0
        %1361 = vmatpush1.msra.mxu0 0.0
        %1362 = vmatprep.subr.mxu0 0.0
        %1363 = vmatpush1.msra.mxu0 0.0
        %1364 = vmatprep.subr.mxu0 0.0
        %1365 = vmatpush1.msra.mxu0 0.0
        %1366 = vmatprep.subr.mxu0 0.0
        %1367 = vmatpush1.msra.mxu0 0.0
        %1368 = vmatprep.subr.mxu0 0.0
        %1369 = vmatpush1.msra.mxu0 0.0
        %1370 = vmatprep.subr.mxu0 0.0
        %1371 = vmatpush1.msra.mxu0 0.0
        %1372 = vmatprep.subr.mxu0 0.0
        %1373 = vmatpush1.msra.mxu0 0.0
        %1374 = vmatprep.subr.mxu0 0.0
        %1375 = vmatpush1.msra.mxu0 0.0
        %1376 = vmatprep.mubr.f32.mxu0 0.0
        %1377 = vmatmul.mubr.f32.gmra.mrb[0].mxu0 %v1283
        %v1378 = vpop.f32.mrb[0].mxu0
        %v1379 = vadd.f32 0.0, %v1378
        %v1380 = vpop.f32.mrb[0].mxu0
        %1381 = vmatprep.mubr.f32.mxu0 0.0
        %1382 = vmatmul.mubr.f32.gmra.mrb[0].mxu0 %v1286
        %v1383 = vpop.f32.mrb[0].mxu0
        %v1384 = vadd.f32 0.0, %v1383
        %v1385 = vpop.f32.mrb[0].mxu0
        %1386 = vmatprep.mubr.f32.mxu0 0.0
        %1387 = vmatmul.mubr.f32.gmra.mrb[0].mxu0 %v1289
        %v1388 = vpop.f32.mrb[0].mxu0
        %v1389 = vadd.f32 0.0, %v1388
        %v1390 = vpop.f32.mrb[0].mxu0
        %1391 = vmatprep.mubr.f32.mxu0 0.0
        %1392 = vmatmul.mubr.f32.gmra.mrb[0].mxu0 %v1292
        %v1393 = vpop.f32.mrb[0].mxu0
        %v1394 = vadd.f32 0.0, %v1393
        %v1395 = vpop.f32.mrb[0].mxu0
        %1396 = vmatprep.mubr.f32.mxu0 0.0
        %1397 = vmatmul.mubr.f32.gmra.mrb[0].mxu0 %v1295
        %v1398 = vpop.f32.mrb[0].mxu0
        %v1399 = vadd.f32 0.0, %v1398
        %v1400 = vpop.f32.mrb[0].mxu0
        %1401 = vmatprep.mubr.f32.mxu0 0.0
        %1402 = vmatmul.mubr.f32.gmra.mrb[0].mxu0 %v1298
        %v1403 = vpop.f32.mrb[0].mxu0
        %v1404 = vadd.f32 0.0, %v1403
        %v1405 = vpop.f32.mrb[0].mxu0
        %1406 = vmatprep.mubr.f32.mxu0 0.0
        %1407 = vmatmul.mubr.f32.gmra.mrb[0].mxu0 %v1301
        %v1408 = vpop.f32.mrb[0].mxu0
        %v1409 = vadd.f32 0.0, %v1408
        %v1410 = vpop.f32.mrb[0].mxu0
        %1411 = vmatprep.mubr.f32.mxu0 0.0
        %1412 = vmatmul.mubr.f32.gmra.mrb[0].mxu0 %v1304
        %v1413 = vpop.f32.mrb[0].mxu0
        %v1414 = vadd.f32 0.0, %v1413
        %v1415 = vpop.f32.mrb[0].mxu0
        %1416 = vmatprep.mubr.f32.mxu0 0.0
        %1417 = vmatmul.mubr.f32.gmra.mrb[0].mxu0 %v1307
        %v1418 = vpop.f32.mrb[0].mxu0
        %v1419 = vadd.f32 0.0, %v1418
        %v1420 = vpop.f32.mrb[0].mxu0
        %1421 = vmatprep.mubr.f32.mxu0 0.0
        %1422 = vmatmul.mubr.f32.gmra.mrb[0].mxu0 %v1310
        %v1423 = vpop.f32.mrb[0].mxu0
        %v1424 = vadd.f32 0.0, %v1423
        %v1425 = vpop.f32.mrb[0].mxu0
        %1426 = vdwg.mxu0
        %v1427 = vadd.f32 %v1260, %v1379
        %v1428 = vadd.f32 %v1261, %v1384
        %v1429 = vadd.f32 %v1262, %v1389
        %v1430 = vadd.f32 %v1263, %v1394
        %v1431 = vadd.f32 %v1264, %v1399
        %v1432 = vadd.f32 %v1265, %v1404
        %v1433 = vadd.f32 %v1266, %v1409
        %v1434 = vadd.f32 %v1267, %v1414
        %v1435 = vadd.f32 %v1268, %v1419
        %v1436 = vadd.f32 %v1269, %v1424
        %v1437 = vld [vmem:[%s263 + $0x15] sm:$0xff]
        %v1438 = vld [vmem:[%s263 + $0x1d] sm:$0xff]
        %v1439 = vld [vmem:[%s263 + $0x25] sm:$0xff]
        %v1440 = vld [vmem:[%s263 + $0x2d] sm:$0xff]
        %v1441 = vld [vmem:[%s263 + $0x35] sm:$0xff]
        %v1442 = vld [vmem:[%s263 + $0x3d] sm:$0xff]
        %v1443 = vld [vmem:[%s263 + $0x45] sm:$0xff]
        %v1444 = vld [vmem:[%s263 + $0x4d] sm:$0xff]
        %v1445 = vld [vmem:[%s263 + $0x55] sm:$0xff]
        %v1446 = vld [vmem:[%s263 + $0x5d] sm:$0x3f]
        %s1447 = scalar_lea.vmem %s213, 56 [#allocation3]
        %v1448 = vld [vmem:[%s1447] sm:$0xff]
        %v1450 = vsel %vm311, %v1437, 0
        %v1453 = vsel %vm311, %v1438, 0
        %v1456 = vsel %vm311, %v1439, 0
        %v1459 = vsel %vm311, %v1440, 0
        %v1462 = vsel %vm311, %v1441, 0
        %v1465 = vsel %vm311, %v1442, 0
        %v1468 = vsel %vm311, %v1443, 0
        %v1471 = vsel %vm311, %v1444, 0
        %v1474 = vsel %vm311, %v1445, 0
        %v1477 = vsel %vm311, %v1446, 0
        %1479 = vmatprep.subr.mxu0 0.0
        %1480 = vmatpush1.msra.mxu0 %v1448
        %1481 = vmatprep.subr.mxu0 0.0
        %1482 = vmatpush1.msra.mxu0 0.0
        %1483 = vmatprep.subr.mxu0 0.0
        %1484 = vmatpush1.msra.mxu0 0.0
        %1485 = vmatprep.subr.mxu0 0.0
        %1486 = vmatpush1.msra.mxu0 0.0
        %1487 = vmatprep.subr.mxu0 0.0
        %1488 = vmatpush1.msra.mxu0 0.0
        %1489 = vmatprep.subr.mxu0 0.0
        %1490 = vmatpush1.msra.mxu0 0.0
        %1491 = vmatprep.subr.mxu0 0.0
        %1492 = vmatpush1.msra.mxu0 0.0
        %1493 = vmatprep.subr.mxu0 0.0
        %1494 = vmatpush1.msra.mxu0 0.0
        %1495 = vmatprep.subr.mxu0 0.0
        %1496 = vmatpush1.msra.mxu0 0.0
        %1497 = vmatprep.subr.mxu0 0.0
        %1498 = vmatpush1.msra.mxu0 0.0
        %1499 = vmatprep.subr.mxu0 0.0
        %1500 = vmatpush1.msra.mxu0 0.0
        %1501 = vmatprep.subr.mxu0 0.0
        %1502 = vmatpush1.msra.mxu0 0.0
        %1503 = vmatprep.subr.mxu0 0.0
        %1504 = vmatpush1.msra.mxu0 0.0
        %1505 = vmatprep.subr.mxu0 0.0
        %1506 = vmatpush1.msra.mxu0 0.0
        %1507 = vmatprep.subr.mxu0 0.0
        %1508 = vmatpush1.msra.mxu0 0.0
        %1509 = vmatprep.subr.mxu0 0.0
        %1510 = vmatpush1.msra.mxu0 0.0
        %1511 = vmatprep.subr.mxu0 0.0
        %1512 = vmatpush1.msra.mxu0 0.0
        %1513 = vmatprep.subr.mxu0 0.0
        %1514 = vmatpush1.msra.mxu0 0.0
        %1515 = vmatprep.subr.mxu0 0.0
        %1516 = vmatpush1.msra.mxu0 0.0
        %1517 = vmatprep.subr.mxu0 0.0
        %1518 = vmatpush1.msra.mxu0 0.0
        %1519 = vmatprep.subr.mxu0 0.0
        %1520 = vmatpush1.msra.mxu0 0.0
        %1521 = vmatprep.subr.mxu0 0.0
        %1522 = vmatpush1.msra.mxu0 0.0
        %1523 = vmatprep.subr.mxu0 0.0
        %1524 = vmatpush1.msra.mxu0 0.0
        %1525 = vmatprep.subr.mxu0 0.0
        %1526 = vmatpush1.msra.mxu0 0.0
        %1527 = vmatprep.subr.mxu0 0.0
        %1528 = vmatpush1.msra.mxu0 0.0
        %1529 = vmatprep.subr.mxu0 0.0
        %1530 = vmatpush1.msra.mxu0 0.0
        %1531 = vmatprep.subr.mxu0 0.0
        %1532 = vmatpush1.msra.mxu0 0.0
        %1533 = vmatprep.subr.mxu0 0.0
        %1534 = vmatpush1.msra.mxu0 0.0
        %1535 = vmatprep.subr.mxu0 0.0
        %1536 = vmatpush1.msra.mxu0 0.0
        %1537 = vmatprep.subr.mxu0 0.0
        %1538 = vmatpush1.msra.mxu0 0.0
        %1539 = vmatprep.subr.mxu0 0.0
        %1540 = vmatpush1.msra.mxu0 0.0
        %1541 = vmatprep.subr.mxu0 0.0
        %1542 = vmatpush1.msra.mxu0 0.0
        %1543 = vmatprep.mubr.f32.mxu0 0.0
        %1544 = vmatmul.mubr.f32.gmra.mrb[0].mxu0 %v1450
        %v1545 = vpop.f32.mrb[0].mxu0
        %v1546 = vadd.f32 0.0, %v1545
        %v1547 = vpop.f32.mrb[0].mxu0
        %1548 = vmatprep.mubr.f32.mxu0 0.0
        %1549 = vmatmul.mubr.f32.gmra.mrb[0].mxu0 %v1453
        %v1550 = vpop.f32.mrb[0].mxu0
        %v1551 = vadd.f32 0.0, %v1550
        %v1552 = vpop.f32.mrb[0].mxu0
        %1553 = vmatprep.mubr.f32.mxu0 0.0
        %1554 = vmatmul.mubr.f32.gmra.mrb[0].mxu0 %v1456
        %v1555 = vpop.f32.mrb[0].mxu0
        %v1556 = vadd.f32 0.0, %v1555
        %v1557 = vpop.f32.mrb[0].mxu0
        %1558 = vmatprep.mubr.f32.mxu0 0.0
        %1559 = vmatmul.mubr.f32.gmra.mrb[0].mxu0 %v1459
        %v1560 = vpop.f32.mrb[0].mxu0
        %v1561 = vadd.f32 0.0, %v1560
        %v1562 = vpop.f32.mrb[0].mxu0
        %1563 = vmatprep.mubr.f32.mxu0 0.0
        %1564 = vmatmul.mubr.f32.gmra.mrb[0].mxu0 %v1462
        %v1565 = vpop.f32.mrb[0].mxu0
        %v1566 = vadd.f32 0.0, %v1565
        %v1567 = vpop.f32.mrb[0].mxu0
        %1568 = vmatprep.mubr.f32.mxu0 0.0
        %1569 = vmatmul.mubr.f32.gmra.mrb[0].mxu0 %v1465
        %v1570 = vpop.f32.mrb[0].mxu0
        %v1571 = vadd.f32 0.0, %v1570
        %v1572 = vpop.f32.mrb[0].mxu0
        %1573 = vmatprep.mubr.f32.mxu0 0.0
        %1574 = vmatmul.mubr.f32.gmra.mrb[0].mxu0 %v1468
        %v1575 = vpop.f32.mrb[0].mxu0
        %v1576 = vadd.f32 0.0, %v1575
        %v1577 = vpop.f32.mrb[0].mxu0
        %1578 = vmatprep.mubr.f32.mxu0 0.0
        %1579 = vmatmul.mubr.f32.gmra.mrb[0].mxu0 %v1471
        %v1580 = vpop.f32.mrb[0].mxu0
        %v1581 = vadd.f32 0.0, %v1580
        %v1582 = vpop.f32.mrb[0].mxu0
        %1583 = vmatprep.mubr.f32.mxu0 0.0
        %1584 = vmatmul.mubr.f32.gmra.mrb[0].mxu0 %v1474
        %v1585 = vpop.f32.mrb[0].mxu0
        %v1586 = vadd.f32 0.0, %v1585
        %v1587 = vpop.f32.mrb[0].mxu0
        %1588 = vmatprep.mubr.f32.mxu0 0.0
        %1589 = vmatmul.mubr.f32.gmra.mrb[0].mxu0 %v1477
        %v1590 = vpop.f32.mrb[0].mxu0
        %v1591 = vadd.f32 0.0, %v1590
        %v1592 = vpop.f32.mrb[0].mxu0
        %1593 = vdwg.mxu0
        %v1594 = vadd.f32 %v1427, %v1546
        %v1595 = vadd.f32 %v1428, %v1551
        %v1596 = vadd.f32 %v1429, %v1556
        %v1597 = vadd.f32 %v1430, %v1561
        %v1598 = vadd.f32 %v1431, %v1566
        %v1599 = vadd.f32 %v1432, %v1571
        %v1600 = vadd.f32 %v1433, %v1576
        %v1601 = vadd.f32 %v1434, %v1581
        %v1602 = vadd.f32 %v1435, %v1586
        %v1603 = vadd.f32 %v1436, %v1591
        %v1604 = vld [vmem:[%s263 + $0x16] sm:$0xff]
        %v1605 = vld [vmem:[%s263 + $0x1e] sm:$0xff]
        %v1606 = vld [vmem:[%s263 + $0x26] sm:$0xff]
        %v1607 = vld [vmem:[%s263 + $0x2e] sm:$0xff]
        %v1608 = vld [vmem:[%s263 + $0x36] sm:$0xff]
        %v1609 = vld [vmem:[%s263 + $0x3e] sm:$0xff]
        %v1610 = vld [vmem:[%s263 + $0x46] sm:$0xff]
        %v1611 = vld [vmem:[%s263 + $0x4e] sm:$0xff]
        %v1612 = vld [vmem:[%s263 + $0x56] sm:$0xff]
        %v1613 = vld [vmem:[%s263 + $0x5e] sm:$0x3f]
        %s1614 = scalar_lea.vmem %s213, 64 [#allocation3]
        %v1615 = vld [vmem:[%s1614] sm:$0xff]
        %v1617 = vsel %vm311, %v1604, 0
        %v1620 = vsel %vm311, %v1605, 0
        %v1623 = vsel %vm311, %v1606, 0
        %v1626 = vsel %vm311, %v1607, 0
        %v1629 = vsel %vm311, %v1608, 0
        %v1632 = vsel %vm311, %v1609, 0
        %v1635 = vsel %vm311, %v1610, 0
        %v1638 = vsel %vm311, %v1611, 0
        %v1641 = vsel %vm311, %v1612, 0
        %v1644 = vsel %vm311, %v1613, 0
        %1646 = vmatprep.subr.mxu0 0.0
        %1647 = vmatpush1.msra.mxu0 %v1615
        %1648 = vmatprep.subr.mxu0 0.0
        %1649 = vmatpush1.msra.mxu0 0.0
        %1650 = vmatprep.subr.mxu0 0.0
        %1651 = vmatpush1.msra.mxu0 0.0
        %1652 = vmatprep.subr.mxu0 0.0
        %1653 = vmatpush1.msra.mxu0 0.0
        %1654 = vmatprep.subr.mxu0 0.0
        %1655 = vmatpush1.msra.mxu0 0.0
        %1656 = vmatprep.subr.mxu0 0.0
        %1657 = vmatpush1.msra.mxu0 0.0
        %1658 = vmatprep.subr.mxu0 0.0
        %1659 = vmatpush1.msra.mxu0 0.0
        %1660 = vmatprep.subr.mxu0 0.0
        %1661 = vmatpush1.msra.mxu0 0.0
        %1662 = vmatprep.subr.mxu0 0.0
        %1663 = vmatpush1.msra.mxu0 0.0
        %1664 = vmatprep.subr.mxu0 0.0
        %1665 = vmatpush1.msra.mxu0 0.0
        %1666 = vmatprep.subr.mxu0 0.0
        %1667 = vmatpush1.msra.mxu0 0.0
        %1668 = vmatprep.subr.mxu0 0.0
        %1669 = vmatpush1.msra.mxu0 0.0
        %1670 = vmatprep.subr.mxu0 0.0
        %1671 = vmatpush1.msra.mxu0 0.0
        %1672 = vmatprep.subr.mxu0 0.0
        %1673 = vmatpush1.msra.mxu0 0.0
        %1674 = vmatprep.subr.mxu0 0.0
        %1675 = vmatpush1.msra.mxu0 0.0
        %1676 = vmatprep.subr.mxu0 0.0
        %1677 = vmatpush1.msra.mxu0 0.0
        %1678 = vmatprep.subr.mxu0 0.0
        %1679 = vmatpush1.msra.mxu0 0.0
        %1680 = vmatprep.subr.mxu0 0.0
        %1681 = vmatpush1.msra.mxu0 0.0
        %1682 = vmatprep.subr.mxu0 0.0
        %1683 = vmatpush1.msra.mxu0 0.0
        %1684 = vmatprep.subr.mxu0 0.0
        %1685 = vmatpush1.msra.mxu0 0.0
        %1686 = vmatprep.subr.mxu0 0.0
        %1687 = vmatpush1.msra.mxu0 0.0
        %1688 = vmatprep.subr.mxu0 0.0
        %1689 = vmatpush1.msra.mxu0 0.0
        %1690 = vmatprep.subr.mxu0 0.0
        %1691 = vmatpush1.msra.mxu0 0.0
        %1692 = vmatprep.subr.mxu0 0.0
        %1693 = vmatpush1.msra.mxu0 0.0
        %1694 = vmatprep.subr.mxu0 0.0
        %1695 = vmatpush1.msra.mxu0 0.0
        %1696 = vmatprep.subr.mxu0 0.0
        %1697 = vmatpush1.msra.mxu0 0.0
        %1698 = vmatprep.subr.mxu0 0.0
        %1699 = vmatpush1.msra.mxu0 0.0
        %1700 = vmatprep.subr.mxu0 0.0
        %1701 = vmatpush1.msra.mxu0 0.0
        %1702 = vmatprep.subr.mxu0 0.0
        %1703 = vmatpush1.msra.mxu0 0.0
        %1704 = vmatprep.subr.mxu0 0.0
        %1705 = vmatpush1.msra.mxu0 0.0
        %1706 = vmatprep.subr.mxu0 0.0
        %1707 = vmatpush1.msra.mxu0 0.0
        %1708 = vmatprep.subr.mxu0 0.0
        %1709 = vmatpush1.msra.mxu0 0.0
        %1710 = vmatprep.mubr.f32.mxu0 0.0
        %1711 = vmatmul.mubr.f32.gmra.mrb[0].mxu0 %v1617
        %v1712 = vpop.f32.mrb[0].mxu0
        %v1713 = vadd.f32 0.0, %v1712
        %v1714 = vpop.f32.mrb[0].mxu0
        %1715 = vmatprep.mubr.f32.mxu0 0.0
        %1716 = vmatmul.mubr.f32.gmra.mrb[0].mxu0 %v1620
        %v1717 = vpop.f32.mrb[0].mxu0
        %v1718 = vadd.f32 0.0, %v1717
        %v1719 = vpop.f32.mrb[0].mxu0
        %1720 = vmatprep.mubr.f32.mxu0 0.0
        %1721 = vmatmul.mubr.f32.gmra.mrb[0].mxu0 %v1623
        %v1722 = vpop.f32.mrb[0].mxu0
        %v1723 = vadd.f32 0.0, %v1722
        %v1724 = vpop.f32.mrb[0].mxu0
        %1725 = vmatprep.mubr.f32.mxu0 0.0
        %1726 = vmatmul.mubr.f32.gmra.mrb[0].mxu0 %v1626
        %v1727 = vpop.f32.mrb[0].mxu0
        %v1728 = vadd.f32 0.0, %v1727
        %v1729 = vpop.f32.mrb[0].mxu0
        %1730 = vmatprep.mubr.f32.mxu0 0.0
        %1731 = vmatmul.mubr.f32.gmra.mrb[0].mxu0 %v1629
        %v1732 = vpop.f32.mrb[0].mxu0
        %v1733 = vadd.f32 0.0, %v1732
        %v1734 = vpop.f32.mrb[0].mxu0
        %1735 = vmatprep.mubr.f32.mxu0 0.0
        %1736 = vmatmul.mubr.f32.gmra.mrb[0].mxu0 %v1632
        %v1737 = vpop.f32.mrb[0].mxu0
        %v1738 = vadd.f32 0.0, %v1737
        %v1739 = vpop.f32.mrb[0].mxu0
        %1740 = vmatprep.mubr.f32.mxu0 0.0
        %1741 = vmatmul.mubr.f32.gmra.mrb[0].mxu0 %v1635
        %v1742 = vpop.f32.mrb[0].mxu0
        %v1743 = vadd.f32 0.0, %v1742
        %v1744 = vpop.f32.mrb[0].mxu0
        %1745 = vmatprep.mubr.f32.mxu0 0.0
        %1746 = vmatmul.mubr.f32.gmra.mrb[0].mxu0 %v1638
        %v1747 = vpop.f32.mrb[0].mxu0
        %v1748 = vadd.f32 0.0, %v1747
        %v1749 = vpop.f32.mrb[0].mxu0
        %1750 = vmatprep.mubr.f32.mxu0 0.0
        %1751 = vmatmul.mubr.f32.gmra.mrb[0].mxu0 %v1641
        %v1752 = vpop.f32.mrb[0].mxu0
        %v1753 = vadd.f32 0.0, %v1752
        %v1754 = vpop.f32.mrb[0].mxu0
        %1755 = vmatprep.mubr.f32.mxu0 0.0
        %1756 = vmatmul.mubr.f32.gmra.mrb[0].mxu0 %v1644
        %v1757 = vpop.f32.mrb[0].mxu0
        %v1758 = vadd.f32 0.0, %v1757
        %v1759 = vpop.f32.mrb[0].mxu0
        %1760 = vdwg.mxu0
        %v1761 = vadd.f32 %v1594, %v1713
        %v1762 = vadd.f32 %v1595, %v1718
        %v1763 = vadd.f32 %v1596, %v1723
        %v1764 = vadd.f32 %v1597, %v1728
        %v1765 = vadd.f32 %v1598, %v1733
        %v1766 = vadd.f32 %v1599, %v1738
        %v1767 = vadd.f32 %v1600, %v1743
        %v1768 = vadd.f32 %v1601, %v1748
        %v1769 = vadd.f32 %v1602, %v1753
        %v1770 = vadd.f32 %v1603, %v1758
        %v1771 = vld [vmem:[#allocation2] sm:$0xff]
        %v1772 = vld [vmem:[#allocation2 + $0x8] sm:$0xff]
        %v1773 = vld [vmem:[#allocation2 + $0x10] sm:$0xff]
        %v1774 = vld [vmem:[#allocation2 + $0x18] sm:$0xff]
        %v1775 = vld [vmem:[#allocation2 + $0x20] sm:$0xff]
        %v1776 = vld [vmem:[#allocation2 + $0x28] sm:$0xff]
        %v1777 = vld [vmem:[#allocation2 + $0x30] sm:$0xff]
        %v1778 = vld [vmem:[#allocation2 + $0x38] sm:$0xff]
        %v1779 = vld [vmem:[#allocation2 + $0x40] sm:$0xff]
        %v1780 = vld [vmem:[#allocation2 + $0x48] sm:$0x3f]
        %v1781 = vadd.f32 %v1771, %v1761
        %v1782 = vadd.f32 %v1772, %v1762
        %v1783 = vadd.f32 %v1773, %v1763
        %v1784 = vadd.f32 %v1774, %v1764
        %v1785 = vadd.f32 %v1775, %v1765
        %v1786 = vadd.f32 %v1776, %v1766
        %v1787 = vadd.f32 %v1777, %v1767
        %v1788 = vadd.f32 %v1778, %v1768
        %v1789 = vadd.f32 %v1779, %v1769
        %v1790 = vadd.f32 %v1780, %v1770
        %1791 = vst [vmem:[#allocation2] sm:$0xff] %v1781
        %1792 = vst [vmem:[#allocation2 + $0x8] sm:$0xff] %v1782
        %1793 = vst [vmem:[#allocation2 + $0x10] sm:$0xff] %v1783
        %1794 = vst [vmem:[#allocation2 + $0x18] sm:$0xff] %v1784
        %1795 = vst [vmem:[#allocation2 + $0x20] sm:$0xff] %v1785
        %1796 = vst [vmem:[#allocation2 + $0x28] sm:$0xff] %v1786
        %1797 = vst [vmem:[#allocation2 + $0x30] sm:$0xff] %v1787
        %1798 = vst [vmem:[#allocation2 + $0x38] sm:$0xff] %v1788
        %1799 = vst [vmem:[#allocation2 + $0x40] sm:$0xff] %v1789
        %1800 = vst [vmem:[#allocation2 + $0x48] sm:$0x3f] %v1790
        %p1801 = scmp.eq.s32.totalorder %s25, 2
        // Predicated region
        $region45: #{a_call__.2} parent=31 // pred_check
          %p1802 = pneg %p1801
        $region46: #{a_call__.2} parent=31 // pred_check_branch
          %1804 = sbr.rel (%p1802) target = $region48
        $region47: #{a_call__.2} parent=31 // pred_region
          %v1805 = vld [vmem:[#allocation2] sm:$0xff]
          %v1806 = vld [vmem:[#allocation2 + $0x8] sm:$0xff]
          %v1807 = vld [vmem:[#allocation2 + $0x10] sm:$0xff]
          %v1808 = vld [vmem:[#allocation2 + $0x18] sm:$0xff]
          %v1809 = vld [vmem:[#allocation2 + $0x20] sm:$0xff]
          %v1810 = vld [vmem:[#allocation2 + $0x28] sm:$0xff]
          %v1811 = vld [vmem:[#allocation2 + $0x30] sm:$0xff]
          %v1812 = vld [vmem:[#allocation2 + $0x38] sm:$0xff]
          %v1813 = vld [vmem:[#allocation2 + $0x40] sm:$0xff]
          %v1814 = vld [vmem:[#allocation2 + $0x48] sm:$0x3f]
          %v1815 = vld [vmem:[#allocation5] sm:$0x1]
          %v1817 = vlaneseq
          %v1818 = vshrl.u32 %v1817, 7
          %v1819 = vsub.s32 0, %v1818
          %v1820 = vrot.slane %v1815, %v1819
          %v1822 = vadd.f32 %v1805, %v1820
          %v1823 = vadd.f32 %v1806, %v1820
          %v1824 = vadd.f32 %v1807, %v1820
          %v1825 = vadd.f32 %v1808, %v1820
          %v1826 = vadd.f32 %v1809, %v1820
          %v1827 = vadd.f32 %v1810, %v1820
          %v1828 = vadd.f32 %v1811, %v1820
          %v1829 = vadd.f32 %v1812, %v1820
          %v1830 = vadd.f32 %v1813, %v1820
          %v1831 = vadd.f32 %v1814, %v1820
          %1832 = vst [vmem:[%s273] sm:$0xff] %v1822
          %1833 = vst [vmem:[%s273 + $0x8] sm:$0xff] %v1823
          %1834 = vst [vmem:[%s273 + $0x10] sm:$0xff] %v1824
          %1835 = vst [vmem:[%s273 + $0x18] sm:$0xff] %v1825
          %1836 = vst [vmem:[%s273 + $0x20] sm:$0xff] %v1826
          %1837 = vst [vmem:[%s273 + $0x28] sm:$0xff] %v1827
          %1838 = vst [vmem:[%s273 + $0x30] sm:$0xff] %v1828
          %1839 = vst [vmem:[%s273 + $0x38] sm:$0xff] %v1829
          %1840 = vst [vmem:[%s273 + $0x40] sm:$0xff] %v1830
          %1841 = vst [vmem:[%s273 + $0x48] sm:$0x3f] %v1831
        $region48: #{a_call__.2} parent=31 // pred_fallthru
          _
        %p1842 = scmp.lt.s32.totalorder %s23, 1
        %s1843 = scalar_select %p1842, %s23, 1
        %p1844 = scmp.lt.s32.totalorder %s24, 7
        %s1845 = scalar_select %p1844, %s24, 7
        %s1846 = smul.addr %s1845, 10
        %s1847 = smul.addr %s1843, 80
        %s1848 = sadd.s32 %s1846, %s1847
        %s1849 = smul.addr %s1848, 8
        %s1850 = scalar_lea.vmem %s3, %s1849
        // Predicated region
        $region49: #{a_call__.2} parent=31 // pred_check
          %p1851 = pneg %p134
        $region50: #{a_call__.2} parent=31 // pred_check_branch
          %1853 = sbr.rel (%p1851) target = $region52
        $region51: #{a_call__.2} parent=31 // pred_region
          _
        $region52: #{a_call__.2} parent=31 // pred_fallthru
          _
      $region32: #{a_call__.2} parent=5 // pred_fallthru
        _
      %p1854 = scmp.le.s32.totalorder 2, %s13
      // Predicated region
      $region53: #{a_call__.2} parent=5 // pred_check
        %p1855 = pneg %p1854
      $region54: #{a_call__.2} parent=5 // pred_check_branch
        %1857 = sbr.rel (%p1855) target = $region56
      $region55: #{a_call__.2} parent=5 // pred_region
        %s1858 = ssub.s32 %s13, 2
        // Predicated region
        $region57: #{a_call__.2} parent=55 // pred_check
          %p1859 = pneg %p140
        $region58: #{a_call__.2} parent=55 // pred_check_branch
          %1861 = sbr.rel (%p1859) target = $region60
        $region59: #{a_call__.2} parent=55 // pred_region
          %p1862 = scmp.lt.s32.totalorder %s26, 1
          %s1863 = scalar_select %p1862, %s26, 1
          %p1864 = scmp.lt.s32.totalorder %s27, 7
          %s1865 = scalar_select %p1864, %s27, 7
          %s1866 = smul.addr %s1865, 10
          %s1867 = smul.addr %s1863, 80
          %s1868 = sadd.s32 %s1866, %s1867
          %s1869 = smul.addr %s1868, 8
          %s1870 = scalar_lea.vmem %s3, %s1869
        $region60: #{a_call__.2} parent=55 // pred_fallthru
          _
      $region56: #{a_call__.2} parent=5 // pred_fallthru
        _
    $region6: #{a_call__.2} parent=1 // loop_footer
      %s17 = sadd.s32 1, %s13
    $region7: #{a_call__.2} parent=1 // loop_footer_branch
      %12 = sbr.rel target = $region3
    $region8: #{a_call__.2} parent=1 // loop_exit
      _
    %1871 = vsyncpa [#allocation4], 1
    %s1872 = scalar_lea.sflag [#allocation4], 1
    %1873 = vsyncpa %s1872, 1
    %1874 = vsyncpa [#allocation6], 1

// kernel: a_call__.3
$region0: #{a_call__.3}
  #allocation0 [shape = 'u32[]', space=smem, size = 0x4, offset = 0x4, fixed_abs, tag = 'smem constant byte address 0x4 - core index']
  #allocation1 [shape = 'u32[144,128]{1,0:T(1,128)}', space=vmem, size = 0x12000, scoped, tag = 'internal scratch']
  #allocation2 [shape = 'f32[286,128]{1,0:T(8,128)}', space=vmem, size = 0x24000, scoped, tag = 'scratch operand']
  %s0 = inlined_call_operand.vmem [shape: f32[2,18,324,8], index: 0, kind: input, shape index: {}]
  %s1 = inlined_call_operand.vmem [shape: f32[3,9,8,128], index: 1, kind: input, shape index: {}]
  %s2 = inlined_call_operand.vmem [shape: f32[1,128], index: 2, kind: input, shape index: {}]
  %s3 = inlined_call_operand.vmem [shape: f32[2,16,286,128], index: 3, kind: output, shape index: {}]
  %s4 = sld [smem:[#allocation0]]
  $region53: #{a_call__.3} parent=0
    _
  %s6 = ssub.s32 1, %s4
  %s7 = scalar_select 0, %s6, %s4
  loop: start=0, step=1, limit=98
  $region2: #{a_call__.3} parent=0 // loop_pre_header
    _
  $region3: #{a_call__.3} parent=0 // loop_header
    %s9 = sphi 0, %s13
    %p10 = scmp.ge.s32.totalorder %s9, 98
    %s16 = sphi 0, %s35
    %s17 = sphi 0, %s31
    %s18 = sphi 0, %s27
    %s19 = sphi 0, %s16
    %s20 = sphi 0, %s17
    %s21 = sphi 0, %s18
    %s22 = sphi 0, %s19
    %s23 = sphi 0, %s20
    %s24 = sphi 0, %s21
    %s42 = sphi 0, %s44
    %s45 = sphi 0, %s42
    %s46 = sphi 0, %s45
    %s62 = sphi 0, %s46
    %s68 = sphi 0, %s70
    %s71 = sphi 0, %s68
    %s72 = sphi 0, %s71
    %s88 = sphi 0, %s72
    %s92 = sphi 0, %s92
    %s94 = sphi 0, %s92
    %s95 = sphi 0, %s94
    %s109 = sphi 0, %s95
    %s117 = sphi 0, %s119
    %s120 = sphi 0, %s117
    %s121 = sphi 0, %s120
    %s137 = sphi 0, %s121
  $region4: #{a_call__.3} parent=0 // loop_header_branch
    %12 = sbr.rel (%p10) target = $region8
  $region5: #{a_call__.3} parent=0 // loop_body
    %s14 = ssub.s32 %s9, 1
    %s15 = ssub.s32 %s9, 2
    %s25 = sadd.s32 1, %s18
    %p26 = scmp.ge.s32.totalorder %s25, 3
    %s27 = scalar_select %p26, 0, %s25
    %s28 = sadd.s32 1, %s17
    %s29 = scalar_select %p26, %s28, %s17
    %p30 = scmp.ge.s32.totalorder %s29, 16
    %s31 = scalar_select %p30, 0, %s29
    %s32 = sadd.s32 1, %s16
    %s33 = scalar_select %p30, %s32, %s16
    %p34 = scmp.ge.s32.totalorder %s33, 2
    %s35 = scalar_select %p34, 0, %s33
    %s36 = sadd.s32 %s17, %s18
    %s37 = sadd.s32 %s31, %s27
    %s38 = ssub.s32 %s16, %s35
    %s39 = ssub.s32 %s36, %s37
    %s40 = sor.u32 %s38, %s39
    %p41 = scmp.eq.s32.totalorder %s40, 0
    %s43 = sadd.s32 %s42, 1
    %s44 = scalar_select %p41, %s42, %s43
    %p47 = pneg %p41
    %p48 = scmp.eq.s32.totalorder %s9, 95
    %p49 = por %p47, %p48
    %p50 = scmp.ne.s32.totalorder %s42, %s45
    %p51 = scmp.eq.s32.totalorder %s9, 0
    %p52 = por %p50, %p51
    %p53 = scmp.ne.s32.totalorder %s42, %s45
    %p54 = scmp.eq.s32.totalorder %s14, 95
    %p55 = por %p53, %p54
    %p56 = scmp.ne.s32.totalorder %s45, %s46
    %p57 = scmp.eq.s32.totalorder %s14, 0
    %p58 = por %p56, %p57
    %p59 = scmp.ne.s32.totalorder %s45, %s46
    %p60 = scmp.eq.s32.totalorder %s15, 95
    %p61 = por %p59, %p60
    %p63 = scmp.ne.s32.totalorder %s46, %s62
    %p64 = scmp.eq.s32.totalorder %s15, 0
    %p65 = por %p63, %p64
    %s66 = ssub.s32 %s18, %s27
    %p67 = scmp.eq.s32.totalorder %s66, 0
    %s69 = sadd.s32 %s68, 1
    %s70 = scalar_select %p67, %s68, %s69
    %p73 = pneg %p67
    %p74 = scmp.eq.s32.totalorder %s9, 95
    %p75 = por %p73, %p74
    %p76 = scmp.ne.s32.totalorder %s68, %s71
    %p77 = scmp.eq.s32.totalorder %s9, 0
    %p78 = por %p76, %p77
    %p79 = scmp.ne.s32.totalorder %s68, %s71
    %p80 = scmp.eq.s32.totalorder %s14, 95
    %p81 = por %p79, %p80
    %p82 = scmp.ne.s32.totalorder %s71, %s72
    %p83 = scmp.eq.s32.totalorder %s14, 0
    %p84 = por %p82, %p83
    %p85 = scmp.ne.s32.totalorder %s71, %s72
    %p86 = scmp.eq.s32.totalorder %s15, 95
    %p87 = por %p85, %p86
    %p89 = scmp.ne.s32.totalorder %s72, %s88
    %p90 = scmp.eq.s32.totalorder %s15, 0
    %p91 = por %p89, %p90
    %s93 = sadd.s32 %s92, 1
    %p96 = scmp.eq.s32.totalorder %s9, 95
    %p97 = scmp.ne.s32.totalorder %s92, %s94
    %p98 = scmp.eq.s32.totalorder %s9, 0
    %p99 = por %p97, %p98
    %p100 = scmp.ne.s32.totalorder %s92, %s94
    %p101 = scmp.eq.s32.totalorder %s14, 95
    %p102 = por %p100, %p101
    %p103 = scmp.ne.s32.totalorder %s94, %s95
    %p104 = scmp.eq.s32.totalorder %s14, 0
    %p105 = por %p103, %p104
    %p106 = scmp.ne.s32.totalorder %s94, %s95
    %p107 = scmp.eq.s32.totalorder %s15, 95
    %p108 = por %p106, %p107
    %p110 = scmp.ne.s32.totalorder %s95, %s109
    %p111 = scmp.eq.s32.totalorder %s15, 0
    %p112 = por %p110, %p111
    %s113 = ssub.s32 %s16, %s35
    %s114 = ssub.s32 %s17, %s31
    %s115 = sor.u32 %s113, %s114
    %p116 = scmp.eq.s32.totalorder %s115, 0
    %s118 = sadd.s32 %s117, 1
    %s119 = scalar_select %p116, %s117, %s118
    %p122 = pneg %p116
    %p123 = scmp.eq.s32.totalorder %s9, 95
    %p124 = por %p122, %p123
    %p125 = scmp.ne.s32.totalorder %s117, %s120
    %p126 = scmp.eq.s32.totalorder %s9, 0
    %p127 = por %p125, %p126
    %p128 = scmp.ne.s32.totalorder %s117, %s120
    %p129 = scmp.eq.s32.totalorder %s14, 95
    %p130 = por %p128, %p129
    %p131 = scmp.ne.s32.totalorder %s120, %s121
    %p132 = scmp.eq.s32.totalorder %s14, 0
    %p133 = por %p131, %p132
    %p134 = scmp.ne.s32.totalorder %s120, %s121
    %p135 = scmp.eq.s32.totalorder %s15, 95
    %p136 = por %p134, %p135
    %p138 = scmp.ne.s32.totalorder %s121, %s137
    %p139 = scmp.eq.s32.totalorder %s15, 0
    %p140 = por %p138, %p139
    %p141 = scmp.le.s32.totalorder 1, %s9
    %p142 = scmp.lt.s32.totalorder %s9, 97
    %p143 = pnand %p141, %p142
    %p144 = pneg %p143
    // Predicated region
    $region9: #{a_call__.3} parent=5 // pred_check
      _
    $region10: #{a_call__.3} parent=5 // pred_check_branch
      %146 = sbr.rel (%p143) target = $region12
    $region11: #{a_call__.3} parent=5 // pred_region
      %s147 = ssub.s32 %s9, 1
      // Predicated region
      $region13: #{a_call__.3} parent=11 // pred_check
        %p148 = pneg %p105
      $region14: #{a_call__.3} parent=11 // pred_check_branch
        %150 = sbr.rel (%p148) target = $region16
      $region15: #{a_call__.3} parent=11 // pred_region
        _
      $region16: #{a_call__.3} parent=11 // pred_fallthru
        _
    $region12: #{a_call__.3} parent=5 // pred_fallthru
      _
    %p151 = scmp.lt.s32.totalorder %s9, 96
    // Predicated region
    $region17: #{a_call__.3} parent=5 // pred_check
      %p152 = pneg %p151
    $region18: #{a_call__.3} parent=5 // pred_check_branch
      %154 = sbr.rel (%p152) target = $region20
    $region19: #{a_call__.3} parent=5 // pred_region
      // Predicated region
      $region21: #{a_call__.3} parent=19 // pred_check
        %p155 = pneg %p52
      $region22: #{a_call__.3} parent=19 // pred_check_branch
        %157 = sbr.rel (%p155) target = $region24
      $region23: #{a_call__.3} parent=19 // pred_region
        %s158 = sadd.s32 %s17, %s18
        %p159 = scmp.lt.s32.totalorder %s16, 1
        %s160 = scalar_select %p159, %s16, 1
        %p161 = scmp.lt.s32.totalorder %s158, 17
        %s162 = scalar_select %p161, %s158, 17
        %s163 = smul.addr %s162, 41
        %s164 = smul.addr %s160, 738
        %s165 = sadd.s32 %s163, %s164
        %s166 = smul.addr %s165, 8
        %s167 = scalar_lea.vmem %s0, %s166
        %s168 = sadd.s32 %s17, %s18
      $region24: #{a_call__.3} parent=19 // pred_fallthru
        _
      // Predicated region
      $region25: #{a_call__.3} parent=19 // pred_check
        %p169 = pneg %p78
      $region26: #{a_call__.3} parent=19 // pred_check_branch
        %171 = sbr.rel (%p169) target = $region28
      $region27: #{a_call__.3} parent=19 // pred_region
        %p172 = scmp.lt.s32.totalorder %s18, 2
        %s173 = scalar_select %p172, %s18, 2
        %s174 = smul.addr %s173, 9
        %s175 = smul.addr %s174, 8
        %s176 = scalar_lea.vmem %s1, %s175
      $region28: #{a_call__.3} parent=19 // pred_fallthru
        _
    $region20: #{a_call__.3} parent=5 // pred_fallthru
      _
    %p177 = scmp.le.s32.totalorder 1, %s9
    %p178 = scmp.lt.s32.totalorder %s9, 97
    %p179 = pnand %p177, %p178
    %p180 = pneg %p179
    // Predicated region
    $region29: #{a_call__.3} parent=5 // pred_check
      _
    $region30: #{a_call__.3} parent=5 // pred_check_branch
      %182 = sbr.rel (%p179) target = $region32
    $region31: #{a_call__.3} parent=5 // pred_region
      %s183 = ssub.s32 %s9, 1
      %s184 = sadd.s32 %s20, %s21
      %p185 = scmp.lt.s32.totalorder %s19, 1
      %s186 = scalar_select %p185, %s19, 1
      %p187 = scmp.lt.s32.totalorder %s184, 17
      %s188 = scalar_select %p187, %s184, 17
      %s189 = smul.addr %s188, 41
      %s190 = smul.addr %s186, 738
      %s191 = sadd.s32 %s189, %s190
      %s192 = smul.addr %s191, 8
      %s193 = scalar_lea.vmem %s0, %s192
      %p194 = pneg %p58
      %p195 = pneg %p55
      %p196 = scmp.lt.s32.totalorder %s21, 2
      %s197 = scalar_select %p196, %s21, 2
      %s198 = smul.addr %s197, 9
      %s199 = smul.addr %s198, 8
      %s200 = scalar_lea.vmem %s1, %s199
      %p201 = pneg %p84
      %p202 = pneg %p81
      %p203 = pneg %p105
      %p204 = pneg %p102
      %p205 = pneg %p133
      %p206 = pneg %p130
      %p207 = scmp.lt.s32.totalorder %s19, 1
      %s208 = scalar_select %p207, %s19, 1
      %p209 = scmp.lt.s32.totalorder %s20, 15
      %s210 = scalar_select %p209, %s20, 15
      %s211 = smul.addr %s210, 36
      %s212 = smul.addr %s208, 576
      %s213 = sadd.s32 %s211, %s212
      %s214 = smul.addr %s213, 8
      %s215 = scalar_lea.vmem %s3, %s214
      %s216 = sadd.s32 %s20, %s21
      %p217 = scmp.lt.s32.totalorder %s19, 1
      %s218 = scalar_select %p217, %s19, 1
      %p219 = scmp.lt.s32.totalorder %s216, 17
      %s220 = scalar_select %p219, %s216, 17
      %s221 = smul.addr %s220, 41
      %s222 = smul.addr %s218, 738
      %s223 = sadd.s32 %s221, %s222
      %s224 = smul.addr %s223, 8
      %s225 = scalar_lea.vmem %s0, %s224
      %s226 = sadd.s32 %s20, %s21
      %p227 = scmp.lt.s32.totalorder %s21, 2
      %s228 = scalar_select %p227, %s21, 2
      %s229 = smul.addr %s228, 9
      %s230 = smul.addr %s229, 8
      %s231 = scalar_lea.vmem %s1, %s230
      %p232 = scmp.lt.s32.totalorder %s19, 1
      %s233 = scalar_select %p232, %s19, 1
      %p234 = scmp.lt.s32.totalorder %s20, 15
      %s235 = scalar_select %p234, %s20, 15
      %s236 = smul.addr %s235, 36
      %s237 = smul.addr %s233, 576
      %s238 = sadd.s32 %s236, %s237
      %s239 = smul.addr %s238, 8
      %s240 = scalar_lea.vmem %s3, %s239
      %p241 = scmp.eq.s32.totalorder %s21, 0
      // Predicated region
      $region33: #{a_call__.3} parent=31 // pred_check
        %p242 = pneg %p241
      $region34: #{a_call__.3} parent=31 // pred_check_branch
        %244 = sbr.rel (%p242) target = $region36
      $region35: #{a_call__.3} parent=31 // pred_region
        %245 = vst [vmem:[#allocation2] sm:$0xff] 0.0
        %246 = vst [vmem:[#allocation2 + $0x8] sm:$0xff] 0.0
        %247 = vst [vmem:[#allocation2 + $0x10] sm:$0xff] 0.0
        %248 = vst [vmem:[#allocation2 + $0x18] sm:$0xff] 0.0
        %249 = vst [vmem:[#allocation2 + $0x20] sm:$0xff] 0.0
        %250 = vst [vmem:[#allocation2 + $0x28] sm:$0xff] 0.0
        %251 = vst [vmem:[#allocation2 + $0x30] sm:$0xff] 0.0
        %252 = vst [vmem:[#allocation2 + $0x38] sm:$0xff] 0.0
        %253 = vst [vmem:[#allocation2 + $0x40] sm:$0xff] 0.0
        %254 = vst [vmem:[#allocation2 + $0x48] sm:$0xff] 0.0
        %255 = vst [vmem:[#allocation2 + $0x50] sm:$0xff] 0.0
        %256 = vst [vmem:[#allocation2 + $0x58] sm:$0xff] 0.0
        %257 = vst [vmem:[#allocation2 + $0x60] sm:$0xff] 0.0
        %258 = vst [vmem:[#allocation2 + $0x68] sm:$0xff] 0.0
        %259 = vst [vmem:[#allocation2 + $0x70] sm:$0xff] 0.0
        %260 = vst [vmem:[#allocation2 + $0x78] sm:$0xff] 0.0
        %261 = vst [vmem:[#allocation2 + $0x80] sm:$0xff] 0.0
        %262 = vst [vmem:[#allocation2 + $0x88] sm:$0xff] 0.0
        %263 = vst [vmem:[#allocation2 + $0x90] sm:$0xff] 0.0
        %264 = vst [vmem:[#allocation2 + $0x98] sm:$0xff] 0.0
        %265 = vst [vmem:[#allocation2 + $0xa0] sm:$0xff] 0.0
        %266 = vst [vmem:[#allocation2 + $0xa8] sm:$0xff] 0.0
        %267 = vst [vmem:[#allocation2 + $0xb0] sm:$0xff] 0.0
        %268 = vst [vmem:[#allocation2 + $0xb8] sm:$0xff] 0.0
        %269 = vst [vmem:[#allocation2 + $0xc0] sm:$0xff] 0.0
        %270 = vst [vmem:[#allocation2 + $0xc8] sm:$0xff] 0.0
        %271 = vst [vmem:[#allocation2 + $0xd0] sm:$0xff] 0.0
        %272 = vst [vmem:[#allocation2 + $0xd8] sm:$0xff] 0.0
        %273 = vst [vmem:[#allocation2 + $0xe0] sm:$0xff] 0.0
        %274 = vst [vmem:[#allocation2 + $0xe8] sm:$0xff] 0.0
        %275 = vst [vmem:[#allocation2 + $0xf0] sm:$0xff] 0.0
        %276 = vst [vmem:[#allocation2 + $0xf8] sm:$0xff] 0.0
        %277 = vst [vmem:[#allocation2 + $0x100] sm:$0xff] 0.0
        %278 = vst [vmem:[#allocation2 + $0x108] sm:$0xff] 0.0
        %279 = vst [vmem:[#allocation2 + $0x110] sm:$0xff] 0.0
        %280 = vst [vmem:[#allocation2 + $0x118] sm:$0x3f] 0.0
      $region36: #{a_call__.3} parent=31 // pred_fallthru
        _
      %v281 = vld [vmem:[%s225] sm:$0xff]
      %v282 = vld [vmem:[%s225 + $0x8] sm:$0xff]
      %v283 = vld [vmem:[%s225 + $0x10] sm:$0xff]
      %v284 = vld [vmem:[%s225 + $0x18] sm:$0xff]
      %v285 = vld [vmem:[%s225 + $0x20] sm:$0xff]
      %v286 = vld [vmem:[%s225 + $0x28] sm:$0xff]
      %v287 = vld [vmem:[%s225 + $0x30] sm:$0xff]
      %v288 = vld [vmem:[%s225 + $0x38] sm:$0xff]
      %v289 = vld [vmem:[%s225 + $0x40] sm:$0xff]
      %v290 = vld [vmem:[%s225 + $0x48] sm:$0xff]
      %v291 = vld [vmem:[%s225 + $0x50] sm:$0xff]
      %v292 = vld [vmem:[%s225 + $0x58] sm:$0xff]
      %v293 = vld [vmem:[%s225 + $0x60] sm:$0xff]
      %v294 = vld [vmem:[%s225 + $0x68] sm:$0xff]
      %v295 = vld [vmem:[%s225 + $0x70] sm:$0xff]
      %v296 = vld [vmem:[%s225 + $0x78] sm:$0xff]
      %v297 = vld [vmem:[%s225 + $0x80] sm:$0xff]
      %v298 = vld [vmem:[%s225 + $0x88] sm:$0xff]
      %v299 = vld [vmem:[%s225 + $0x90] sm:$0xff]
      %v300 = vld [vmem:[%s225 + $0x98] sm:$0xff]
      %v301 = vld [vmem:[%s225 + $0xa0] sm:$0xff]
      %v302 = vld [vmem:[%s225 + $0xa8] sm:$0xff]
      %v303 = vld [vmem:[%s225 + $0xb0] sm:$0xff]
      %v304 = vld [vmem:[%s225 + $0xb8] sm:$0xff]
      %v305 = vld [vmem:[%s225 + $0xc0] sm:$0xff]
      %v306 = vld [vmem:[%s225 + $0xc8] sm:$0xff]
      %v307 = vld [vmem:[%s225 + $0xd0] sm:$0xff]
      %v308 = vld [vmem:[%s225 + $0xd8] sm:$0xff]
      %v309 = vld [vmem:[%s225 + $0xe0] sm:$0xff]
      %v310 = vld [vmem:[%s225 + $0xe8] sm:$0xff]
      %v311 = vld [vmem:[%s225 + $0xf0] sm:$0xff]
      %v312 = vld [vmem:[%s225 + $0xf8] sm:$0xff]
      %v313 = vld [vmem:[%s225 + $0x100] sm:$0xff]
      %v314 = vld [vmem:[%s225 + $0x108] sm:$0xff]
      %v315 = vld [vmem:[%s225 + $0x110] sm:$0xff]
      %v316 = vld [vmem:[%s225 + $0x118] sm:$0x3f]
      %v317 = vld [vmem:[%s231] sm:$0xff]
      %v318 = vld [vmem:[%s225 + $0x1] sm:$0xff]
      %v319 = vld [vmem:[%s225 + $0x9] sm:$0xff]
      %v320 = vld [vmem:[%s225 + $0x11] sm:$0xff]
      %v321 = vld [vmem:[%s225 + $0x19] sm:$0xff]
      %v322 = vld [vmem:[%s225 + $0x21] sm:$0xff]
      %v323 = vld [vmem:[%s225 + $0x29] sm:$0xff]
      %v324 = vld [vmem:[%s225 + $0x31] sm:$0xff]
      %v325 = vld [vmem:[%s225 + $0x39] sm:$0xff]
      %v326 = vld [vmem:[%s225 + $0x41] sm:$0xff]
      %v327 = vld [vmem:[%s225 + $0x49] sm:$0xff]
      %v328 = vld [vmem:[%s225 + $0x51] sm:$0xff]
      %v329 = vld [vmem:[%s225 + $0x59] sm:$0xff]
      %v330 = vld [vmem:[%s225 + $0x61] sm:$0xff]
      %v331 = vld [vmem:[%s225 + $0x69] sm:$0xff]
      %v332 = vld [vmem:[%s225 + $0x71] sm:$0xff]
      %v333 = vld [vmem:[%s225 + $0x79] sm:$0xff]
      %v334 = vld [vmem:[%s225 + $0x81] sm:$0xff]
      %v335 = vld [vmem:[%s225 + $0x89] sm:$0xff]
      %v336 = vld [vmem:[%s225 + $0x91] sm:$0xff]
      %v337 = vld [vmem:[%s225 + $0x99] sm:$0xff]
      %v338 = vld [vmem:[%s225 + $0xa1] sm:$0xff]
      %v339 = vld [vmem:[%s225 + $0xa9] sm:$0xff]
      %v340 = vld [vmem:[%s225 + $0xb1] sm:$0xff]
      %v341 = vld [vmem:[%s225 + $0xb9] sm:$0xff]
      %v342 = vld [vmem:[%s225 + $0xc1] sm:$0xff]
      %v343 = vld [vmem:[%s225 + $0xc9] sm:$0xff]
      %v344 = vld [vmem:[%s225 + $0xd1] sm:$0xff]
      %v345 = vld [vmem:[%s225 + $0xd9] sm:$0xff]
      %v346 = vld [vmem:[%s225 + $0xe1] sm:$0xff]
      %v347 = vld [vmem:[%s225 + $0xe9] sm:$0xff]
      %v348 = vld [vmem:[%s225 + $0xf1] sm:$0xff]
      %v349 = vld [vmem:[%s225 + $0xf9] sm:$0xff]
      %v350 = vld [vmem:[%s225 + $0x101] sm:$0xff]
      %v351 = vld [vmem:[%s225 + $0x109] sm:$0xff]
      %v352 = vld [vmem:[%s225 + $0x111] sm:$0xff]
      %v353 = vld [vmem:[%s225 + $0x119] sm:$0x3f]
      %s354 = scalar_lea.vmem %s231, 8
      %v355 = vld [vmem:[%s354] sm:$0xff]
      %vm356 = vcmask 64512
      %v358 = vsel %vm356, %v318, 0
      %v361 = vsel %vm356, %v319, 0
      %v364 = vsel %vm356, %v320, 0
      %v367 = vsel %vm356, %v321, 0
      %v370 = vsel %vm356, %v322, 0
      %v373 = vsel %vm356, %v323, 0
      %v376 = vsel %vm356, %v324, 0
      %v379 = vsel %vm356, %v325, 0
      %v382 = vsel %vm356, %v326, 0
      %v385 = vsel %vm356, %v327, 0
      %v388 = vsel %vm356, %v328, 0
      %v391 = vsel %vm356, %v329, 0
      %v394 = vsel %vm356, %v330, 0
      %v397 = vsel %vm356, %v331, 0
      %v400 = vsel %vm356, %v332, 0
      %v403 = vsel %vm356, %v333, 0
      %v406 = vsel %vm356, %v334, 0
      %v409 = vsel %vm356, %v335, 0
      %v412 = vsel %vm356, %v336, 0
      %v415 = vsel %vm356, %v337, 0
      %v418 = vsel %vm356, %v338, 0
      %v421 = vsel %vm356, %v339, 0
      %v424 = vsel %vm356, %v340, 0
      %v427 = vsel %vm356, %v341, 0
      %v430 = vsel %vm356, %v342, 0
      %v433 = vsel %vm356, %v343, 0
      %v436 = vsel %vm356, %v344, 0
      %v439 = vsel %vm356, %v345, 0
      %v442 = vsel %vm356, %v346, 0
      %v445 = vsel %vm356, %v347, 0
      %v448 = vsel %vm356, %v348, 0
      %v451 = vsel %vm356, %v349, 0
      %v454 = vsel %vm356, %v350, 0
      %v457 = vsel %vm356, %v351, 0
      %v460 = vsel %vm356, %v352, 0
      %v463 = vsel %vm356, %v353, 0
      %465 = vmatprep.subr.mxu0 0.0
      %466 = vmatpush1.msra.mxu0 %v355
      %467 = vmatprep.subr.mxu0 0.0
      %468 = vmatpush1.msra.mxu0 0.0
      %469 = vmatprep.subr.mxu0 0.0
      %470 = vmatpush1.msra.mxu0 0.0
      %471 = vmatprep.subr.mxu0 0.0
      %472 = vmatpush1.msra.mxu0 0.0
      %473 = vmatprep.subr.mxu0 0.0
      %474 = vmatpush1.msra.mxu0 0.0
      %475 = vmatprep.subr.mxu0 0.0
      %476 = vmatpush1.msra.mxu0 0.0
      %477 = vmatprep.subr.mxu0 0.0
      %478 = vmatpush1.msra.mxu0 0.0
      %479 = vmatprep.subr.mxu0 0.0
      %480 = vmatpush1.msra.mxu0 0.0
      %481 = vmatprep.subr.mxu0 0.0
      %482 = vmatpush1.msra.mxu0 0.0
      %483 = vmatprep.subr.mxu0 0.0
      %484 = vmatpush1.msra.mxu0 0.0
      %485 = vmatprep.subr.mxu0 0.0
      %486 = vmatpush1.msra.mxu0 0.0
      %487 = vmatprep.subr.mxu0 0.0
      %488 = vmatpush1.msra.mxu0 0.0
      %489 = vmatprep.subr.mxu0 0.0
      %490 = vmatpush1.msra.mxu0 0.0
      %491 = vmatprep.subr.mxu0 0.0
      %492 = vmatpush1.msra.mxu0 0.0
      %493 = vmatprep.subr.mxu0 0.0
      %494 = vmatpush1.msra.mxu0 0.0
      %495 = vmatprep.subr.mxu0 0.0
      %496 = vmatpush1.msra.mxu0 0.0
      %497 = vmatprep.subr.mxu0 0.0
      %498 = vmatpush1.msra.mxu0 0.0
      %499 = vmatprep.subr.mxu0 0.0
      %500 = vmatpush1.msra.mxu0 0.0
      %501 = vmatprep.subr.mxu0 0.0
      %502 = vmatpush1.msra.mxu0 0.0
      %503 = vmatprep.subr.mxu0 0.0
      %504 = vmatpush1.msra.mxu0 0.0
      %505 = vmatprep.subr.mxu0 0.0
      %506 = vmatpush1.msra.mxu0 0.0
      %507 = vmatprep.subr.mxu0 0.0
      %508 = vmatpush1.msra.mxu0 0.0
      %509 = vmatprep.subr.mxu0 0.0
      %510 = vmatpush1.msra.mxu0 0.0
      %511 = vmatprep.subr.mxu0 0.0
      %512 = vmatpush1.msra.mxu0 0.0
      %513 = vmatprep.subr.mxu0 0.0
      %514 = vmatpush1.msra.mxu0 0.0
      %515 = vmatprep.subr.mxu0 0.0
      %516 = vmatpush1.msra.mxu0 0.0
      %517 = vmatprep.subr.mxu0 0.0
      %518 = vmatpush1.msra.mxu0 0.0
      %519 = vmatprep.subr.mxu0 0.0
      %520 = vmatpush1.msra.mxu0 0.0
      %521 = vmatprep.subr.mxu0 0.0
      %522 = vmatpush1.msra.mxu0 0.0
      %523 = vmatprep.subr.mxu0 0.0
      %524 = vmatpush1.msra.mxu0 0.0
      %525 = vmatprep.subr.mxu0 0.0
      %526 = vmatpush1.msra.mxu0 0.0
      %527 = vmatprep.subr.mxu0 0.0
      %528 = vmatpush1.msra.mxu0 0.0
      %529 = vmatprep.mubr.f32.mxu0 0.0
      %530 = vmatmul.mubr.f32.gmra.mrb[0].mxu0 %v358
      %v531 = vpop.f32.mrb[0].mxu0
      %v532 = vadd.f32 0.0, %v531
      %v533 = vpop.f32.mrb[0].mxu0
      %534 = vmatprep.mubr.f32.mxu0 0.0
      %535 = vmatmul.mubr.f32.gmra.mrb[0].mxu0 %v361
      %v536 = vpop.f32.mrb[0].mxu0
      %v537 = vadd.f32 0.0, %v536
      %v538 = vpop.f32.mrb[0].mxu0
      %539 = vmatprep.mubr.f32.mxu0 0.0
      %540 = vmatmul.mubr.f32.gmra.mrb[0].mxu0 %v364
      %v541 = vpop.f32.mrb[0].mxu0
      %v542 = vadd.f32 0.0, %v541
      %v543 = vpop.f32.mrb[0].mxu0
      %544 = vmatprep.mubr.f32.mxu0 0.0
      %545 = vmatmul.mubr.f32.gmra.mrb[0].mxu0 %v367
      %v546 = vpop.f32.mrb[0].mxu0
      %v547 = vadd.f32 0.0, %v546
      %v548 = vpop.f32.mrb[0].mxu0
      %549 = vmatprep.mubr.f32.mxu0 0.0
      %550 = vmatmul.mubr.f32.gmra.mrb[0].mxu0 %v370
      %v551 = vpop.f32.mrb[0].mxu0
      %v552 = vadd.f32 0.0, %v551
      %v553 = vpop.f32.mrb[0].mxu0
      %554 = vmatprep.mubr.f32.mxu0 0.0
      %555 = vmatmul.mubr.f32.gmra.mrb[0].mxu0 %v373
      %v556 = vpop.f32.mrb[0].mxu0
      %v557 = vadd.f32 0.0, %v556
      %v558 = vpop.f32.mrb[0].mxu0
      %559 = vmatprep.mubr.f32.mxu0 0.0
      %560 = vmatmul.mubr.f32.gmra.mrb[0].mxu0 %v376
      %v561 = vpop.f32.mrb[0].mxu0
      %v562 = vadd.f32 0.0, %v561
      %v563 = vpop.f32.mrb[0].mxu0
      %564 = vmatprep.mubr.f32.mxu0 0.0
      %565 = vmatmul.mubr.f32.gmra.mrb[0].mxu0 %v379
      %v566 = vpop.f32.mrb[0].mxu0
      %v567 = vadd.f32 0.0, %v566
      %v568 = vpop.f32.mrb[0].mxu0
      %569 = vmatprep.mubr.f32.mxu0 0.0
      %570 = vmatmul.mubr.f32.gmra.mrb[0].mxu0 %v382
      %v571 = vpop.f32.mrb[0].mxu0
      %v572 = vadd.f32 0.0, %v571
      %v573 = vpop.f32.mrb[0].mxu0
      %574 = vmatprep.mubr.f32.mxu0 0.0
      %575 = vmatmul.mubr.f32.gmra.mrb[0].mxu0 %v385
      %v576 = vpop.f32.mrb[0].mxu0
      %v577 = vadd.f32 0.0, %v576
      %v578 = vpop.f32.mrb[0].mxu0
      %579 = vmatprep.mubr.f32.mxu0 0.0
      %580 = vmatmul.mubr.f32.gmra.mrb[0].mxu0 %v388
      %v581 = vpop.f32.mrb[0].mxu0
      %v582 = vadd.f32 0.0, %v581
      %v583 = vpop.f32.mrb[0].mxu0
      %584 = vmatprep.mubr.f32.mxu0 0.0
      %585 = vmatmul.mubr.f32.gmra.mrb[0].mxu0 %v391
      %v586 = vpop.f32.mrb[0].mxu0
      %v587 = vadd.f32 0.0, %v586
      %v588 = vpop.f32.mrb[0].mxu0
      %589 = vmatprep.mubr.f32.mxu0 0.0
      %590 = vmatmul.mubr.f32.gmra.mrb[0].mxu0 %v394
      %v591 = vpop.f32.mrb[0].mxu0
      %v592 = vadd.f32 0.0, %v591
      %v593 = vpop.f32.mrb[0].mxu0
      %594 = vmatprep.mubr.f32.mxu0 0.0
      %595 = vmatmul.mubr.f32.gmra.mrb[0].mxu0 %v397
      %v596 = vpop.f32.mrb[0].mxu0
      %v597 = vadd.f32 0.0, %v596
      %v598 = vpop.f32.mrb[0].mxu0
      %599 = vmatprep.mubr.f32.mxu0 0.0
      %600 = vmatmul.mubr.f32.gmra.mrb[0].mxu0 %v400
      %v601 = vpop.f32.mrb[0].mxu0
      %v602 = vadd.f32 0.0, %v601
      %v603 = vpop.f32.mrb[0].mxu0
      %604 = vmatprep.mubr.f32.mxu0 0.0
      %605 = vmatmul.mubr.f32.gmra.mrb[0].mxu0 %v403
      %v606 = vpop.f32.mrb[0].mxu0
      %v607 = vadd.f32 0.0, %v606
      %v608 = vpop.f32.mrb[0].mxu0
      %609 = vmatprep.mubr.f32.mxu0 0.0
      %610 = vmatmul.mubr.f32.gmra.mrb[0].mxu0 %v406
      %v611 = vpop.f32.mrb[0].mxu0
      %v612 = vadd.f32 0.0, %v611
      %v613 = vpop.f32.mrb[0].mxu0
      %614 = vmatprep.mubr.f32.mxu0 0.0
      %615 = vmatmul.mubr.f32.gmra.mrb[0].mxu0 %v409
      %v616 = vpop.f32.mrb[0].mxu0
      %v617 = vadd.f32 0.0, %v616
      %v618 = vpop.f32.mrb[0].mxu0
      %619 = vmatprep.mubr.f32.mxu0 0.0
      %620 = vmatmul.mubr.f32.gmra.mrb[0].mxu0 %v412
      %v621 = vpop.f32.mrb[0].mxu0
      %v622 = vadd.f32 0.0, %v621
      %v623 = vpop.f32.mrb[0].mxu0
      %624 = vmatprep.mubr.f32.mxu0 0.0
      %625 = vmatmul.mubr.f32.gmra.mrb[0].mxu0 %v415
      %v626 = vpop.f32.mrb[0].mxu0
      %v627 = vadd.f32 0.0, %v626
      %v628 = vpop.f32.mrb[0].mxu0
      %629 = vmatprep.mubr.f32.mxu0 0.0
      %630 = vmatmul.mubr.f32.gmra.mrb[0].mxu0 %v418
      %v631 = vpop.f32.mrb[0].mxu0
      %v632 = vadd.f32 0.0, %v631
      %v633 = vpop.f32.mrb[0].mxu0
      %634 = vmatprep.mubr.f32.mxu0 0.0
      %635 = vmatmul.mubr.f32.gmra.mrb[0].mxu0 %v421
      %v636 = vpop.f32.mrb[0].mxu0
      %v637 = vadd.f32 0.0, %v636
      %v638 = vpop.f32.mrb[0].mxu0
      %639 = vmatprep.mubr.f32.mxu0 0.0
      %640 = vmatmul.mubr.f32.gmra.mrb[0].mxu0 %v424
      %v641 = vpop.f32.mrb[0].mxu0
      %v642 = vadd.f32 0.0, %v641
      %v643 = vpop.f32.mrb[0].mxu0
      %644 = vmatprep.mubr.f32.mxu0 0.0
      %645 = vmatmul.mubr.f32.gmra.mrb[0].mxu0 %v427
      %v646 = vpop.f32.mrb[0].mxu0
      %v647 = vadd.f32 0.0, %v646
      %v648 = vpop.f32.mrb[0].mxu0
      %649 = vmatprep.mubr.f32.mxu0 0.0
      %650 = vmatmul.mubr.f32.gmra.mrb[0].mxu0 %v430
      %v651 = vpop.f32.mrb[0].mxu0
      %v652 = vadd.f32 0.0, %v651
      %v653 = vpop.f32.mrb[0].mxu0
      %654 = vmatprep.mubr.f32.mxu0 0.0
      %655 = vmatmul.mubr.f32.gmra.mrb[0].mxu0 %v433
      %v656 = vpop.f32.mrb[0].mxu0
      %v657 = vadd.f32 0.0, %v656
      %v658 = vpop.f32.mrb[0].mxu0
      %659 = vmatprep.mubr.f32.mxu0 0.0
      %660 = vmatmul.mubr.f32.gmra.mrb[0].mxu0 %v436
      %v661 = vpop.f32.mrb[0].mxu0
      %v662 = vadd.f32 0.0, %v661
      %v663 = vpop.f32.mrb[0].mxu0
      %664 = vmatprep.mubr.f32.mxu0 0.0
      %665 = vmatmul.mubr.f32.gmra.mrb[0].mxu0 %v439
      %v666 = vpop.f32.mrb[0].mxu0
      %v667 = vadd.f32 0.0, %v666
      %v668 = vpop.f32.mrb[0].mxu0
      %669 = vmatprep.mubr.f32.mxu0 0.0
      %670 = vmatmul.mubr.f32.gmra.mrb[0].mxu0 %v442
      %v671 = vpop.f32.mrb[0].mxu0
      %v672 = vadd.f32 0.0, %v671
      %v673 = vpop.f32.mrb[0].mxu0
      %674 = vmatprep.mubr.f32.mxu0 0.0
      %675 = vmatmul.mubr.f32.gmra.mrb[0].mxu0 %v445
      %v676 = vpop.f32.mrb[0].mxu0
      %v677 = vadd.f32 0.0, %v676
      %v678 = vpop.f32.mrb[0].mxu0
      %679 = vmatprep.mubr.f32.mxu0 0.0
      %680 = vmatmul.mubr.f32.gmra.mrb[0].mxu0 %v448
      %v681 = vpop.f32.mrb[0].mxu0
      %v682 = vadd.f32 0.0, %v681
      %v683 = vpop.f32.mrb[0].mxu0
      %684 = vmatprep.mubr.f32.mxu0 0.0
      %685 = vmatmul.mubr.f32.gmra.mrb[0].mxu0 %v451
      %v686 = vpop.f32.mrb[0].mxu0
      %v687 = vadd.f32 0.0, %v686
      %v688 = vpop.f32.mrb[0].mxu0
      %689 = vmatprep.mubr.f32.mxu0 0.0
      %690 = vmatmul.mubr.f32.gmra.mrb[0].mxu0 %v454
      %v691 = vpop.f32.mrb[0].mxu0
      %v692 = vadd.f32 0.0, %v691
      %v693 = vpop.f32.mrb[0].mxu0
      %694 = vmatprep.mubr.f32.mxu0 0.0
      %695 = vmatmul.mubr.f32.gmra.mrb[0].mxu0 %v457
      %v696 = vpop.f32.mrb[0].mxu0
      %v697 = vadd.f32 0.0, %v696
      %v698 = vpop.f32.mrb[0].mxu0
      %699 = vmatprep.mubr.f32.mxu0 0.0
      %700 = vmatmul.mubr.f32.gmra.mrb[0].mxu0 %v460
      %v701 = vpop.f32.mrb[0].mxu0
      %v702 = vadd.f32 0.0, %v701
      %v703 = vpop.f32.mrb[0].mxu0
      %704 = vmatprep.mubr.f32.mxu0 0.0
      %705 = vmatmul.mubr.f32.gmra.mrb[0].mxu0 %v463
      %v706 = vpop.f32.mrb[0].mxu0
      %v707 = vadd.f32 0.0, %v706
      %v708 = vpop.f32.mrb[0].mxu0
      %709 = vdwg.mxu0
      %v711 = vsel %vm356, %v281, 0
      %v714 = vsel %vm356, %v282, 0
      %v717 = vsel %vm356, %v283, 0
      %v720 = vsel %vm356, %v284, 0
      %v723 = vsel %vm356, %v285, 0
      %v726 = vsel %vm356, %v286, 0
      %v729 = vsel %vm356, %v287, 0
      %v732 = vsel %vm356, %v288, 0
      %v735 = vsel %vm356, %v289, 0
      %v738 = vsel %vm356, %v290, 0
      %v741 = vsel %vm356, %v291, 0
      %v744 = vsel %vm356, %v292, 0
      %v747 = vsel %vm356, %v293, 0
      %v750 = vsel %vm356, %v294, 0
      %v753 = vsel %vm356, %v295, 0
      %v756 = vsel %vm356, %v296, 0
      %v759 = vsel %vm356, %v297, 0
      %v762 = vsel %vm356, %v298, 0
      %v765 = vsel %vm356, %v299, 0
      %v768 = vsel %vm356, %v300, 0
      %v771 = vsel %vm356, %v301, 0
      %v774 = vsel %vm356, %v302, 0
      %v777 = vsel %vm356, %v303, 0
      %v780 = vsel %vm356, %v304, 0
      %v783 = vsel %vm356, %v305, 0
      %v786 = vsel %vm356, %v306, 0
      %v789 = vsel %vm356, %v307, 0
      %v792 = vsel %vm356, %v308, 0
      %v795 = vsel %vm356, %v309, 0
      %v798 = vsel %vm356, %v310, 0
      %v801 = vsel %vm356, %v311, 0
      %v804 = vsel %vm356, %v312, 0
      %v807 = vsel %vm356, %v313, 0
      %v810 = vsel %vm356, %v314, 0
      %v813 = vsel %vm356, %v315, 0
      %v816 = vsel %vm356, %v316, 0
      %818 = vmatprep.subr.mxu0 0.0
      %819 = vmatpush1.msra.mxu0 %v317
      %820 = vmatprep.subr.mxu0 0.0
      %821 = vmatpush1.msra.mxu0 0.0
      %822 = vmatprep.subr.mxu0 0.0
      %823 = vmatpush1.msra.mxu0 0.0
      %824 = vmatprep.subr.mxu0 0.0
      %825 = vmatpush1.msra.mxu0 0.0
      %826 = vmatprep.subr.mxu0 0.0
      %827 = vmatpush1.msra.mxu0 0.0
      %828 = vmatprep.subr.mxu0 0.0
      %829 = vmatpush1.msra.mxu0 0.0
      %830 = vmatprep.subr.mxu0 0.0
      %831 = vmatpush1.msra.mxu0 0.0
      %832 = vmatprep.subr.mxu0 0.0
      %833 = vmatpush1.msra.mxu0 0.0
      %834 = vmatprep.subr.mxu0 0.0
      %835 = vmatpush1.msra.mxu0 0.0
      %836 = vmatprep.subr.mxu0 0.0
      %837 = vmatpush1.msra.mxu0 0.0
      %838 = vmatprep.subr.mxu0 0.0
      %839 = vmatpush1.msra.mxu0 0.0
      %840 = vmatprep.subr.mxu0 0.0
      %841 = vmatpush1.msra.mxu0 0.0
      %842 = vmatprep.subr.mxu0 0.0
      %843 = vmatpush1.msra.mxu0 0.0
      %844 = vmatprep.subr.mxu0 0.0
      %845 = vmatpush1.msra.mxu0 0.0
      %846 = vmatprep.subr.mxu0 0.0
      %847 = vmatpush1.msra.mxu0 0.0
      %848 = vmatprep.subr.mxu0 0.0
      %849 = vmatpush1.msra.mxu0 0.0
      %850 = vmatprep.subr.mxu0 0.0
      %851 = vmatpush1.msra.mxu0 0.0
      %852 = vmatprep.subr.mxu0 0.0
      %853 = vmatpush1.msra.mxu0 0.0
      %854 = vmatprep.subr.mxu0 0.0
      %855 = vmatpush1.msra.mxu0 0.0
      %856 = vmatprep.subr.mxu0 0.0
      %857 = vmatpush1.msra.mxu0 0.0
      %858 = vmatprep.subr.mxu0 0.0
      %859 = vmatpush1.msra.mxu0 0.0
      %860 = vmatprep.subr.mxu0 0.0
      %861 = vmatpush1.msra.mxu0 0.0
      %862 = vmatprep.subr.mxu0 0.0
      %863 = vmatpush1.msra.mxu0 0.0
      %864 = vmatprep.subr.mxu0 0.0
      %865 = vmatpush1.msra.mxu0 0.0
      %866 = vmatprep.subr.mxu0 0.0
      %867 = vmatpush1.msra.mxu0 0.0
      %868 = vmatprep.subr.mxu0 0.0
      %869 = vmatpush1.msra.mxu0 0.0
      %870 = vmatprep.subr.mxu0 0.0
      %871 = vmatpush1.msra.mxu0 0.0
      %872 = vmatprep.subr.mxu0 0.0
      %873 = vmatpush1.msra.mxu0 0.0
      %874 = vmatprep.subr.mxu0 0.0
      %875 = vmatpush1.msra.mxu0 0.0
      %876 = vmatprep.subr.mxu0 0.0
      %877 = vmatpush1.msra.mxu0 0.0
      %878 = vmatprep.subr.mxu0 0.0
      %879 = vmatpush1.msra.mxu0 0.0
      %880 = vmatprep.subr.mxu0 0.0
      %881 = vmatpush1.msra.mxu0 0.0
      %882 = vmatprep.mubr.f32.mxu0 0.0
      %883 = vmatmul.mubr.f32.gmra.mrb[0].mxu0 %v711
      %v884 = vpop.f32.mrb[0].mxu0
      %v885 = vadd.f32 %v532, %v884
      %v886 = vpop.f32.mrb[0].mxu0
      %887 = vmatprep.mubr.f32.mxu0 0.0
      %888 = vmatmul.mubr.f32.gmra.mrb[0].mxu0 %v714
      %v889 = vpop.f32.mrb[0].mxu0
      %v890 = vadd.f32 %v537, %v889
      %v891 = vpop.f32.mrb[0].mxu0
      %892 = vmatprep.mubr.f32.mxu0 0.0
      %893 = vmatmul.mubr.f32.gmra.mrb[0].mxu0 %v717
      %v894 = vpop.f32.mrb[0].mxu0
      %v895 = vadd.f32 %v542, %v894
      %v896 = vpop.f32.mrb[0].mxu0
      %897 = vmatprep.mubr.f32.mxu0 0.0
      %898 = vmatmul.mubr.f32.gmra.mrb[0].mxu0 %v720
      %v899 = vpop.f32.mrb[0].mxu0
      %v900 = vadd.f32 %v547, %v899
      %v901 = vpop.f32.mrb[0].mxu0
      %902 = vmatprep.mubr.f32.mxu0 0.0
      %903 = vmatmul.mubr.f32.gmra.mrb[0].mxu0 %v723
      %v904 = vpop.f32.mrb[0].mxu0
      %v905 = vadd.f32 %v552, %v904
      %v906 = vpop.f32.mrb[0].mxu0
      %907 = vmatprep.mubr.f32.mxu0 0.0
      %908 = vmatmul.mubr.f32.gmra.mrb[0].mxu0 %v726
      %v909 = vpop.f32.mrb[0].mxu0
      %v910 = vadd.f32 %v557, %v909
      %v911 = vpop.f32.mrb[0].mxu0
      %912 = vmatprep.mubr.f32.mxu0 0.0
      %913 = vmatmul.mubr.f32.gmra.mrb[0].mxu0 %v729
      %v914 = vpop.f32.mrb[0].mxu0
      %v915 = vadd.f32 %v562, %v914
      %v916 = vpop.f32.mrb[0].mxu0
      %917 = vmatprep.mubr.f32.mxu0 0.0
      %918 = vmatmul.mubr.f32.gmra.mrb[0].mxu0 %v732
      %v919 = vpop.f32.mrb[0].mxu0
      %v920 = vadd.f32 %v567, %v919
      %v921 = vpop.f32.mrb[0].mxu0
      %922 = vmatprep.mubr.f32.mxu0 0.0
      %923 = vmatmul.mubr.f32.gmra.mrb[0].mxu0 %v735
      %v924 = vpop.f32.mrb[0].mxu0
      %v925 = vadd.f32 %v572, %v924
      %v926 = vpop.f32.mrb[0].mxu0
      %927 = vmatprep.mubr.f32.mxu0 0.0
      %928 = vmatmul.mubr.f32.gmra.mrb[0].mxu0 %v738
      %v929 = vpop.f32.mrb[0].mxu0
      %v930 = vadd.f32 %v577, %v929
      %v931 = vpop.f32.mrb[0].mxu0
      %932 = vmatprep.mubr.f32.mxu0 0.0
      %933 = vmatmul.mubr.f32.gmra.mrb[0].mxu0 %v741
      %v934 = vpop.f32.mrb[0].mxu0
      %v935 = vadd.f32 %v582, %v934
      %v936 = vpop.f32.mrb[0].mxu0
      %937 = vmatprep.mubr.f32.mxu0 0.0
      %938 = vmatmul.mubr.f32.gmra.mrb[0].mxu0 %v744
      %v939 = vpop.f32.mrb[0].mxu0
      %v940 = vadd.f32 %v587, %v939
      %v941 = vpop.f32.mrb[0].mxu0
      %942 = vmatprep.mubr.f32.mxu0 0.0
      %943 = vmatmul.mubr.f32.gmra.mrb[0].mxu0 %v747
      %v944 = vpop.f32.mrb[0].mxu0
      %v945 = vadd.f32 %v592, %v944
      %v946 = vpop.f32.mrb[0].mxu0
      %947 = vmatprep.mubr.f32.mxu0 0.0
      %948 = vmatmul.mubr.f32.gmra.mrb[0].mxu0 %v750
      %v949 = vpop.f32.mrb[0].mxu0
      %v950 = vadd.f32 %v597, %v949
      %v951 = vpop.f32.mrb[0].mxu0
      %952 = vmatprep.mubr.f32.mxu0 0.0
      %953 = vmatmul.mubr.f32.gmra.mrb[0].mxu0 %v753
      %v954 = vpop.f32.mrb[0].mxu0
      %v955 = vadd.f32 %v602, %v954
      %v956 = vpop.f32.mrb[0].mxu0
      %957 = vmatprep.mubr.f32.mxu0 0.0
      %958 = vmatmul.mubr.f32.gmra.mrb[0].mxu0 %v756
      %v959 = vpop.f32.mrb[0].mxu0
      %v960 = vadd.f32 %v607, %v959
      %v961 = vpop.f32.mrb[0].mxu0
      %962 = vmatprep.mubr.f32.mxu0 0.0
      %963 = vmatmul.mubr.f32.gmra.mrb[0].mxu0 %v759
      %v964 = vpop.f32.mrb[0].mxu0
      %v965 = vadd.f32 %v612, %v964
      %v966 = vpop.f32.mrb[0].mxu0
      %967 = vmatprep.mubr.f32.mxu0 0.0
      %968 = vmatmul.mubr.f32.gmra.mrb[0].mxu0 %v762
      %v969 = vpop.f32.mrb[0].mxu0
      %v970 = vadd.f32 %v617, %v969
      %v971 = vpop.f32.mrb[0].mxu0
      %972 = vmatprep.mubr.f32.mxu0 0.0
      %973 = vmatmul.mubr.f32.gmra.mrb[0].mxu0 %v765
      %v974 = vpop.f32.mrb[0].mxu0
      %v975 = vadd.f32 %v622, %v974
      %v976 = vpop.f32.mrb[0].mxu0
      %977 = vmatprep.mubr.f32.mxu0 0.0
      %978 = vmatmul.mubr.f32.gmra.mrb[0].mxu0 %v768
      %v979 = vpop.f32.mrb[0].mxu0
      %v980 = vadd.f32 %v627, %v979
      %v981 = vpop.f32.mrb[0].mxu0
      %982 = vmatprep.mubr.f32.mxu0 0.0
      %983 = vmatmul.mubr.f32.gmra.mrb[0].mxu0 %v771
      %v984 = vpop.f32.mrb[0].mxu0
      %v985 = vadd.f32 %v632, %v984
      %v986 = vpop.f32.mrb[0].mxu0
      %987 = vmatprep.mubr.f32.mxu0 0.0
      %988 = vmatmul.mubr.f32.gmra.mrb[0].mxu0 %v774
      %v989 = vpop.f32.mrb[0].mxu0
      %v990 = vadd.f32 %v637, %v989
      %v991 = vpop.f32.mrb[0].mxu0
      %992 = vmatprep.mubr.f32.mxu0 0.0
      %993 = vmatmul.mubr.f32.gmra.mrb[0].mxu0 %v777
      %v994 = vpop.f32.mrb[0].mxu0
      %v995 = vadd.f32 %v642, %v994
      %v996 = vpop.f32.mrb[0].mxu0
      %997 = vmatprep.mubr.f32.mxu0 0.0
      %998 = vmatmul.mubr.f32.gmra.mrb[0].mxu0 %v780
      %v999 = vpop.f32.mrb[0].mxu0
      %v1000 = vadd.f32 %v647, %v999
      %v1001 = vpop.f32.mrb[0].mxu0
      %1002 = vmatprep.mubr.f32.mxu0 0.0
      %1003 = vmatmul.mubr.f32.gmra.mrb[0].mxu0 %v783
      %v1004 = vpop.f32.mrb[0].mxu0
      %v1005 = vadd.f32 %v652, %v1004
      %v1006 = vpop.f32.mrb[0].mxu0
      %1007 = vmatprep.mubr.f32.mxu0 0.0
      %1008 = vmatmul.mubr.f32.gmra.mrb[0].mxu0 %v786
      %v1009 = vpop.f32.mrb[0].mxu0
      %v1010 = vadd.f32 %v657, %v1009
      %v1011 = vpop.f32.mrb[0].mxu0
      %1012 = vmatprep.mubr.f32.mxu0 0.0
      %1013 = vmatmul.mubr.f32.gmra.mrb[0].mxu0 %v789
      %v1014 = vpop.f32.mrb[0].mxu0
      %v1015 = vadd.f32 %v662, %v1014
      %v1016 = vpop.f32.mrb[0].mxu0
      %1017 = vmatprep.mubr.f32.mxu0 0.0
      %1018 = vmatmul.mubr.f32.gmra.mrb[0].mxu0 %v792
      %v1019 = vpop.f32.mrb[0].mxu0
      %v1020 = vadd.f32 %v667, %v1019
      %v1021 = vpop.f32.mrb[0].mxu0
      %1022 = vmatprep.mubr.f32.mxu0 0.0
      %1023 = vmatmul.mubr.f32.gmra.mrb[0].mxu0 %v795
      %v1024 = vpop.f32.mrb[0].mxu0
      %v1025 = vadd.f32 %v672, %v1024
      %v1026 = vpop.f32.mrb[0].mxu0
      %1027 = vmatprep.mubr.f32.mxu0 0.0
      %1028 = vmatmul.mubr.f32.gmra.mrb[0].mxu0 %v798
      %v1029 = vpop.f32.mrb[0].mxu0
      %v1030 = vadd.f32 %v677, %v1029
      %v1031 = vpop.f32.mrb[0].mxu0
      %1032 = vmatprep.mubr.f32.mxu0 0.0
      %1033 = vmatmul.mubr.f32.gmra.mrb[0].mxu0 %v801
      %v1034 = vpop.f32.mrb[0].mxu0
      %v1035 = vadd.f32 %v682, %v1034
      %v1036 = vpop.f32.mrb[0].mxu0
      %1037 = vmatprep.mubr.f32.mxu0 0.0
      %1038 = vmatmul.mubr.f32.gmra.mrb[0].mxu0 %v804
      %v1039 = vpop.f32.mrb[0].mxu0
      %v1040 = vadd.f32 %v687, %v1039
      %v1041 = vpop.f32.mrb[0].mxu0
      %1042 = vmatprep.mubr.f32.mxu0 0.0
      %1043 = vmatmul.mubr.f32.gmra.mrb[0].mxu0 %v807
      %v1044 = vpop.f32.mrb[0].mxu0
      %v1045 = vadd.f32 %v692, %v1044
      %v1046 = vpop.f32.mrb[0].mxu0
      %1047 = vmatprep.mubr.f32.mxu0 0.0
      %1048 = vmatmul.mubr.f32.gmra.mrb[0].mxu0 %v810
      %v1049 = vpop.f32.mrb[0].mxu0
      %v1050 = vadd.f32 %v697, %v1049
      %v1051 = vpop.f32.mrb[0].mxu0
      %1052 = vmatprep.mubr.f32.mxu0 0.0
      %1053 = vmatmul.mubr.f32.gmra.mrb[0].mxu0 %v813
      %v1054 = vpop.f32.mrb[0].mxu0
      %v1055 = vadd.f32 %v702, %v1054
      %v1056 = vpop.f32.mrb[0].mxu0
      %1057 = vmatprep.mubr.f32.mxu0 0.0
      %1058 = vmatmul.mubr.f32.gmra.mrb[0].mxu0 %v816
      %v1059 = vpop.f32.mrb[0].mxu0
      %v1060 = vadd.f32 %v707, %v1059
      %v1061 = vpop.f32.mrb[0].mxu0
      %1062 = vdwg.mxu0
      %v1063 = vld [vmem:[%s225 + $0x2] sm:$0xff]
      %v1064 = vld [vmem:[%s225 + $0xa] sm:$0xff]
      %v1065 = vld [vmem:[%s225 + $0x12] sm:$0xff]
      %v1066 = vld [vmem:[%s225 + $0x1a] sm:$0xff]
      %v1067 = vld [vmem:[%s225 + $0x22] sm:$0xff]
      %v1068 = vld [vmem:[%s225 + $0x2a] sm:$0xff]
      %v1069 = vld [vmem:[%s225 + $0x32] sm:$0xff]
      %v1070 = vld [vmem:[%s225 + $0x3a] sm:$0xff]
      %v1071 = vld [vmem:[%s225 + $0x42] sm:$0xff]
      %v1072 = vld [vmem:[%s225 + $0x4a] sm:$0xff]
      %v1073 = vld [vmem:[%s225 + $0x52] sm:$0xff]
      %v1074 = vld [vmem:[%s225 + $0x5a] sm:$0xff]
      %v1075 = vld [vmem:[%s225 + $0x62] sm:$0xff]
      %v1076 = vld [vmem:[%s225 + $0x6a] sm:$0xff]
      %v1077 = vld [vmem:[%s225 + $0x72] sm:$0xff]
      %v1078 = vld [vmem:[%s225 + $0x7a] sm:$0xff]
      %v1079 = vld [vmem:[%s225 + $0x82] sm:$0xff]
      %v1080 = vld [vmem:[%s225 + $0x8a] sm:$0xff]
      %v1081 = vld [vmem:[%s225 + $0x92] sm:$0xff]
      %v1082 = vld [vmem:[%s225 + $0x9a] sm:$0xff]
      %v1083 = vld [vmem:[%s225 + $0xa2] sm:$0xff]
      %v1084 = vld [vmem:[%s225 + $0xaa] sm:$0xff]
      %v1085 = vld [vmem:[%s225 + $0xb2] sm:$0xff]
      %v1086 = vld [vmem:[%s225 + $0xba] sm:$0xff]
      %v1087 = vld [vmem:[%s225 + $0xc2] sm:$0xff]
      %v1088 = vld [vmem:[%s225 + $0xca] sm:$0xff]
      %v1089 = vld [vmem:[%s225 + $0xd2] sm:$0xff]
      %v1090 = vld [vmem:[%s225 + $0xda] sm:$0xff]
      %v1091 = vld [vmem:[%s225 + $0xe2] sm:$0xff]
      %v1092 = vld [vmem:[%s225 + $0xea] sm:$0xff]
      %v1093 = vld [vmem:[%s225 + $0xf2] sm:$0xff]
      %v1094 = vld [vmem:[%s225 + $0xfa] sm:$0xff]
      %v1095 = vld [vmem:[%s225 + $0x102] sm:$0xff]
      %v1096 = vld [vmem:[%s225 + $0x10a] sm:$0xff]
      %v1097 = vld [vmem:[%s225 + $0x112] sm:$0xff]
      %v1098 = vld [vmem:[%s225 + $0x11a] sm:$0x3f]
      %s1099 = scalar_lea.vmem %s231, 16
      %v1100 = vld [vmem:[%s1099] sm:$0xff]
      %v1102 = vsel %vm356, %v1063, 0
      %v1105 = vsel %vm356, %v1064, 0
      %v1108 = vsel %vm356, %v1065, 0
      %v1111 = vsel %vm356, %v1066, 0
      %v1114 = vsel %vm356, %v1067, 0
      %v1117 = vsel %vm356, %v1068, 0
      %v1120 = vsel %vm356, %v1069, 0
      %v1123 = vsel %vm356, %v1070, 0
      %v1126 = vsel %vm356, %v1071, 0
      %v1129 = vsel %vm356, %v1072, 0
      %v1132 = vsel %vm356, %v1073, 0
      %v1135 = vsel %vm356, %v1074, 0
      %v1138 = vsel %vm356, %v1075, 0
      %v1141 = vsel %vm356, %v1076, 0
      %v1144 = vsel %vm356, %v1077, 0
      %v1147 = vsel %vm356, %v1078, 0
      %v1150 = vsel %vm356, %v1079, 0
      %v1153 = vsel %vm356, %v1080, 0
      %v1156 = vsel %vm356, %v1081, 0
      %v1159 = vsel %vm356, %v1082, 0
      %v1162 = vsel %vm356, %v1083, 0
      %v1165 = vsel %vm356, %v1084, 0
      %v1168 = vsel %vm356, %v1085, 0
      %v1171 = vsel %vm356, %v1086, 0
      %v1174 = vsel %vm356, %v1087, 0
      %v1177 = vsel %vm356, %v1088, 0
      %v1180 = vsel %vm356, %v1089, 0
      %v1183 = vsel %vm356, %v1090, 0
      %v1186 = vsel %vm356, %v1091, 0
      %v1189 = vsel %vm356, %v1092, 0
      %v1192 = vsel %vm356, %v1093, 0
      %v1195 = vsel %vm356, %v1094, 0
      %v1198 = vsel %vm356, %v1095, 0
      %v1201 = vsel %vm356, %v1096, 0
      %v1204 = vsel %vm356, %v1097, 0
      %v1207 = vsel %vm356, %v1098, 0
      %1209 = vmatprep.subr.mxu0 0.0
      %1210 = vmatpush1.msra.mxu0 %v1100
      %1211 = vmatprep.subr.mxu0 0.0
      %1212 = vmatpush1.msra.mxu0 0.0
      %1213 = vmatprep.subr.mxu0 0.0
      %1214 = vmatpush1.msra.mxu0 0.0
      %1215 = vmatprep.subr.mxu0 0.0
      %1216 = vmatpush1.msra.mxu0 0.0
      %1217 = vmatprep.subr.mxu0 0.0
      %1218 = vmatpush1.msra.mxu0 0.0
      %1219 = vmatprep.subr.mxu0 0.0
      %1220 = vmatpush1.msra.mxu0 0.0
      %1221 = vmatprep.subr.mxu0 0.0
      %1222 = vmatpush1.msra.mxu0 0.0
      %1223 = vmatprep.subr.mxu0 0.0
      %1224 = vmatpush1.msra.mxu0 0.0
      %1225 = vmatprep.subr.mxu0 0.0
      %1226 = vmatpush1.msra.mxu0 0.0
      %1227 = vmatprep.subr.mxu0 0.0
      %1228 = vmatpush1.msra.mxu0 0.0
      %1229 = vmatprep.subr.mxu0 0.0
      %1230 = vmatpush1.msra.mxu0 0.0
      %1231 = vmatprep.subr.mxu0 0.0
      %1232 = vmatpush1.msra.mxu0 0.0
      %1233 = vmatprep.subr.mxu0 0.0
      %1234 = vmatpush1.msra.mxu0 0.0
      %1235 = vmatprep.subr.mxu0 0.0
      %1236 = vmatpush1.msra.mxu0 0.0
      %1237 = vmatprep.subr.mxu0 0.0
      %1238 = vmatpush1.msra.mxu0 0.0
      %1239 = vmatprep.subr.mxu0 0.0
      %1240 = vmatpush1.msra.mxu0 0.0
      %1241 = vmatprep.subr.mxu0 0.0
      %1242 = vmatpush1.msra.mxu0 0.0
      %1243 = vmatprep.subr.mxu0 0.0
      %1244 = vmatpush1.msra.mxu0 0.0
      %1245 = vmatprep.subr.mxu0 0.0
      %1246 = vmatpush1.msra.mxu0 0.0
      %1247 = vmatprep.subr.mxu0 0.0
      %1248 = vmatpush1.msra.mxu0 0.0
      %1249 = vmatprep.subr.mxu0 0.0
      %1250 = vmatpush1.msra.mxu0 0.0
      %1251 = vmatprep.subr.mxu0 0.0
      %1252 = vmatpush1.msra.mxu0 0.0
      %1253 = vmatprep.subr.mxu0 0.0
      %1254 = vmatpush1.msra.mxu0 0.0
      %1255 = vmatprep.subr.mxu0 0.0
      %1256 = vmatpush1.msra.mxu0 0.0
      %1257 = vmatprep.subr.mxu0 0.0
      %1258 = vmatpush1.msra.mxu0 0.0
      %1259 = vmatprep.subr.mxu0 0.0
      %1260 = vmatpush1.msra.mxu0 0.0
      %1261 = vmatprep.subr.mxu0 0.0
      %1262 = vmatpush1.msra.mxu0 0.0
      %1263 = vmatprep.subr.mxu0 0.0
      %1264 = vmatpush1.msra.mxu0 0.0
      %1265 = vmatprep.subr.mxu0 0.0
      %1266 = vmatpush1.msra.mxu0 0.0
      %1267 = vmatprep.subr.mxu0 0.0
      %1268 = vmatpush1.msra.mxu0 0.0
      %1269 = vmatprep.subr.mxu0 0.0
      %1270 = vmatpush1.msra.mxu0 0.0
      %1271 = vmatprep.subr.mxu0 0.0
      %1272 = vmatpush1.msra.mxu0 0.0
      %1273 = vmatprep.mubr.f32.mxu0 0.0
      %1274 = vmatmul.mubr.f32.gmra.mrb[0].mxu0 %v1102
      %v1275 = vpop.f32.mrb[0].mxu0
      %v1276 = vadd.f32 0.0, %v1275
      %v1277 = vpop.f32.mrb[0].mxu0
      %1278 = vmatprep.mubr.f32.mxu0 0.0
      %1279 = vmatmul.mubr.f32.gmra.mrb[0].mxu0 %v1105
      %v1280 = vpop.f32.mrb[0].mxu0
      %v1281 = vadd.f32 0.0, %v1280
      %v1282 = vpop.f32.mrb[0].mxu0
      %1283 = vmatprep.mubr.f32.mxu0 0.0
      %1284 = vmatmul.mubr.f32.gmra.mrb[0].mxu0 %v1108
      %v1285 = vpop.f32.mrb[0].mxu0
      %v1286 = vadd.f32 0.0, %v1285
      %v1287 = vpop.f32.mrb[0].mxu0
      %1288 = vmatprep.mubr.f32.mxu0 0.0
      %1289 = vmatmul.mubr.f32.gmra.mrb[0].mxu0 %v1111
      %v1290 = vpop.f32.mrb[0].mxu0
      %v1291 = vadd.f32 0.0, %v1290
      %v1292 = vpop.f32.mrb[0].mxu0
      %1293 = vmatprep.mubr.f32.mxu0 0.0
      %1294 = vmatmul.mubr.f32.gmra.mrb[0].mxu0 %v1114
      %v1295 = vpop.f32.mrb[0].mxu0
      %v1296 = vadd.f32 0.0, %v1295
      %v1297 = vpop.f32.mrb[0].mxu0
      %1298 = vmatprep.mubr.f32.mxu0 0.0
      %1299 = vmatmul.mubr.f32.gmra.mrb[0].mxu0 %v1117
      %v1300 = vpop.f32.mrb[0].mxu0
      %v1301 = vadd.f32 0.0, %v1300
      %v1302 = vpop.f32.mrb[0].mxu0
      %1303 = vmatprep.mubr.f32.mxu0 0.0
      %1304 = vmatmul.mubr.f32.gmra.mrb[0].mxu0 %v1120
      %v1305 = vpop.f32.mrb[0].mxu0
      %v1306 = vadd.f32 0.0, %v1305
      %v1307 = vpop.f32.mrb[0].mxu0
      %1308 = vmatprep.mubr.f32.mxu0 0.0
      %1309 = vmatmul.mubr.f32.gmra.mrb[0].mxu0 %v1123
      %v1310 = vpop.f32.mrb[0].mxu0
      %v1311 = vadd.f32 0.0, %v1310
      %v1312 = vpop.f32.mrb[0].mxu0
      %1313 = vmatprep.mubr.f32.mxu0 0.0
      %1314 = vmatmul.mubr.f32.gmra.mrb[0].mxu0 %v1126
      %v1315 = vpop.f32.mrb[0].mxu0
      %v1316 = vadd.f32 0.0, %v1315
      %v1317 = vpop.f32.mrb[0].mxu0
      %1318 = vmatprep.mubr.f32.mxu0 0.0
      %1319 = vmatmul.mubr.f32.gmra.mrb[0].mxu0 %v1129
      %v1320 = vpop.f32.mrb[0].mxu0
      %v1321 = vadd.f32 0.0, %v1320
      %v1322 = vpop.f32.mrb[0].mxu0
      %1323 = vmatprep.mubr.f32.mxu0 0.0
      %1324 = vmatmul.mubr.f32.gmra.mrb[0].mxu0 %v1132
      %v1325 = vpop.f32.mrb[0].mxu0
      %v1326 = vadd.f32 0.0, %v1325
      %v1327 = vpop.f32.mrb[0].mxu0
      %1328 = vmatprep.mubr.f32.mxu0 0.0
      %1329 = vmatmul.mubr.f32.gmra.mrb[0].mxu0 %v1135
      %v1330 = vpop.f32.mrb[0].mxu0
      %v1331 = vadd.f32 0.0, %v1330
      %v1332 = vpop.f32.mrb[0].mxu0
      %1333 = vmatprep.mubr.f32.mxu0 0.0
      %1334 = vmatmul.mubr.f32.gmra.mrb[0].mxu0 %v1138
      %v1335 = vpop.f32.mrb[0].mxu0
      %v1336 = vadd.f32 0.0, %v1335
      %v1337 = vpop.f32.mrb[0].mxu0
      %1338 = vmatprep.mubr.f32.mxu0 0.0
      %1339 = vmatmul.mubr.f32.gmra.mrb[0].mxu0 %v1141
      %v1340 = vpop.f32.mrb[0].mxu0
      %v1341 = vadd.f32 0.0, %v1340
      %v1342 = vpop.f32.mrb[0].mxu0
      %1343 = vmatprep.mubr.f32.mxu0 0.0
      %1344 = vmatmul.mubr.f32.gmra.mrb[0].mxu0 %v1144
      %v1345 = vpop.f32.mrb[0].mxu0
      %v1346 = vadd.f32 0.0, %v1345
      %v1347 = vpop.f32.mrb[0].mxu0
      %1348 = vmatprep.mubr.f32.mxu0 0.0
      %1349 = vmatmul.mubr.f32.gmra.mrb[0].mxu0 %v1147
      %v1350 = vpop.f32.mrb[0].mxu0
      %v1351 = vadd.f32 0.0, %v1350
      %v1352 = vpop.f32.mrb[0].mxu0
      %1353 = vmatprep.mubr.f32.mxu0 0.0
      %1354 = vmatmul.mubr.f32.gmra.mrb[0].mxu0 %v1150
      %v1355 = vpop.f32.mrb[0].mxu0
      %v1356 = vadd.f32 0.0, %v1355
      %v1357 = vpop.f32.mrb[0].mxu0
      %1358 = vmatprep.mubr.f32.mxu0 0.0
      %1359 = vmatmul.mubr.f32.gmra.mrb[0].mxu0 %v1153
      %v1360 = vpop.f32.mrb[0].mxu0
      %v1361 = vadd.f32 0.0, %v1360
      %v1362 = vpop.f32.mrb[0].mxu0
      %1363 = vmatprep.mubr.f32.mxu0 0.0
      %1364 = vmatmul.mubr.f32.gmra.mrb[0].mxu0 %v1156
      %v1365 = vpop.f32.mrb[0].mxu0
      %v1366 = vadd.f32 0.0, %v1365
      %v1367 = vpop.f32.mrb[0].mxu0
      %1368 = vmatprep.mubr.f32.mxu0 0.0
      %1369 = vmatmul.mubr.f32.gmra.mrb[0].mxu0 %v1159
      %v1370 = vpop.f32.mrb[0].mxu0
      %v1371 = vadd.f32 0.0, %v1370
      %v1372 = vpop.f32.mrb[0].mxu0
      %1373 = vmatprep.mubr.f32.mxu0 0.0
      %1374 = vmatmul.mubr.f32.gmra.mrb[0].mxu0 %v1162
      %v1375 = vpop.f32.mrb[0].mxu0
      %v1376 = vadd.f32 0.0, %v1375
      %v1377 = vpop.f32.mrb[0].mxu0
      %1378 = vmatprep.mubr.f32.mxu0 0.0
      %1379 = vmatmul.mubr.f32.gmra.mrb[0].mxu0 %v1165
      %v1380 = vpop.f32.mrb[0].mxu0
      %v1381 = vadd.f32 0.0, %v1380
      %v1382 = vpop.f32.mrb[0].mxu0
      %1383 = vmatprep.mubr.f32.mxu0 0.0
      %1384 = vmatmul.mubr.f32.gmra.mrb[0].mxu0 %v1168
      %v1385 = vpop.f32.mrb[0].mxu0
      %v1386 = vadd.f32 0.0, %v1385
      %v1387 = vpop.f32.mrb[0].mxu0
      %1388 = vmatprep.mubr.f32.mxu0 0.0
      %1389 = vmatmul.mubr.f32.gmra.mrb[0].mxu0 %v1171
      %v1390 = vpop.f32.mrb[0].mxu0
      %v1391 = vadd.f32 0.0, %v1390
      %v1392 = vpop.f32.mrb[0].mxu0
      %1393 = vmatprep.mubr.f32.mxu0 0.0
      %1394 = vmatmul.mubr.f32.gmra.mrb[0].mxu0 %v1174
      %v1395 = vpop.f32.mrb[0].mxu0
      %v1396 = vadd.f32 0.0, %v1395
      %v1397 = vpop.f32.mrb[0].mxu0
      %1398 = vmatprep.mubr.f32.mxu0 0.0
      %1399 = vmatmul.mubr.f32.gmra.mrb[0].mxu0 %v1177
      %v1400 = vpop.f32.mrb[0].mxu0
      %v1401 = vadd.f32 0.0, %v1400
      %v1402 = vpop.f32.mrb[0].mxu0
      %1403 = vmatprep.mubr.f32.mxu0 0.0
      %1404 = vmatmul.mubr.f32.gmra.mrb[0].mxu0 %v1180
      %v1405 = vpop.f32.mrb[0].mxu0
      %v1406 = vadd.f32 0.0, %v1405
      %v1407 = vpop.f32.mrb[0].mxu0
      %1408 = vmatprep.mubr.f32.mxu0 0.0
      %1409 = vmatmul.mubr.f32.gmra.mrb[0].mxu0 %v1183
      %v1410 = vpop.f32.mrb[0].mxu0
      %v1411 = vadd.f32 0.0, %v1410
      %v1412 = vpop.f32.mrb[0].mxu0
      %1413 = vmatprep.mubr.f32.mxu0 0.0
      %1414 = vmatmul.mubr.f32.gmra.mrb[0].mxu0 %v1186
      %v1415 = vpop.f32.mrb[0].mxu0
      %v1416 = vadd.f32 0.0, %v1415
      %v1417 = vpop.f32.mrb[0].mxu0
      %1418 = vmatprep.mubr.f32.mxu0 0.0
      %1419 = vmatmul.mubr.f32.gmra.mrb[0].mxu0 %v1189
      %v1420 = vpop.f32.mrb[0].mxu0
      %v1421 = vadd.f32 0.0, %v1420
      %v1422 = vpop.f32.mrb[0].mxu0
      %1423 = vmatprep.mubr.f32.mxu0 0.0
      %1424 = vmatmul.mubr.f32.gmra.mrb[0].mxu0 %v1192
      %v1425 = vpop.f32.mrb[0].mxu0
      %v1426 = vadd.f32 0.0, %v1425
      %v1427 = vpop.f32.mrb[0].mxu0
      %1428 = vmatprep.mubr.f32.mxu0 0.0
      %1429 = vmatmul.mubr.f32.gmra.mrb[0].mxu0 %v1195
      %v1430 = vpop.f32.mrb[0].mxu0
      %v1431 = vadd.f32 0.0, %v1430
      %v1432 = vpop.f32.mrb[0].mxu0
      %1433 = vmatprep.mubr.f32.mxu0 0.0
      %1434 = vmatmul.mubr.f32.gmra.mrb[0].mxu0 %v1198
      %v1435 = vpop.f32.mrb[0].mxu0
      %v1436 = vadd.f32 0.0, %v1435
      %v1437 = vpop.f32.mrb[0].mxu0
      %1438 = vmatprep.mubr.f32.mxu0 0.0
      %1439 = vmatmul.mubr.f32.gmra.mrb[0].mxu0 %v1201
      %v1440 = vpop.f32.mrb[0].mxu0
      %v1441 = vadd.f32 0.0, %v1440
      %v1442 = vpop.f32.mrb[0].mxu0
      %1443 = vmatprep.mubr.f32.mxu0 0.0
      %1444 = vmatmul.mubr.f32.gmra.mrb[0].mxu0 %v1204
      %v1445 = vpop.f32.mrb[0].mxu0
      %v1446 = vadd.f32 0.0, %v1445
      %v1447 = vpop.f32.mrb[0].mxu0
      %1448 = vmatprep.mubr.f32.mxu0 0.0
      %1449 = vmatmul.mubr.f32.gmra.mrb[0].mxu0 %v1207
      %v1450 = vpop.f32.mrb[0].mxu0
      %v1451 = vadd.f32 0.0, %v1450
      %v1452 = vpop.f32.mrb[0].mxu0
      %1453 = vdwg.mxu0
      %v1454 = vadd.f32 %v885, %v1276
      %v1455 = vadd.f32 %v890, %v1281
      %v1456 = vadd.f32 %v895, %v1286
      %v1457 = vadd.f32 %v900, %v1291
      %v1458 = vadd.f32 %v905, %v1296
      %v1459 = vadd.f32 %v910, %v1301
      %v1460 = vadd.f32 %v915, %v1306
      %v1461 = vadd.f32 %v920, %v1311
      %v1462 = vadd.f32 %v925, %v1316
      %v1463 = vadd.f32 %v930, %v1321
      %v1464 = vadd.f32 %v935, %v1326
      %v1465 = vadd.f32 %v940, %v1331
      %v1466 = vadd.f32 %v945, %v1336
      %v1467 = vadd.f32 %v950, %v1341
      %v1468 = vadd.f32 %v955, %v1346
      %v1469 = vadd.f32 %v960, %v1351
      %v1470 = vadd.f32 %v965, %v1356
      %v1471 = vadd.f32 %v970, %v1361
      %v1472 = vadd.f32 %v975, %v1366
      %v1473 = vadd.f32 %v980, %v1371
      %v1474 = vadd.f32 %v985, %v1376
      %v1475 = vadd.f32 %v990, %v1381
      %v1476 = vadd.f32 %v995, %v1386
      %v1477 = vadd.f32 %v1000, %v1391
      %v1478 = vadd.f32 %v1005, %v1396
      %v1479 = vadd.f32 %v1010, %v1401
      %v1480 = vadd.f32 %v1015, %v1406
      %v1481 = vadd.f32 %v1020, %v1411
      %v1482 = vadd.f32 %v1025, %v1416
      %v1483 = vadd.f32 %v1030, %v1421
      %v1484 = vadd.f32 %v1035, %v1426
      %v1485 = vadd.f32 %v1040, %v1431
      %v1486 = vadd.f32 %v1045, %v1436
      %v1487 = vadd.f32 %v1050, %v1441
      %v1488 = vadd.f32 %v1055, %v1446
      %v1489 = vadd.f32 %v1060, %v1451
      %v1490 = vld [vmem:[%s225 + $0x12] sm:$0xff]
      %v1491 = vld [vmem:[%s225 + $0x1a] sm:$0xff]
      %v1492 = vld [vmem:[%s225 + $0x22] sm:$0xff]
      %v1493 = vld [vmem:[%s225 + $0x2a] sm:$0xff]
      %v1494 = vld [vmem:[%s225 + $0x32] sm:$0xff]
      %v1495 = vld [vmem:[%s225 + $0x3a] sm:$0xff]
      %v1496 = vld [vmem:[%s225 + $0x42] sm:$0xff]
      %v1497 = vld [vmem:[%s225 + $0x4a] sm:$0xff]
      %v1498 = vld [vmem:[%s225 + $0x52] sm:$0xff]
      %v1499 = vld [vmem:[%s225 + $0x5a] sm:$0xff]
      %v1500 = vld [vmem:[%s225 + $0x62] sm:$0xff]
      %v1501 = vld [vmem:[%s225 + $0x6a] sm:$0xff]
      %v1502 = vld [vmem:[%s225 + $0x72] sm:$0xff]
      %v1503 = vld [vmem:[%s225 + $0x7a] sm:$0xff]
      %v1504 = vld [vmem:[%s225 + $0x82] sm:$0xff]
      %v1505 = vld [vmem:[%s225 + $0x8a] sm:$0xff]
      %v1506 = vld [vmem:[%s225 + $0x92] sm:$0xff]
      %v1507 = vld [vmem:[%s225 + $0x9a] sm:$0xff]
      %v1508 = vld [vmem:[%s225 + $0xa2] sm:$0xff]
      %v1509 = vld [vmem:[%s225 + $0xaa] sm:$0xff]
      %v1510 = vld [vmem:[%s225 + $0xb2] sm:$0xff]
      %v1511 = vld [vmem:[%s225 + $0xba] sm:$0xff]
      %v1512 = vld [vmem:[%s225 + $0xc2] sm:$0xff]
      %v1513 = vld [vmem:[%s225 + $0xca] sm:$0xff]
      %v1514 = vld [vmem:[%s225 + $0xd2] sm:$0xff]
      %v1515 = vld [vmem:[%s225 + $0xda] sm:$0xff]
      %v1516 = vld [vmem:[%s225 + $0xe2] sm:$0xff]
      %v1517 = vld [vmem:[%s225 + $0xea] sm:$0xff]
      %v1518 = vld [vmem:[%s225 + $0xf2] sm:$0xff]
      %v1519 = vld [vmem:[%s225 + $0xfa] sm:$0xff]
      %v1520 = vld [vmem:[%s225 + $0x102] sm:$0xff]
      %v1521 = vld [vmem:[%s225 + $0x10a] sm:$0xff]
      %v1522 = vld [vmem:[%s225 + $0x112] sm:$0xff]
      %v1523 = vld [vmem:[%s225 + $0x11a] sm:$0xff]
      %v1524 = vld [vmem:[%s225 + $0x122] sm:$0xff]
      %v1525 = vld [vmem:[%s225 + $0x12a] sm:$0x3f]
      %s1526 = scalar_lea.vmem %s231, 24
      %v1527 = vld [vmem:[%s1526] sm:$0xff]
      %v1529 = vsel %vm356, %v1490, 0
      %v1532 = vsel %vm356, %v1491, 0
      %v1535 = vsel %vm356, %v1492, 0
      %v1538 = vsel %vm356, %v1493, 0
      %v1541 = vsel %vm356, %v1494, 0
      %v1544 = vsel %vm356, %v1495, 0
      %v1547 = vsel %vm356, %v1496, 0
      %v1550 = vsel %vm356, %v1497, 0
      %v1553 = vsel %vm356, %v1498, 0
      %v1556 = vsel %vm356, %v1499, 0
      %v1559 = vsel %vm356, %v1500, 0
      %v1562 = vsel %vm356, %v1501, 0
      %v1565 = vsel %vm356, %v1502, 0
      %v1568 = vsel %vm356, %v1503, 0
      %v1571 = vsel %vm356, %v1504, 0
      %v1574 = vsel %vm356, %v1505, 0
      %v1577 = vsel %vm356, %v1506, 0
      %v1580 = vsel %vm356, %v1507, 0
      %v1583 = vsel %vm356, %v1508, 0
      %v1586 = vsel %vm356, %v1509, 0
      %v1589 = vsel %vm356, %v1510, 0
      %v1592 = vsel %vm356, %v1511, 0
      %v1595 = vsel %vm356, %v1512, 0
      %v1598 = vsel %vm356, %v1513, 0
      %v1601 = vsel %vm356, %v1514, 0
      %v1604 = vsel %vm356, %v1515, 0
      %v1607 = vsel %vm356, %v1516, 0
      %v1610 = vsel %vm356, %v1517, 0
      %v1613 = vsel %vm356, %v1518, 0
      %v1616 = vsel %vm356, %v1519, 0
      %v1619 = vsel %vm356, %v1520, 0
      %v1622 = vsel %vm356, %v1521, 0
      %v1625 = vsel %vm356, %v1522, 0
      %v1628 = vsel %vm356, %v1523, 0
      %v1631 = vsel %vm356, %v1524, 0
      %v1634 = vsel %vm356, %v1525, 0
      %1636 = vmatprep.subr.mxu0 0.0
      %1637 = vmatpush1.msra.mxu0 %v1527
      %1638 = vmatprep.subr.mxu0 0.0
      %1639 = vmatpush1.msra.mxu0 0.0
      %1640 = vmatprep.subr.mxu0 0.0
      %1641 = vmatpush1.msra.mxu0 0.0
      %1642 = vmatprep.subr.mxu0 0.0
      %1643 = vmatpush1.msra.mxu0 0.0
      %1644 = vmatprep.subr.mxu0 0.0
      %1645 = vmatpush1.msra.mxu0 0.0
      %1646 = vmatprep.subr.mxu0 0.0
      %1647 = vmatpush1.msra.mxu0 0.0
      %1648 = vmatprep.subr.mxu0 0.0
      %1649 = vmatpush1.msra.mxu0 0.0
      %1650 = vmatprep.subr.mxu0 0.0
      %1651 = vmatpush1.msra.mxu0 0.0
      %1652 = vmatprep.subr.mxu0 0.0
      %1653 = vmatpush1.msra.mxu0 0.0
      %1654 = vmatprep.subr.mxu0 0.0
      %1655 = vmatpush1.msra.mxu0 0.0
      %1656 = vmatprep.subr.mxu0 0.0
      %1657 = vmatpush1.msra.mxu0 0.0
      %1658 = vmatprep.subr.mxu0 0.0
      %1659 = vmatpush1.msra.mxu0 0.0
      %1660 = vmatprep.subr.mxu0 0.0
      %1661 = vmatpush1.msra.mxu0 0.0
      %1662 = vmatprep.subr.mxu0 0.0
      %1663 = vmatpush1.msra.mxu0 0.0
      %1664 = vmatprep.subr.mxu0 0.0
      %1665 = vmatpush1.msra.mxu0 0.0
      %1666 = vmatprep.subr.mxu0 0.0
      %1667 = vmatpush1.msra.mxu0 0.0
      %1668 = vmatprep.subr.mxu0 0.0
      %1669 = vmatpush1.msra.mxu0 0.0
      %1670 = vmatprep.subr.mxu0 0.0
      %1671 = vmatpush1.msra.mxu0 0.0
      %1672 = vmatprep.subr.mxu0 0.0
      %1673 = vmatpush1.msra.mxu0 0.0
      %1674 = vmatprep.subr.mxu0 0.0
      %1675 = vmatpush1.msra.mxu0 0.0
      %1676 = vmatprep.subr.mxu0 0.0
      %1677 = vmatpush1.msra.mxu0 0.0
      %1678 = vmatprep.subr.mxu0 0.0
      %1679 = vmatpush1.msra.mxu0 0.0
      %1680 = vmatprep.subr.mxu0 0.0
      %1681 = vmatpush1.msra.mxu0 0.0
      %1682 = vmatprep.subr.mxu0 0.0
      %1683 = vmatpush1.msra.mxu0 0.0
      %1684 = vmatprep.subr.mxu0 0.0
      %1685 = vmatpush1.msra.mxu0 0.0
      %1686 = vmatprep.subr.mxu0 0.0
      %1687 = vmatpush1.msra.mxu0 0.0
      %1688 = vmatprep.subr.mxu0 0.0
      %1689 = vmatpush1.msra.mxu0 0.0
      %1690 = vmatprep.subr.mxu0 0.0
      %1691 = vmatpush1.msra.mxu0 0.0
      %1692 = vmatprep.subr.mxu0 0.0
      %1693 = vmatpush1.msra.mxu0 0.0
      %1694 = vmatprep.subr.mxu0 0.0
      %1695 = vmatpush1.msra.mxu0 0.0
      %1696 = vmatprep.subr.mxu0 0.0
      %1697 = vmatpush1.msra.mxu0 0.0
      %1698 = vmatprep.subr.mxu0 0.0
      %1699 = vmatpush1.msra.mxu0 0.0
      %1700 = vmatprep.mubr.f32.mxu0 0.0
      %1701 = vmatmul.mubr.f32.gmra.mrb[0].mxu0 %v1529
      %v1702 = vpop.f32.mrb[0].mxu0
      %v1703 = vadd.f32 0.0, %v1702
      %v1704 = vpop.f32.mrb[0].mxu0
      %1705 = vmatprep.mubr.f32.mxu0 0.0
      %1706 = vmatmul.mubr.f32.gmra.mrb[0].mxu0 %v1532
      %v1707 = vpop.f32.mrb[0].mxu0
      %v1708 = vadd.f32 0.0, %v1707
      %v1709 = vpop.f32.mrb[0].mxu0
      %1710 = vmatprep.mubr.f32.mxu0 0.0
      %1711 = vmatmul.mubr.f32.gmra.mrb[0].mxu0 %v1535
      %v1712 = vpop.f32.mrb[0].mxu0
      %v1713 = vadd.f32 0.0, %v1712
      %v1714 = vpop.f32.mrb[0].mxu0
      %1715 = vmatprep.mubr.f32.mxu0 0.0
      %1716 = vmatmul.mubr.f32.gmra.mrb[0].mxu0 %v1538
      %v1717 = vpop.f32.mrb[0].mxu0
      %v1718 = vadd.f32 0.0, %v1717
      %v1719 = vpop.f32.mrb[0].mxu0
      %1720 = vmatprep.mubr.f32.mxu0 0.0
      %1721 = vmatmul.mubr.f32.gmra.mrb[0].mxu0 %v1541
      %v1722 = vpop.f32.mrb[0].mxu0
      %v1723 = vadd.f32 0.0, %v1722
      %v1724 = vpop.f32.mrb[0].mxu0
      %1725 = vmatprep.mubr.f32.mxu0 0.0
      %1726 = vmatmul.mubr.f32.gmra.mrb[0].mxu0 %v1544
      %v1727 = vpop.f32.mrb[0].mxu0
      %v1728 = vadd.f32 0.0, %v1727
      %v1729 = vpop.f32.mrb[0].mxu0
      %1730 = vmatprep.mubr.f32.mxu0 0.0
      %1731 = vmatmul.mubr.f32.gmra.mrb[0].mxu0 %v1547
      %v1732 = vpop.f32.mrb[0].mxu0
      %v1733 = vadd.f32 0.0, %v1732
      %v1734 = vpop.f32.mrb[0].mxu0
      %1735 = vmatprep.mubr.f32.mxu0 0.0
      %1736 = vmatmul.mubr.f32.gmra.mrb[0].mxu0 %v1550
      %v1737 = vpop.f32.mrb[0].mxu0
      %v1738 = vadd.f32 0.0, %v1737
      %v1739 = vpop.f32.mrb[0].mxu0
      %1740 = vmatprep.mubr.f32.mxu0 0.0
      %1741 = vmatmul.mubr.f32.gmra.mrb[0].mxu0 %v1553
      %v1742 = vpop.f32.mrb[0].mxu0
      %v1743 = vadd.f32 0.0, %v1742
      %v1744 = vpop.f32.mrb[0].mxu0
      %1745 = vmatprep.mubr.f32.mxu0 0.0
      %1746 = vmatmul.mubr.f32.gmra.mrb[0].mxu0 %v1556
      %v1747 = vpop.f32.mrb[0].mxu0
      %v1748 = vadd.f32 0.0, %v1747
      %v1749 = vpop.f32.mrb[0].mxu0
      %1750 = vmatprep.mubr.f32.mxu0 0.0
      %1751 = vmatmul.mubr.f32.gmra.mrb[0].mxu0 %v1559
      %v1752 = vpop.f32.mrb[0].mxu0
      %v1753 = vadd.f32 0.0, %v1752
      %v1754 = vpop.f32.mrb[0].mxu0
      %1755 = vmatprep.mubr.f32.mxu0 0.0
      %1756 = vmatmul.mubr.f32.gmra.mrb[0].mxu0 %v1562
      %v1757 = vpop.f32.mrb[0].mxu0
      %v1758 = vadd.f32 0.0, %v1757
      %v1759 = vpop.f32.mrb[0].mxu0
      %1760 = vmatprep.mubr.f32.mxu0 0.0
      %1761 = vmatmul.mubr.f32.gmra.mrb[0].mxu0 %v1565
      %v1762 = vpop.f32.mrb[0].mxu0
      %v1763 = vadd.f32 0.0, %v1762
      %v1764 = vpop.f32.mrb[0].mxu0
      %1765 = vmatprep.mubr.f32.mxu0 0.0
      %1766 = vmatmul.mubr.f32.gmra.mrb[0].mxu0 %v1568
      %v1767 = vpop.f32.mrb[0].mxu0
      %v1768 = vadd.f32 0.0, %v1767
      %v1769 = vpop.f32.mrb[0].mxu0
      %1770 = vmatprep.mubr.f32.mxu0 0.0
      %1771 = vmatmul.mubr.f32.gmra.mrb[0].mxu0 %v1571
      %v1772 = vpop.f32.mrb[0].mxu0
      %v1773 = vadd.f32 0.0, %v1772
      %v1774 = vpop.f32.mrb[0].mxu0
      %1775 = vmatprep.mubr.f32.mxu0 0.0
      %1776 = vmatmul.mubr.f32.gmra.mrb[0].mxu0 %v1574
      %v1777 = vpop.f32.mrb[0].mxu0
      %v1778 = vadd.f32 0.0, %v1777
      %v1779 = vpop.f32.mrb[0].mxu0
      %1780 = vmatprep.mubr.f32.mxu0 0.0
      %1781 = vmatmul.mubr.f32.gmra.mrb[0].mxu0 %v1577
      %v1782 = vpop.f32.mrb[0].mxu0
      %v1783 = vadd.f32 0.0, %v1782
      %v1784 = vpop.f32.mrb[0].mxu0
      %1785 = vmatprep.mubr.f32.mxu0 0.0
      %1786 = vmatmul.mubr.f32.gmra.mrb[0].mxu0 %v1580
      %v1787 = vpop.f32.mrb[0].mxu0
      %v1788 = vadd.f32 0.0, %v1787
      %v1789 = vpop.f32.mrb[0].mxu0
      %1790 = vmatprep.mubr.f32.mxu0 0.0
      %1791 = vmatmul.mubr.f32.gmra.mrb[0].mxu0 %v1583
      %v1792 = vpop.f32.mrb[0].mxu0
      %v1793 = vadd.f32 0.0, %v1792
      %v1794 = vpop.f32.mrb[0].mxu0
      %1795 = vmatprep.mubr.f32.mxu0 0.0
      %1796 = vmatmul.mubr.f32.gmra.mrb[0].mxu0 %v1586
      %v1797 = vpop.f32.mrb[0].mxu0
      %v1798 = vadd.f32 0.0, %v1797
      %v1799 = vpop.f32.mrb[0].mxu0
      %1800 = vmatprep.mubr.f32.mxu0 0.0
      %1801 = vmatmul.mubr.f32.gmra.mrb[0].mxu0 %v1589
      %v1802 = vpop.f32.mrb[0].mxu0
      %v1803 = vadd.f32 0.0, %v1802
      %v1804 = vpop.f32.mrb[0].mxu0
      %1805 = vmatprep.mubr.f32.mxu0 0.0
      %1806 = vmatmul.mubr.f32.gmra.mrb[0].mxu0 %v1592
      %v1807 = vpop.f32.mrb[0].mxu0
      %v1808 = vadd.f32 0.0, %v1807
      %v1809 = vpop.f32.mrb[0].mxu0
      %1810 = vmatprep.mubr.f32.mxu0 0.0
      %1811 = vmatmul.mubr.f32.gmra.mrb[0].mxu0 %v1595
      %v1812 = vpop.f32.mrb[0].mxu0
      %v1813 = vadd.f32 0.0, %v1812
      %v1814 = vpop.f32.mrb[0].mxu0
      %1815 = vmatprep.mubr.f32.mxu0 0.0
      %1816 = vmatmul.mubr.f32.gmra.mrb[0].mxu0 %v1598
      %v1817 = vpop.f32.mrb[0].mxu0
      %v1818 = vadd.f32 0.0, %v1817
      %v1819 = vpop.f32.mrb[0].mxu0
      %1820 = vmatprep.mubr.f32.mxu0 0.0
      %1821 = vmatmul.mubr.f32.gmra.mrb[0].mxu0 %v1601
      %v1822 = vpop.f32.mrb[0].mxu0
      %v1823 = vadd.f32 0.0, %v1822
      %v1824 = vpop.f32.mrb[0].mxu0
      %1825 = vmatprep.mubr.f32.mxu0 0.0
      %1826 = vmatmul.mubr.f32.gmra.mrb[0].mxu0 %v1604
      %v1827 = vpop.f32.mrb[0].mxu0
      %v1828 = vadd.f32 0.0, %v1827
      %v1829 = vpop.f32.mrb[0].mxu0
      %1830 = vmatprep.mubr.f32.mxu0 0.0
      %1831 = vmatmul.mubr.f32.gmra.mrb[0].mxu0 %v1607
      %v1832 = vpop.f32.mrb[0].mxu0
      %v1833 = vadd.f32 0.0, %v1832
      %v1834 = vpop.f32.mrb[0].mxu0
      %1835 = vmatprep.mubr.f32.mxu0 0.0
      %1836 = vmatmul.mubr.f32.gmra.mrb[0].mxu0 %v1610
      %v1837 = vpop.f32.mrb[0].mxu0
      %v1838 = vadd.f32 0.0, %v1837
      %v1839 = vpop.f32.mrb[0].mxu0
      %1840 = vmatprep.mubr.f32.mxu0 0.0
      %1841 = vmatmul.mubr.f32.gmra.mrb[0].mxu0 %v1613
      %v1842 = vpop.f32.mrb[0].mxu0
      %v1843 = vadd.f32 0.0, %v1842
      %v1844 = vpop.f32.mrb[0].mxu0
      %1845 = vmatprep.mubr.f32.mxu0 0.0
      %1846 = vmatmul.mubr.f32.gmra.mrb[0].mxu0 %v1616
      %v1847 = vpop.f32.mrb[0].mxu0
      %v1848 = vadd.f32 0.0, %v1847
      %v1849 = vpop.f32.mrb[0].mxu0
      %1850 = vmatprep.mubr.f32.mxu0 0.0
      %1851 = vmatmul.mubr.f32.gmra.mrb[0].mxu0 %v1619
      %v1852 = vpop.f32.mrb[0].mxu0
      %v1853 = vadd.f32 0.0, %v1852
      %v1854 = vpop.f32.mrb[0].mxu0
      %1855 = vmatprep.mubr.f32.mxu0 0.0
      %1856 = vmatmul.mubr.f32.gmra.mrb[0].mxu0 %v1622
      %v1857 = vpop.f32.mrb[0].mxu0
      %v1858 = vadd.f32 0.0, %v1857
      %v1859 = vpop.f32.mrb[0].mxu0
      %1860 = vmatprep.mubr.f32.mxu0 0.0
      %1861 = vmatmul.mubr.f32.gmra.mrb[0].mxu0 %v1625
      %v1862 = vpop.f32.mrb[0].mxu0
      %v1863 = vadd.f32 0.0, %v1862
      %v1864 = vpop.f32.mrb[0].mxu0
      %1865 = vmatprep.mubr.f32.mxu0 0.0
      %1866 = vmatmul.mubr.f32.gmra.mrb[0].mxu0 %v1628
      %v1867 = vpop.f32.mrb[0].mxu0
      %v1868 = vadd.f32 0.0, %v1867
      %v1869 = vpop.f32.mrb[0].mxu0
      %1870 = vmatprep.mubr.f32.mxu0 0.0
      %1871 = vmatmul.mubr.f32.gmra.mrb[0].mxu0 %v1631
      %v1872 = vpop.f32.mrb[0].mxu0
      %v1873 = vadd.f32 0.0, %v1872
      %v1874 = vpop.f32.mrb[0].mxu0
      %1875 = vmatprep.mubr.f32.mxu0 0.0
      %1876 = vmatmul.mubr.f32.gmra.mrb[0].mxu0 %v1634
      %v1877 = vpop.f32.mrb[0].mxu0
      %v1878 = vadd.f32 0.0, %v1877
      %v1879 = vpop.f32.mrb[0].mxu0
      %1880 = vdwg.mxu0
      %v1881 = vadd.f32 %v1454, %v1703
      %v1882 = vadd.f32 %v1455, %v1708
      %v1883 = vadd.f32 %v1456, %v1713
      %v1884 = vadd.f32 %v1457, %v1718
      %v1885 = vadd.f32 %v1458, %v1723
      %v1886 = vadd.f32 %v1459, %v1728
      %v1887 = vadd.f32 %v1460, %v1733
      %v1888 = vadd.f32 %v1461, %v1738
      %v1889 = vadd.f32 %v1462, %v1743
      %v1890 = vadd.f32 %v1463, %v1748
      %v1891 = vadd.f32 %v1464, %v1753
      %v1892 = vadd.f32 %v1465, %v1758
      %v1893 = vadd.f32 %v1466, %v1763
      %v1894 = vadd.f32 %v1467, %v1768
      %v1895 = vadd.f32 %v1468, %v1773
      %v1896 = vadd.f32 %v1469, %v1778
      %v1897 = vadd.f32 %v1470, %v1783
      %v1898 = vadd.f32 %v1471, %v1788
      %v1899 = vadd.f32 %v1472, %v1793
      %v1900 = vadd.f32 %v1473, %v1798
      %v1901 = vadd.f32 %v1474, %v1803
      %v1902 = vadd.f32 %v1475, %v1808
      %v1903 = vadd.f32 %v1476, %v1813
      %v1904 = vadd.f32 %v1477, %v1818
      %v1905 = vadd.f32 %v1478, %v1823
      %v1906 = vadd.f32 %v1479, %v1828
      %v1907 = vadd.f32 %v1480, %v1833
      %v1908 = vadd.f32 %v1481, %v1838
      %v1909 = vadd.f32 %v1482, %v1843
      %v1910 = vadd.f32 %v1483, %v1848
      %v1911 = vadd.f32 %v1484, %v1853
      %v1912 = vadd.f32 %v1485, %v1858
      %v1913 = vadd.f32 %v1486, %v1863
      %v1914 = vadd.f32 %v1487, %v1868
      %v1915 = vadd.f32 %v1488, %v1873
      %v1916 = vadd.f32 %v1489, %v1878
      %v1917 = vld [vmem:[%s225 + $0x13] sm:$0xff]
      %v1918 = vld [vmem:[%s225 + $0x1b] sm:$0xff]
      %v1919 = vld [vmem:[%s225 + $0x23] sm:$0xff]
      %v1920 = vld [vmem:[%s225 + $0x2b] sm:$0xff]
      %v1921 = vld [vmem:[%s225 + $0x33] sm:$0xff]
      %v1922 = vld [vmem:[%s225 + $0x3b] sm:$0xff]
      %v1923 = vld [vmem:[%s225 + $0x43] sm:$0xff]
      %v1924 = vld [vmem:[%s225 + $0x4b] sm:$0xff]
      %v1925 = vld [vmem:[%s225 + $0x53] sm:$0xff]
      %v1926 = vld [vmem:[%s225 + $0x5b] sm:$0xff]
      %v1927 = vld [vmem:[%s225 + $0x63] sm:$0xff]
      %v1928 = vld [vmem:[%s225 + $0x6b] sm:$0xff]
      %v1929 = vld [vmem:[%s225 + $0x73] sm:$0xff]
      %v1930 = vld [vmem:[%s225 + $0x7b] sm:$0xff]
      %v1931 = vld [vmem:[%s225 + $0x83] sm:$0xff]
      %v1932 = vld [vmem:[%s225 + $0x8b] sm:$0xff]
      %v1933 = vld [vmem:[%s225 + $0x93] sm:$0xff]
      %v1934 = vld [vmem:[%s225 + $0x9b] sm:$0xff]
      %v1935 = vld [vmem:[%s225 + $0xa3] sm:$0xff]
      %v1936 = vld [vmem:[%s225 + $0xab] sm:$0xff]
      %v1937 = vld [vmem:[%s225 + $0xb3] sm:$0xff]
      %v1938 = vld [vmem:[%s225 + $0xbb] sm:$0xff]
      %v1939 = vld [vmem:[%s225 + $0xc3] sm:$0xff]
      %v1940 = vld [vmem:[%s225 + $0xcb] sm:$0xff]
      %v1941 = vld [vmem:[%s225 + $0xd3] sm:$0xff]
      %v1942 = vld [vmem:[%s225 + $0xdb] sm:$0xff]
      %v1943 = vld [vmem:[%s225 + $0xe3] sm:$0xff]
      %v1944 = vld [vmem:[%s225 + $0xeb] sm:$0xff]
      %v1945 = vld [vmem:[%s225 + $0xf3] sm:$0xff]
      %v1946 = vld [vmem:[%s225 + $0xfb] sm:$0xff]
      %v1947 = vld [vmem:[%s225 + $0x103] sm:$0xff]
      %v1948 = vld [vmem:[%s225 + $0x10b] sm:$0xff]
      %v1949 = vld [vmem:[%s225 + $0x113] sm:$0xff]
      %v1950 = vld [vmem:[%s225 + $0x11b] sm:$0xff]
      %v1951 = vld [vmem:[%s225 + $0x123] sm:$0xff]
      %v1952 = vld [vmem:[%s225 + $0x12b] sm:$0x3f]
      %s1953 = scalar_lea.vmem %s231, 32
      %v1954 = vld [vmem:[%s1953] sm:$0xff]
      %v1956 = vsel %vm356, %v1917, 0
      %v1959 = vsel %vm356, %v1918, 0
      %v1962 = vsel %vm356, %v1919, 0
      %v1965 = vsel %vm356, %v1920, 0
      %v1968 = vsel %vm356, %v1921, 0
      %v1971 = vsel %vm356, %v1922, 0
      %v1974 = vsel %vm356, %v1923, 0
      %v1977 = vsel %vm356, %v1924, 0
      %v1980 = vsel %vm356, %v1925, 0
      %v1983 = vsel %vm356, %v1926, 0
      %v1986 = vsel %vm356, %v1927, 0
      %v1989 = vsel %vm356, %v1928, 0
      %v1992 = vsel %vm356, %v1929, 0
      %v1995 = vsel %vm356, %v1930, 0
      %v1998 = vsel %vm356, %v1931, 0
      %v2001 = vsel %vm356, %v1932, 0
      %v2004 = vsel %vm356, %v1933, 0
      %v2007 = vsel %vm356, %v1934, 0
      %v2010 = vsel %vm356, %v1935, 0
      %v2013 = vsel %vm356, %v1936, 0
      %v2016 = vsel %vm356, %v1937, 0
      %v2019 = vsel %vm356, %v1938, 0
      %v2022 = vsel %vm356, %v1939, 0
      %v2025 = vsel %vm356, %v1940, 0
      %v2028 = vsel %vm356, %v1941, 0
      %v2031 = vsel %vm356, %v1942, 0
      %v2034 = vsel %vm356, %v1943, 0
      %v2037 = vsel %vm356, %v1944, 0
      %v2040 = vsel %vm356, %v1945, 0
      %v2043 = vsel %vm356, %v1946, 0
      %v2046 = vsel %vm356, %v1947, 0
      %v2049 = vsel %vm356, %v1948, 0
      %v2052 = vsel %vm356, %v1949, 0
      %v2055 = vsel %vm356, %v1950, 0
      %v2058 = vsel %vm356, %v1951, 0
      %v2061 = vsel %vm356, %v1952, 0
      %2063 = vmatprep.subr.mxu0 0.0
      %2064 = vmatpush1.msra.mxu0 %v1954
      %2065 = vmatprep.subr.mxu0 0.0
      %2066 = vmatpush1.msra.mxu0 0.0
      %2067 = vmatprep.subr.mxu0 0.0
      %2068 = vmatpush1.msra.mxu0 0.0
      %2069 = vmatprep.subr.mxu0 0.0
      %2070 = vmatpush1.msra.mxu0 0.0
      %2071 = vmatprep.subr.mxu0 0.0
      %2072 = vmatpush1.msra.mxu0 0.0
      %2073 = vmatprep.subr.mxu0 0.0
      %2074 = vmatpush1.msra.mxu0 0.0
      %2075 = vmatprep.subr.mxu0 0.0
      %2076 = vmatpush1.msra.mxu0 0.0
      %2077 = vmatprep.subr.mxu0 0.0
      %2078 = vmatpush1.msra.mxu0 0.0
      %2079 = vmatprep.subr.mxu0 0.0
      %2080 = vmatpush1.msra.mxu0 0.0
      %2081 = vmatprep.subr.mxu0 0.0
      %2082 = vmatpush1.msra.mxu0 0.0
      %2083 = vmatprep.subr.mxu0 0.0
      %2084 = vmatpush1.msra.mxu0 0.0
      %2085 = vmatprep.subr.mxu0 0.0
      %2086 = vmatpush1.msra.mxu0 0.0
      %2087 = vmatprep.subr.mxu0 0.0
      %2088 = vmatpush1.msra.mxu0 0.0
      %2089 = vmatprep.subr.mxu0 0.0
      %2090 = vmatpush1.msra.mxu0 0.0
      %2091 = vmatprep.subr.mxu0 0.0
      %2092 = vmatpush1.msra.mxu0 0.0
      %2093 = vmatprep.subr.mxu0 0.0
      %2094 = vmatpush1.msra.mxu0 0.0
      %2095 = vmatprep.subr.mxu0 0.0
      %2096 = vmatpush1.msra.mxu0 0.0
      %2097 = vmatprep.subr.mxu0 0.0
      %2098 = vmatpush1.msra.mxu0 0.0
      %2099 = vmatprep.subr.mxu0 0.0
      %2100 = vmatpush1.msra.mxu0 0.0
      %2101 = vmatprep.subr.mxu0 0.0
      %2102 = vmatpush1.msra.mxu0 0.0
      %2103 = vmatprep.subr.mxu0 0.0
      %2104 = vmatpush1.msra.mxu0 0.0
      %2105 = vmatprep.subr.mxu0 0.0
      %2106 = vmatpush1.msra.mxu0 0.0
      %2107 = vmatprep.subr.mxu0 0.0
      %2108 = vmatpush1.msra.mxu0 0.0
      %2109 = vmatprep.subr.mxu0 0.0
      %2110 = vmatpush1.msra.mxu0 0.0
      %2111 = vmatprep.subr.mxu0 0.0
      %2112 = vmatpush1.msra.mxu0 0.0
      %2113 = vmatprep.subr.mxu0 0.0
      %2114 = vmatpush1.msra.mxu0 0.0
      %2115 = vmatprep.subr.mxu0 0.0
      %2116 = vmatpush1.msra.mxu0 0.0
      %2117 = vmatprep.subr.mxu0 0.0
      %2118 = vmatpush1.msra.mxu0 0.0
      %2119 = vmatprep.subr.mxu0 0.0
      %2120 = vmatpush1.msra.mxu0 0.0
      %2121 = vmatprep.subr.mxu0 0.0
      %2122 = vmatpush1.msra.mxu0 0.0
      %2123 = vmatprep.subr.mxu0 0.0
      %2124 = vmatpush1.msra.mxu0 0.0
      %2125 = vmatprep.subr.mxu0 0.0
      %2126 = vmatpush1.msra.mxu0 0.0
      %2127 = vmatprep.mubr.f32.mxu0 0.0
      %2128 = vmatmul.mubr.f32.gmra.mrb[0].mxu0 %v1956
      %v2129 = vpop.f32.mrb[0].mxu0
      %v2130 = vadd.f32 0.0, %v2129
      %v2131 = vpop.f32.mrb[0].mxu0
      %2132 = vmatprep.mubr.f32.mxu0 0.0
      %2133 = vmatmul.mubr.f32.gmra.mrb[0].mxu0 %v1959
      %v2134 = vpop.f32.mrb[0].mxu0
      %v2135 = vadd.f32 0.0, %v2134
      %v2136 = vpop.f32.mrb[0].mxu0
      %2137 = vmatprep.mubr.f32.mxu0 0.0
      %2138 = vmatmul.mubr.f32.gmra.mrb[0].mxu0 %v1962
      %v2139 = vpop.f32.mrb[0].mxu0
      %v2140 = vadd.f32 0.0, %v2139
      %v2141 = vpop.f32.mrb[0].mxu0
      %2142 = vmatprep.mubr.f32.mxu0 0.0
      %2143 = vmatmul.mubr.f32.gmra.mrb[0].mxu0 %v1965
      %v2144 = vpop.f32.mrb[0].mxu0
      %v2145 = vadd.f32 0.0, %v2144
      %v2146 = vpop.f32.mrb[0].mxu0
      %2147 = vmatprep.mubr.f32.mxu0 0.0
      %2148 = vmatmul.mubr.f32.gmra.mrb[0].mxu0 %v1968
      %v2149 = vpop.f32.mrb[0].mxu0
      %v2150 = vadd.f32 0.0, %v2149
      %v2151 = vpop.f32.mrb[0].mxu0
      %2152 = vmatprep.mubr.f32.mxu0 0.0
      %2153 = vmatmul.mubr.f32.gmra.mrb[0].mxu0 %v1971
      %v2154 = vpop.f32.mrb[0].mxu0
      %v2155 = vadd.f32 0.0, %v2154
      %v2156 = vpop.f32.mrb[0].mxu0
      %2157 = vmatprep.mubr.f32.mxu0 0.0
      %2158 = vmatmul.mubr.f32.gmra.mrb[0].mxu0 %v1974
      %v2159 = vpop.f32.mrb[0].mxu0
      %v2160 = vadd.f32 0.0, %v2159
      %v2161 = vpop.f32.mrb[0].mxu0
      %2162 = vmatprep.mubr.f32.mxu0 0.0
      %2163 = vmatmul.mubr.f32.gmra.mrb[0].mxu0 %v1977
      %v2164 = vpop.f32.mrb[0].mxu0
      %v2165 = vadd.f32 0.0, %v2164
      %v2166 = vpop.f32.mrb[0].mxu0
      %2167 = vmatprep.mubr.f32.mxu0 0.0
      %2168 = vmatmul.mubr.f32.gmra.mrb[0].mxu0 %v1980
      %v2169 = vpop.f32.mrb[0].mxu0
      %v2170 = vadd.f32 0.0, %v2169
      %v2171 = vpop.f32.mrb[0].mxu0
      %2172 = vmatprep.mubr.f32.mxu0 0.0
      %2173 = vmatmul.mubr.f32.gmra.mrb[0].mxu0 %v1983
      %v2174 = vpop.f32.mrb[0].mxu0
      %v2175 = vadd.f32 0.0, %v2174
      %v2176 = vpop.f32.mrb[0].mxu0
      %2177 = vmatprep.mubr.f32.mxu0 0.0
      %2178 = vmatmul.mubr.f32.gmra.mrb[0].mxu0 %v1986
      %v2179 = vpop.f32.mrb[0].mxu0
      %v2180 = vadd.f32 0.0, %v2179
      %v2181 = vpop.f32.mrb[0].mxu0
      %2182 = vmatprep.mubr.f32.mxu0 0.0
      %2183 = vmatmul.mubr.f32.gmra.mrb[0].mxu0 %v1989
      %v2184 = vpop.f32.mrb[0].mxu0
      %v2185 = vadd.f32 0.0, %v2184
      %v2186 = vpop.f32.mrb[0].mxu0
      %2187 = vmatprep.mubr.f32.mxu0 0.0
      %2188 = vmatmul.mubr.f32.gmra.mrb[0].mxu0 %v1992
      %v2189 = vpop.f32.mrb[0].mxu0
      %v2190 = vadd.f32 0.0, %v2189
      %v2191 = vpop.f32.mrb[0].mxu0
      %2192 = vmatprep.mubr.f32.mxu0 0.0
      %2193 = vmatmul.mubr.f32.gmra.mrb[0].mxu0 %v1995
      %v2194 = vpop.f32.mrb[0].mxu0
      %v2195 = vadd.f32 0.0, %v2194
      %v2196 = vpop.f32.mrb[0].mxu0
      %2197 = vmatprep.mubr.f32.mxu0 0.0
      %2198 = vmatmul.mubr.f32.gmra.mrb[0].mxu0 %v1998
      %v2199 = vpop.f32.mrb[0].mxu0
      %v2200 = vadd.f32 0.0, %v2199
      %v2201 = vpop.f32.mrb[0].mxu0
      %2202 = vmatprep.mubr.f32.mxu0 0.0
      %2203 = vmatmul.mubr.f32.gmra.mrb[0].mxu0 %v2001
      %v2204 = vpop.f32.mrb[0].mxu0
      %v2205 = vadd.f32 0.0, %v2204
      %v2206 = vpop.f32.mrb[0].mxu0
      %2207 = vmatprep.mubr.f32.mxu0 0.0
      %2208 = vmatmul.mubr.f32.gmra.mrb[0].mxu0 %v2004
      %v2209 = vpop.f32.mrb[0].mxu0
      %v2210 = vadd.f32 0.0, %v2209
      %v2211 = vpop.f32.mrb[0].mxu0
      %2212 = vmatprep.mubr.f32.mxu0 0.0
      %2213 = vmatmul.mubr.f32.gmra.mrb[0].mxu0 %v2007
      %v2214 = vpop.f32.mrb[0].mxu0
      %v2215 = vadd.f32 0.0, %v2214
      %v2216 = vpop.f32.mrb[0].mxu0
      %2217 = vmatprep.mubr.f32.mxu0 0.0
      %2218 = vmatmul.mubr.f32.gmra.mrb[0].mxu0 %v2010
      %v2219 = vpop.f32.mrb[0].mxu0
      %v2220 = vadd.f32 0.0, %v2219
      %v2221 = vpop.f32.mrb[0].mxu0
      %2222 = vmatprep.mubr.f32.mxu0 0.0
      %2223 = vmatmul.mubr.f32.gmra.mrb[0].mxu0 %v2013
      %v2224 = vpop.f32.mrb[0].mxu0
      %v2225 = vadd.f32 0.0, %v2224
      %v2226 = vpop.f32.mrb[0].mxu0
      %2227 = vmatprep.mubr.f32.mxu0 0.0
      %2228 = vmatmul.mubr.f32.gmra.mrb[0].mxu0 %v2016
      %v2229 = vpop.f32.mrb[0].mxu0
      %v2230 = vadd.f32 0.0, %v2229
      %v2231 = vpop.f32.mrb[0].mxu0
      %2232 = vmatprep.mubr.f32.mxu0 0.0
      %2233 = vmatmul.mubr.f32.gmra.mrb[0].mxu0 %v2019
      %v2234 = vpop.f32.mrb[0].mxu0
      %v2235 = vadd.f32 0.0, %v2234
      %v2236 = vpop.f32.mrb[0].mxu0
      %2237 = vmatprep.mubr.f32.mxu0 0.0
      %2238 = vmatmul.mubr.f32.gmra.mrb[0].mxu0 %v2022
      %v2239 = vpop.f32.mrb[0].mxu0
      %v2240 = vadd.f32 0.0, %v2239
      %v2241 = vpop.f32.mrb[0].mxu0
      %2242 = vmatprep.mubr.f32.mxu0 0.0
      %2243 = vmatmul.mubr.f32.gmra.mrb[0].mxu0 %v2025
      %v2244 = vpop.f32.mrb[0].mxu0
      %v2245 = vadd.f32 0.0, %v2244
      %v2246 = vpop.f32.mrb[0].mxu0
      %2247 = vmatprep.mubr.f32.mxu0 0.0
      %2248 = vmatmul.mubr.f32.gmra.mrb[0].mxu0 %v2028
      %v2249 = vpop.f32.mrb[0].mxu0
      %v2250 = vadd.f32 0.0, %v2249
      %v2251 = vpop.f32.mrb[0].mxu0
      %2252 = vmatprep.mubr.f32.mxu0 0.0
      %2253 = vmatmul.mubr.f32.gmra.mrb[0].mxu0 %v2031
      %v2254 = vpop.f32.mrb[0].mxu0
      %v2255 = vadd.f32 0.0, %v2254
      %v2256 = vpop.f32.mrb[0].mxu0
      %2257 = vmatprep.mubr.f32.mxu0 0.0
      %2258 = vmatmul.mubr.f32.gmra.mrb[0].mxu0 %v2034
      %v2259 = vpop.f32.mrb[0].mxu0
      %v2260 = vadd.f32 0.0, %v2259
      %v2261 = vpop.f32.mrb[0].mxu0
      %2262 = vmatprep.mubr.f32.mxu0 0.0
      %2263 = vmatmul.mubr.f32.gmra.mrb[0].mxu0 %v2037
      %v2264 = vpop.f32.mrb[0].mxu0
      %v2265 = vadd.f32 0.0, %v2264
      %v2266 = vpop.f32.mrb[0].mxu0
      %2267 = vmatprep.mubr.f32.mxu0 0.0
      %2268 = vmatmul.mubr.f32.gmra.mrb[0].mxu0 %v2040
      %v2269 = vpop.f32.mrb[0].mxu0
      %v2270 = vadd.f32 0.0, %v2269
      %v2271 = vpop.f32.mrb[0].mxu0
      %2272 = vmatprep.mubr.f32.mxu0 0.0
      %2273 = vmatmul.mubr.f32.gmra.mrb[0].mxu0 %v2043
      %v2274 = vpop.f32.mrb[0].mxu0
      %v2275 = vadd.f32 0.0, %v2274
      %v2276 = vpop.f32.mrb[0].mxu0
      %2277 = vmatprep.mubr.f32.mxu0 0.0
      %2278 = vmatmul.mubr.f32.gmra.mrb[0].mxu0 %v2046
      %v2279 = vpop.f32.mrb[0].mxu0
      %v2280 = vadd.f32 0.0, %v2279
      %v2281 = vpop.f32.mrb[0].mxu0
      %2282 = vmatprep.mubr.f32.mxu0 0.0
      %2283 = vmatmul.mubr.f32.gmra.mrb[0].mxu0 %v2049
      %v2284 = vpop.f32.mrb[0].mxu0
      %v2285 = vadd.f32 0.0, %v2284
      %v2286 = vpop.f32.mrb[0].mxu0
      %2287 = vmatprep.mubr.f32.mxu0 0.0
      %2288 = vmatmul.mubr.f32.gmra.mrb[0].mxu0 %v2052
      %v2289 = vpop.f32.mrb[0].mxu0
      %v2290 = vadd.f32 0.0, %v2289
      %v2291 = vpop.f32.mrb[0].mxu0
      %2292 = vmatprep.mubr.f32.mxu0 0.0
      %2293 = vmatmul.mubr.f32.gmra.mrb[0].mxu0 %v2055
      %v2294 = vpop.f32.mrb[0].mxu0
      %v2295 = vadd.f32 0.0, %v2294
      %v2296 = vpop.f32.mrb[0].mxu0
      %2297 = vmatprep.mubr.f32.mxu0 0.0
      %2298 = vmatmul.mubr.f32.gmra.mrb[0].mxu0 %v2058
      %v2299 = vpop.f32.mrb[0].mxu0
      %v2300 = vadd.f32 0.0, %v2299
      %v2301 = vpop.f32.mrb[0].mxu0
      %2302 = vmatprep.mubr.f32.mxu0 0.0
      %2303 = vmatmul.mubr.f32.gmra.mrb[0].mxu0 %v2061
      %v2304 = vpop.f32.mrb[0].mxu0
      %v2305 = vadd.f32 0.0, %v2304
      %v2306 = vpop.f32.mrb[0].mxu0
      %2307 = vdwg.mxu0
      %v2308 = vadd.f32 %v1881, %v2130
      %v2309 = vadd.f32 %v1882, %v2135
      %v2310 = vadd.f32 %v1883, %v2140
      %v2311 = vadd.f32 %v1884, %v2145
      %v2312 = vadd.f32 %v1885, %v2150
      %v2313 = vadd.f32 %v1886, %v2155
      %v2314 = vadd.f32 %v1887, %v2160
      %v2315 = vadd.f32 %v1888, %v2165
      %v2316 = vadd.f32 %v1889, %v2170
      %v2317 = vadd.f32 %v1890, %v2175
      %v2318 = vadd.f32 %v1891, %v2180
      %v2319 = vadd.f32 %v1892, %v2185
      %v2320 = vadd.f32 %v1893, %v2190
      %v2321 = vadd.f32 %v1894, %v2195
      %v2322 = vadd.f32 %v1895, %v2200
      %v2323 = vadd.f32 %v1896, %v2205
      %v2324 = vadd.f32 %v1897, %v2210
      %v2325 = vadd.f32 %v1898, %v2215
      %v2326 = vadd.f32 %v1899, %v2220
      %v2327 = vadd.f32 %v1900, %v2225
      %v2328 = vadd.f32 %v1901, %v2230
      %v2329 = vadd.f32 %v1902, %v2235
      %v2330 = vadd.f32 %v1903, %v2240
      %v2331 = vadd.f32 %v1904, %v2245
      %v2332 = vadd.f32 %v1905, %v2250
      %v2333 = vadd.f32 %v1906, %v2255
      %v2334 = vadd.f32 %v1907, %v2260
      %v2335 = vadd.f32 %v1908, %v2265
      %v2336 = vadd.f32 %v1909, %v2270
      %v2337 = vadd.f32 %v1910, %v2275
      %v2338 = vadd.f32 %v1911, %v2280
      %v2339 = vadd.f32 %v1912, %v2285
      %v2340 = vadd.f32 %v1913, %v2290
      %v2341 = vadd.f32 %v1914, %v2295
      %v2342 = vadd.f32 %v1915, %v2300
      %v2343 = vadd.f32 %v1916, %v2305
      %v2344 = vld [vmem:[%s225 + $0x14] sm:$0xff]
      %v2345 = vld [vmem:[%s225 + $0x1c] sm:$0xff]
      %v2346 = vld [vmem:[%s225 + $0x24] sm:$0xff]
      %v2347 = vld [vmem:[%s225 + $0x2c] sm:$0xff]
      %v2348 = vld [vmem:[%s225 + $0x34] sm:$0xff]
      %v2349 = vld [vmem:[%s225 + $0x3c] sm:$0xff]
      %v2350 = vld [vmem:[%s225 + $0x44] sm:$0xff]
      %v2351 = vld [vmem:[%s225 + $0x4c] sm:$0xff]
      %v2352 = vld [vmem:[%s225 + $0x54] sm:$0xff]
      %v2353 = vld [vmem:[%s225 + $0x5c] sm:$0xff]
      %v2354 = vld [vmem:[%s225 + $0x64] sm:$0xff]
      %v2355 = vld [vmem:[%s225 + $0x6c] sm:$0xff]
      %v2356 = vld [vmem:[%s225 + $0x74] sm:$0xff]
      %v2357 = vld [vmem:[%s225 + $0x7c] sm:$0xff]
      %v2358 = vld [vmem:[%s225 + $0x84] sm:$0xff]
      %v2359 = vld [vmem:[%s225 + $0x8c] sm:$0xff]
      %v2360 = vld [vmem:[%s225 + $0x94] sm:$0xff]
      %v2361 = vld [vmem:[%s225 + $0x9c] sm:$0xff]
      %v2362 = vld [vmem:[%s225 + $0xa4] sm:$0xff]
      %v2363 = vld [vmem:[%s225 + $0xac] sm:$0xff]
      %v2364 = vld [vmem:[%s225 + $0xb4] sm:$0xff]
      %v2365 = vld [vmem:[%s225 + $0xbc] sm:$0xff]
      %v2366 = vld [vmem:[%s225 + $0xc4] sm:$0xff]
      %v2367 = vld [vmem:[%s225 + $0xcc] sm:$0xff]
      %v2368 = vld [vmem:[%s225 + $0xd4] sm:$0xff]
      %v2369 = vld [vmem:[%s225 + $0xdc] sm:$0xff]
      %v2370 = vld [vmem:[%s225 + $0xe4] sm:$0xff]
      %v2371 = vld [vmem:[%s225 + $0xec] sm:$0xff]
      %v2372 = vld [vmem:[%s225 + $0xf4] sm:$0xff]
      %v2373 = vld [vmem:[%s225 + $0xfc] sm:$0xff]
      %v2374 = vld [vmem:[%s225 + $0x104] sm:$0xff]
      %v2375 = vld [vmem:[%s225 + $0x10c] sm:$0xff]
      %v2376 = vld [vmem:[%s225 + $0x114] sm:$0xff]
      %v2377 = vld [vmem:[%s225 + $0x11c] sm:$0xff]
      %v2378 = vld [vmem:[%s225 + $0x124] sm:$0xff]
      %v2379 = vld [vmem:[%s225 + $0x12c] sm:$0x3f]
      %s2380 = scalar_lea.vmem %s231, 40
      %v2381 = vld [vmem:[%s2380] sm:$0xff]
      %v2383 = vsel %vm356, %v2344, 0
      %v2386 = vsel %vm356, %v2345, 0
      %v2389 = vsel %vm356, %v2346, 0
      %v2392 = vsel %vm356, %v2347, 0
      %v2395 = vsel %vm356, %v2348, 0
      %v2398 = vsel %vm356, %v2349, 0
      %v2401 = vsel %vm356, %v2350, 0
      %v2404 = vsel %vm356, %v2351, 0
      %v2407 = vsel %vm356, %v2352, 0
      %v2410 = vsel %vm356, %v2353, 0
      %v2413 = vsel %vm356, %v2354, 0
      %v2416 = vsel %vm356, %v2355, 0
      %v2419 = vsel %vm356, %v2356, 0
      %v2422 = vsel %vm356, %v2357, 0
      %v2425 = vsel %vm356, %v2358, 0
      %v2428 = vsel %vm356, %v2359, 0
      %v2431 = vsel %vm356, %v2360, 0
      %v2434 = vsel %vm356, %v2361, 0
      %v2437 = vsel %vm356, %v2362, 0
      %v2440 = vsel %vm356, %v2363, 0
      %v2443 = vsel %vm356, %v2364, 0
      %v2446 = vsel %vm356, %v2365, 0
      %v2449 = vsel %vm356, %v2366, 0
      %v2452 = vsel %vm356, %v2367, 0
      %v2455 = vsel %vm356, %v2368, 0
      %v2458 = vsel %vm356, %v2369, 0
      %v2461 = vsel %vm356, %v2370, 0
      %v2464 = vsel %vm356, %v2371, 0
      %v2467 = vsel %vm356, %v2372, 0
      %v2470 = vsel %vm356, %v2373, 0
      %v2473 = vsel %vm356, %v2374, 0
      %v2476 = vsel %vm356, %v2375, 0
      %v2479 = vsel %vm356, %v2376, 0
      %v2482 = vsel %vm356, %v2377, 0
      %v2485 = vsel %vm356, %v2378, 0
      %v2488 = vsel %vm356, %v2379, 0
      %2490 = vmatprep.subr.mxu0 0.0
      %2491 = vmatpush1.msra.mxu0 %v2381
      %2492 = vmatprep.subr.mxu0 0.0
      %2493 = vmatpush1.msra.mxu0 0.0
      %2494 = vmatprep.subr.mxu0 0.0
      %2495 = vmatpush1.msra.mxu0 0.0
      %2496 = vmatprep.subr.mxu0 0.0
      %2497 = vmatpush1.msra.mxu0 0.0
      %2498 = vmatprep.subr.mxu0 0.0
      %2499 = vmatpush1.msra.mxu0 0.0
      %2500 = vmatprep.subr.mxu0 0.0
      %2501 = vmatpush1.msra.mxu0 0.0
      %2502 = vmatprep.subr.mxu0 0.0
      %2503 = vmatpush1.msra.mxu0 0.0
      %2504 = vmatprep.subr.mxu0 0.0
      %2505 = vmatpush1.msra.mxu0 0.0
      %2506 = vmatprep.subr.mxu0 0.0
      %2507 = vmatpush1.msra.mxu0 0.0
      %2508 = vmatprep.subr.mxu0 0.0
      %2509 = vmatpush1.msra.mxu0 0.0
      %2510 = vmatprep.subr.mxu0 0.0
      %2511 = vmatpush1.msra.mxu0 0.0
      %2512 = vmatprep.subr.mxu0 0.0
      %2513 = vmatpush1.msra.mxu0 0.0
      %2514 = vmatprep.subr.mxu0 0.0
      %2515 = vmatpush1.msra.mxu0 0.0
      %2516 = vmatprep.subr.mxu0 0.0
      %2517 = vmatpush1.msra.mxu0 0.0
      %2518 = vmatprep.subr.mxu0 0.0
      %2519 = vmatpush1.msra.mxu0 0.0
      %2520 = vmatprep.subr.mxu0 0.0
      %2521 = vmatpush1.msra.mxu0 0.0
      %2522 = vmatprep.subr.mxu0 0.0
      %2523 = vmatpush1.msra.mxu0 0.0
      %2524 = vmatprep.subr.mxu0 0.0
      %2525 = vmatpush1.msra.mxu0 0.0
      %2526 = vmatprep.subr.mxu0 0.0
      %2527 = vmatpush1.msra.mxu0 0.0
      %2528 = vmatprep.subr.mxu0 0.0
      %2529 = vmatpush1.msra.mxu0 0.0
      %2530 = vmatprep.subr.mxu0 0.0
      %2531 = vmatpush1.msra.mxu0 0.0
      %2532 = vmatprep.subr.mxu0 0.0
      %2533 = vmatpush1.msra.mxu0 0.0
      %2534 = vmatprep.subr.mxu0 0.0
      %2535 = vmatpush1.msra.mxu0 0.0
      %2536 = vmatprep.subr.mxu0 0.0
      %2537 = vmatpush1.msra.mxu0 0.0
      %2538 = vmatprep.subr.mxu0 0.0
      %2539 = vmatpush1.msra.mxu0 0.0
      %2540 = vmatprep.subr.mxu0 0.0
      %2541 = vmatpush1.msra.mxu0 0.0
      %2542 = vmatprep.subr.mxu0 0.0
      %2543 = vmatpush1.msra.mxu0 0.0
      %2544 = vmatprep.subr.mxu0 0.0
      %2545 = vmatpush1.msra.mxu0 0.0
      %2546 = vmatprep.subr.mxu0 0.0
      %2547 = vmatpush1.msra.mxu0 0.0
      %2548 = vmatprep.subr.mxu0 0.0
      %2549 = vmatpush1.msra.mxu0 0.0
      %2550 = vmatprep.subr.mxu0 0.0
      %2551 = vmatpush1.msra.mxu0 0.0
      %2552 = vmatprep.subr.mxu0 0.0
      %2553 = vmatpush1.msra.mxu0 0.0
      %2554 = vmatprep.mubr.f32.mxu0 0.0
      %2555 = vmatmul.mubr.f32.gmra.mrb[0].mxu0 %v2383
      %v2556 = vpop.f32.mrb[0].mxu0
      %v2557 = vadd.f32 0.0, %v2556
      %v2558 = vpop.f32.mrb[0].mxu0
      %2559 = vmatprep.mubr.f32.mxu0 0.0
      %2560 = vmatmul.mubr.f32.gmra.mrb[0].mxu0 %v2386
      %v2561 = vpop.f32.mrb[0].mxu0
      %v2562 = vadd.f32 0.0, %v2561
      %v2563 = vpop.f32.mrb[0].mxu0
      %2564 = vmatprep.mubr.f32.mxu0 0.0
      %2565 = vmatmul.mubr.f32.gmra.mrb[0].mxu0 %v2389
      %v2566 = vpop.f32.mrb[0].mxu0
      %v2567 = vadd.f32 0.0, %v2566
      %v2568 = vpop.f32.mrb[0].mxu0
      %2569 = vmatprep.mubr.f32.mxu0 0.0
      %2570 = vmatmul.mubr.f32.gmra.mrb[0].mxu0 %v2392
      %v2571 = vpop.f32.mrb[0].mxu0
      %v2572 = vadd.f32 0.0, %v2571
      %v2573 = vpop.f32.mrb[0].mxu0
      %2574 = vmatprep.mubr.f32.mxu0 0.0
      %2575 = vmatmul.mubr.f32.gmra.mrb[0].mxu0 %v2395
      %v2576 = vpop.f32.mrb[0].mxu0
      %v2577 = vadd.f32 0.0, %v2576
      %v2578 = vpop.f32.mrb[0].mxu0
      %2579 = vmatprep.mubr.f32.mxu0 0.0
      %2580 = vmatmul.mubr.f32.gmra.mrb[0].mxu0 %v2398
      %v2581 = vpop.f32.mrb[0].mxu0
      %v2582 = vadd.f32 0.0, %v2581
      %v2583 = vpop.f32.mrb[0].mxu0
      %2584 = vmatprep.mubr.f32.mxu0 0.0
      %2585 = vmatmul.mubr.f32.gmra.mrb[0].mxu0 %v2401
      %v2586 = vpop.f32.mrb[0].mxu0
      %v2587 = vadd.f32 0.0, %v2586
      %v2588 = vpop.f32.mrb[0].mxu0
      %2589 = vmatprep.mubr.f32.mxu0 0.0
      %2590 = vmatmul.mubr.f32.gmra.mrb[0].mxu0 %v2404
      %v2591 = vpop.f32.mrb[0].mxu0
      %v2592 = vadd.f32 0.0, %v2591
      %v2593 = vpop.f32.mrb[0].mxu0
      %2594 = vmatprep.mubr.f32.mxu0 0.0
      %2595 = vmatmul.mubr.f32.gmra.mrb[0].mxu0 %v2407
      %v2596 = vpop.f32.mrb[0].mxu0
      %v2597 = vadd.f32 0.0, %v2596
      %v2598 = vpop.f32.mrb[0].mxu0
      %2599 = vmatprep.mubr.f32.mxu0 0.0
      %2600 = vmatmul.mubr.f32.gmra.mrb[0].mxu0 %v2410
      %v2601 = vpop.f32.mrb[0].mxu0
      %v2602 = vadd.f32 0.0, %v2601
      %v2603 = vpop.f32.mrb[0].mxu0
      %2604 = vmatprep.mubr.f32.mxu0 0.0
      %2605 = vmatmul.mubr.f32.gmra.mrb[0].mxu0 %v2413
      %v2606 = vpop.f32.mrb[0].mxu0
      %v2607 = vadd.f32 0.0, %v2606
      %v2608 = vpop.f32.mrb[0].mxu0
      %2609 = vmatprep.mubr.f32.mxu0 0.0
      %2610 = vmatmul.mubr.f32.gmra.mrb[0].mxu0 %v2416
      %v2611 = vpop.f32.mrb[0].mxu0
      %v2612 = vadd.f32 0.0, %v2611
      %v2613 = vpop.f32.mrb[0].mxu0
      %2614 = vmatprep.mubr.f32.mxu0 0.0
      %2615 = vmatmul.mubr.f32.gmra.mrb[0].mxu0 %v2419
      %v2616 = vpop.f32.mrb[0].mxu0
      %v2617 = vadd.f32 0.0, %v2616
      %v2618 = vpop.f32.mrb[0].mxu0
      %2619 = vmatprep.mubr.f32.mxu0 0.0
      %2620 = vmatmul.mubr.f32.gmra.mrb[0].mxu0 %v2422
      %v2621 = vpop.f32.mrb[0].mxu0
      %v2622 = vadd.f32 0.0, %v2621
      %v2623 = vpop.f32.mrb[0].mxu0
      %2624 = vmatprep.mubr.f32.mxu0 0.0
      %2625 = vmatmul.mubr.f32.gmra.mrb[0].mxu0 %v2425
      %v2626 = vpop.f32.mrb[0].mxu0
      %v2627 = vadd.f32 0.0, %v2626
      %v2628 = vpop.f32.mrb[0].mxu0
      %2629 = vmatprep.mubr.f32.mxu0 0.0
      %2630 = vmatmul.mubr.f32.gmra.mrb[0].mxu0 %v2428
      %v2631 = vpop.f32.mrb[0].mxu0
      %v2632 = vadd.f32 0.0, %v2631
      %v2633 = vpop.f32.mrb[0].mxu0
      %2634 = vmatprep.mubr.f32.mxu0 0.0
      %2635 = vmatmul.mubr.f32.gmra.mrb[0].mxu0 %v2431
      %v2636 = vpop.f32.mrb[0].mxu0
      %v2637 = vadd.f32 0.0, %v2636
      %v2638 = vpop.f32.mrb[0].mxu0
      %2639 = vmatprep.mubr.f32.mxu0 0.0
      %2640 = vmatmul.mubr.f32.gmra.mrb[0].mxu0 %v2434
      %v2641 = vpop.f32.mrb[0].mxu0
      %v2642 = vadd.f32 0.0, %v2641
      %v2643 = vpop.f32.mrb[0].mxu0
      %2644 = vmatprep.mubr.f32.mxu0 0.0
      %2645 = vmatmul.mubr.f32.gmra.mrb[0].mxu0 %v2437
      %v2646 = vpop.f32.mrb[0].mxu0
      %v2647 = vadd.f32 0.0, %v2646
      %v2648 = vpop.f32.mrb[0].mxu0
      %2649 = vmatprep.mubr.f32.mxu0 0.0
      %2650 = vmatmul.mubr.f32.gmra.mrb[0].mxu0 %v2440
      %v2651 = vpop.f32.mrb[0].mxu0
      %v2652 = vadd.f32 0.0, %v2651
      %v2653 = vpop.f32.mrb[0].mxu0
      %2654 = vmatprep.mubr.f32.mxu0 0.0
      %2655 = vmatmul.mubr.f32.gmra.mrb[0].mxu0 %v2443
      %v2656 = vpop.f32.mrb[0].mxu0
      %v2657 = vadd.f32 0.0, %v2656
      %v2658 = vpop.f32.mrb[0].mxu0
      %2659 = vmatprep.mubr.f32.mxu0 0.0
      %2660 = vmatmul.mubr.f32.gmra.mrb[0].mxu0 %v2446
      %v2661 = vpop.f32.mrb[0].mxu0
      %v2662 = vadd.f32 0.0, %v2661
      %v2663 = vpop.f32.mrb[0].mxu0
      %2664 = vmatprep.mubr.f32.mxu0 0.0
      %2665 = vmatmul.mubr.f32.gmra.mrb[0].mxu0 %v2449
      %v2666 = vpop.f32.mrb[0].mxu0
      %v2667 = vadd.f32 0.0, %v2666
      %v2668 = vpop.f32.mrb[0].mxu0
      %2669 = vmatprep.mubr.f32.mxu0 0.0
      %2670 = vmatmul.mubr.f32.gmra.mrb[0].mxu0 %v2452
      %v2671 = vpop.f32.mrb[0].mxu0
      %v2672 = vadd.f32 0.0, %v2671
      %v2673 = vpop.f32.mrb[0].mxu0
      %2674 = vmatprep.mubr.f32.mxu0 0.0
      %2675 = vmatmul.mubr.f32.gmra.mrb[0].mxu0 %v2455
      %v2676 = vpop.f32.mrb[0].mxu0
      %v2677 = vadd.f32 0.0, %v2676
      %v2678 = vpop.f32.mrb[0].mxu0
      %2679 = vmatprep.mubr.f32.mxu0 0.0
      %2680 = vmatmul.mubr.f32.gmra.mrb[0].mxu0 %v2458
      %v2681 = vpop.f32.mrb[0].mxu0
      %v2682 = vadd.f32 0.0, %v2681
      %v2683 = vpop.f32.mrb[0].mxu0
      %2684 = vmatprep.mubr.f32.mxu0 0.0
      %2685 = vmatmul.mubr.f32.gmra.mrb[0].mxu0 %v2461
      %v2686 = vpop.f32.mrb[0].mxu0
      %v2687 = vadd.f32 0.0, %v2686
      %v2688 = vpop.f32.mrb[0].mxu0
      %2689 = vmatprep.mubr.f32.mxu0 0.0
      %2690 = vmatmul.mubr.f32.gmra.mrb[0].mxu0 %v2464
      %v2691 = vpop.f32.mrb[0].mxu0
      %v2692 = vadd.f32 0.0, %v2691
      %v2693 = vpop.f32.mrb[0].mxu0
      %2694 = vmatprep.mubr.f32.mxu0 0.0
      %2695 = vmatmul.mubr.f32.gmra.mrb[0].mxu0 %v2467
      %v2696 = vpop.f32.mrb[0].mxu0
      %v2697 = vadd.f32 0.0, %v2696
      %v2698 = vpop.f32.mrb[0].mxu0
      %2699 = vmatprep.mubr.f32.mxu0 0.0
      %2700 = vmatmul.mubr.f32.gmra.mrb[0].mxu0 %v2470
      %v2701 = vpop.f32.mrb[0].mxu0
      %v2702 = vadd.f32 0.0, %v2701
      %v2703 = vpop.f32.mrb[0].mxu0
      %2704 = vmatprep.mubr.f32.mxu0 0.0
      %2705 = vmatmul.mubr.f32.gmra.mrb[0].mxu0 %v2473
      %v2706 = vpop.f32.mrb[0].mxu0
      %v2707 = vadd.f32 0.0, %v2706
      %v2708 = vpop.f32.mrb[0].mxu0
      %2709 = vmatprep.mubr.f32.mxu0 0.0
      %2710 = vmatmul.mubr.f32.gmra.mrb[0].mxu0 %v2476
      %v2711 = vpop.f32.mrb[0].mxu0
      %v2712 = vadd.f32 0.0, %v2711
      %v2713 = vpop.f32.mrb[0].mxu0
      %2714 = vmatprep.mubr.f32.mxu0 0.0
      %2715 = vmatmul.mubr.f32.gmra.mrb[0].mxu0 %v2479
      %v2716 = vpop.f32.mrb[0].mxu0
      %v2717 = vadd.f32 0.0, %v2716
      %v2718 = vpop.f32.mrb[0].mxu0
      %2719 = vmatprep.mubr.f32.mxu0 0.0
      %2720 = vmatmul.mubr.f32.gmra.mrb[0].mxu0 %v2482
      %v2721 = vpop.f32.mrb[0].mxu0
      %v2722 = vadd.f32 0.0, %v2721
      %v2723 = vpop.f32.mrb[0].mxu0
      %2724 = vmatprep.mubr.f32.mxu0 0.0
      %2725 = vmatmul.mubr.f32.gmra.mrb[0].mxu0 %v2485
      %v2726 = vpop.f32.mrb[0].mxu0
      %v2727 = vadd.f32 0.0, %v2726
      %v2728 = vpop.f32.mrb[0].mxu0
      %2729 = vmatprep.mubr.f32.mxu0 0.0
      %2730 = vmatmul.mubr.f32.gmra.mrb[0].mxu0 %v2488
      %v2731 = vpop.f32.mrb[0].mxu0
      %v2732 = vadd.f32 0.0, %v2731
      %v2733 = vpop.f32.mrb[0].mxu0
      %2734 = vdwg.mxu0
      %v2735 = vadd.f32 %v2308, %v2557
      %v2736 = vadd.f32 %v2309, %v2562
      %v2737 = vadd.f32 %v2310, %v2567
      %v2738 = vadd.f32 %v2311, %v2572
      %v2739 = vadd.f32 %v2312, %v2577
      %v2740 = vadd.f32 %v2313, %v2582
      %v2741 = vadd.f32 %v2314, %v2587
      %v2742 = vadd.f32 %v2315, %v2592
      %v2743 = vadd.f32 %v2316, %v2597
      %v2744 = vadd.f32 %v2317, %v2602
      %v2745 = vadd.f32 %v2318, %v2607
      %v2746 = vadd.f32 %v2319, %v2612
      %v2747 = vadd.f32 %v2320, %v2617
      %v2748 = vadd.f32 %v2321, %v2622
      %v2749 = vadd.f32 %v2322, %v2627
      %v2750 = vadd.f32 %v2323, %v2632
      %v2751 = vadd.f32 %v2324, %v2637
      %v2752 = vadd.f32 %v2325, %v2642
      %v2753 = vadd.f32 %v2326, %v2647
      %v2754 = vadd.f32 %v2327, %v2652
      %v2755 = vadd.f32 %v2328, %v2657
      %v2756 = vadd.f32 %v2329, %v2662
      %v2757 = vadd.f32 %v2330, %v2667
      %v2758 = vadd.f32 %v2331, %v2672
      %v2759 = vadd.f32 %v2332, %v2677
      %v2760 = vadd.f32 %v2333, %v2682
      %v2761 = vadd.f32 %v2334, %v2687
      %v2762 = vadd.f32 %v2335, %v2692
      %v2763 = vadd.f32 %v2336, %v2697
      %v2764 = vadd.f32 %v2337, %v2702
      %v2765 = vadd.f32 %v2338, %v2707
      %v2766 = vadd.f32 %v2339, %v2712
      %v2767 = vadd.f32 %v2340, %v2717
      %v2768 = vadd.f32 %v2341, %v2722
      %v2769 = vadd.f32 %v2342, %v2727
      %v2770 = vadd.f32 %v2343, %v2732
      %v2771 = vld [vmem:[%s225 + $0x24] sm:$0xff]
      %v2772 = vld [vmem:[%s225 + $0x2c] sm:$0xff]
      %v2773 = vld [vmem:[%s225 + $0x34] sm:$0xff]
      %v2774 = vld [vmem:[%s225 + $0x3c] sm:$0xff]
      %v2775 = vld [vmem:[%s225 + $0x44] sm:$0xff]
      %v2776 = vld [vmem:[%s225 + $0x4c] sm:$0xff]
      %v2777 = vld [vmem:[%s225 + $0x54] sm:$0xff]
      %v2778 = vld [vmem:[%s225 + $0x5c] sm:$0xff]
      %v2779 = vld [vmem:[%s225 + $0x64] sm:$0xff]
      %v2780 = vld [vmem:[%s225 + $0x6c] sm:$0xff]
      %v2781 = vld [vmem:[%s225 + $0x74] sm:$0xff]
      %v2782 = vld [vmem:[%s225 + $0x7c] sm:$0xff]
      %v2783 = vld [vmem:[%s225 + $0x84] sm:$0xff]
      %v2784 = vld [vmem:[%s225 + $0x8c] sm:$0xff]
      %v2785 = vld [vmem:[%s225 + $0x94] sm:$0xff]
      %v2786 = vld [vmem:[%s225 + $0x9c] sm:$0xff]
      %v2787 = vld [vmem:[%s225 + $0xa4] sm:$0xff]
      %v2788 = vld [vmem:[%s225 + $0xac] sm:$0xff]
      %v2789 = vld [vmem:[%s225 + $0xb4] sm:$0xff]
      %v2790 = vld [vmem:[%s225 + $0xbc] sm:$0xff]
      %v2791 = vld [vmem:[%s225 + $0xc4] sm:$0xff]
      %v2792 = vld [vmem:[%s225 + $0xcc] sm:$0xff]
      %v2793 = vld [vmem:[%s225 + $0xd4] sm:$0xff]
      %v2794 = vld [vmem:[%s225 + $0xdc] sm:$0xff]
      %v2795 = vld [vmem:[%s225 + $0xe4] sm:$0xff]
      %v2796 = vld [vmem:[%s225 + $0xec] sm:$0xff]
      %v2797 = vld [vmem:[%s225 + $0xf4] sm:$0xff]
      %v2798 = vld [vmem:[%s225 + $0xfc] sm:$0xff]
      %v2799 = vld [vmem:[%s225 + $0x104] sm:$0xff]
      %v2800 = vld [vmem:[%s225 + $0x10c] sm:$0xff]
      %v2801 = vld [vmem:[%s225 + $0x114] sm:$0xff]
      %v2802 = vld [vmem:[%s225 + $0x11c] sm:$0xff]
      %v2803 = vld [vmem:[%s225 + $0x124] sm:$0xff]
      %v2804 = vld [vmem:[%s225 + $0x12c] sm:$0xff]
      %v2805 = vld [vmem:[%s225 + $0x134] sm:$0xff]
      %v2806 = vld [vmem:[%s225 + $0x13c] sm:$0x3f]
      %s2807 = scalar_lea.vmem %s231, 48
      %v2808 = vld [vmem:[%s2807] sm:$0xff]
      %v2810 = vsel %vm356, %v2771, 0
      %v2813 = vsel %vm356, %v2772, 0
      %v2816 = vsel %vm356, %v2773, 0
      %v2819 = vsel %vm356, %v2774, 0
      %v2822 = vsel %vm356, %v2775, 0
      %v2825 = vsel %vm356, %v2776, 0
      %v2828 = vsel %vm356, %v2777, 0
      %v2831 = vsel %vm356, %v2778, 0
      %v2834 = vsel %vm356, %v2779, 0
      %v2837 = vsel %vm356, %v2780, 0
      %v2840 = vsel %vm356, %v2781, 0
      %v2843 = vsel %vm356, %v2782, 0
      %v2846 = vsel %vm356, %v2783, 0
      %v2849 = vsel %vm356, %v2784, 0
      %v2852 = vsel %vm356, %v2785, 0
      %v2855 = vsel %vm356, %v2786, 0
      %v2858 = vsel %vm356, %v2787, 0
      %v2861 = vsel %vm356, %v2788, 0
      %v2864 = vsel %vm356, %v2789, 0
      %v2867 = vsel %vm356, %v2790, 0
      %v2870 = vsel %vm356, %v2791, 0
      %v2873 = vsel %vm356, %v2792, 0
      %v2876 = vsel %vm356, %v2793, 0
      %v2879 = vsel %vm356, %v2794, 0
      %v2882 = vsel %vm356, %v2795, 0
      %v2885 = vsel %vm356, %v2796, 0
      %v2888 = vsel %vm356, %v2797, 0
      %v2891 = vsel %vm356, %v2798, 0
      %v2894 = vsel %vm356, %v2799, 0
      %v2897 = vsel %vm356, %v2800, 0
      %v2900 = vsel %vm356, %v2801, 0
      %v2903 = vsel %vm356, %v2802, 0
      %v2906 = vsel %vm356, %v2803, 0
      %v2909 = vsel %vm356, %v2804, 0
      %v2912 = vsel %vm356, %v2805, 0
      %v2915 = vsel %vm356, %v2806, 0
      %2917 = vmatprep.subr.mxu0 0.0
      %2918 = vmatpush1.msra.mxu0 %v2808
      %2919 = vmatprep.subr.mxu0 0.0
      %2920 = vmatpush1.msra.mxu0 0.0
      %2921 = vmatprep.subr.mxu0 0.0
      %2922 = vmatpush1.msra.mxu0 0.0
      %2923 = vmatprep.subr.mxu0 0.0
      %2924 = vmatpush1.msra.mxu0 0.0
      %2925 = vmatprep.subr.mxu0 0.0
      %2926 = vmatpush1.msra.mxu0 0.0
      %2927 = vmatprep.subr.mxu0 0.0
      %2928 = vmatpush1.msra.mxu0 0.0
      %2929 = vmatprep.subr.mxu0 0.0
      %2930 = vmatpush1.msra.mxu0 0.0
      %2931 = vmatprep.subr.mxu0 0.0
      %2932 = vmatpush1.msra.mxu0 0.0
      %2933 = vmatprep.subr.mxu0 0.0
      %2934 = vmatpush1.msra.mxu0 0.0
      %2935 = vmatprep.subr.mxu0 0.0
      %2936 = vmatpush1.msra.mxu0 0.0
      %2937 = vmatprep.subr.mxu0 0.0
      %2938 = vmatpush1.msra.mxu0 0.0
      %2939 = vmatprep.subr.mxu0 0.0
      %2940 = vmatpush1.msra.mxu0 0.0
      %2941 = vmatprep.subr.mxu0 0.0
      %2942 = vmatpush1.msra.mxu0 0.0
      %2943 = vmatprep.subr.mxu0 0.0
      %2944 = vmatpush1.msra.mxu0 0.0
      %2945 = vmatprep.subr.mxu0 0.0
      %2946 = vmatpush1.msra.mxu0 0.0
      %2947 = vmatprep.subr.mxu0 0.0
      %2948 = vmatpush1.msra.mxu0 0.0
      %2949 = vmatprep.subr.mxu0 0.0
      %2950 = vmatpush1.msra.mxu0 0.0
      %2951 = vmatprep.subr.mxu0 0.0
      %2952 = vmatpush1.msra.mxu0 0.0
      %2953 = vmatprep.subr.mxu0 0.0
      %2954 = vmatpush1.msra.mxu0 0.0
      %2955 = vmatprep.subr.mxu0 0.0
      %2956 = vmatpush1.msra.mxu0 0.0
      %2957 = vmatprep.subr.mxu0 0.0
      %2958 = vmatpush1.msra.mxu0 0.0
      %2959 = vmatprep.subr.mxu0 0.0
      %2960 = vmatpush1.msra.mxu0 0.0
      %2961 = vmatprep.subr.mxu0 0.0
      %2962 = vmatpush1.msra.mxu0 0.0
      %2963 = vmatprep.subr.mxu0 0.0
      %2964 = vmatpush1.msra.mxu0 0.0
      %2965 = vmatprep.subr.mxu0 0.0
      %2966 = vmatpush1.msra.mxu0 0.0
      %2967 = vmatprep.subr.mxu0 0.0
      %2968 = vmatpush1.msra.mxu0 0.0
      %2969 = vmatprep.subr.mxu0 0.0
      %2970 = vmatpush1.msra.mxu0 0.0
      %2971 = vmatprep.subr.mxu0 0.0
      %2972 = vmatpush1.msra.mxu0 0.0
      %2973 = vmatprep.subr.mxu0 0.0
      %2974 = vmatpush1.msra.mxu0 0.0
      %2975 = vmatprep.subr.mxu0 0.0
      %2976 = vmatpush1.msra.mxu0 0.0
      %2977 = vmatprep.subr.mxu0 0.0
      %2978 = vmatpush1.msra.mxu0 0.0
      %2979 = vmatprep.subr.mxu0 0.0
      %2980 = vmatpush1.msra.mxu0 0.0
      %2981 = vmatprep.mubr.f32.mxu0 0.0
      %2982 = vmatmul.mubr.f32.gmra.mrb[0].mxu0 %v2810
      %v2983 = vpop.f32.mrb[0].mxu0
      %v2984 = vadd.f32 0.0, %v2983
      %v2985 = vpop.f32.mrb[0].mxu0
      %2986 = vmatprep.mubr.f32.mxu0 0.0
      %2987 = vmatmul.mubr.f32.gmra.mrb[0].mxu0 %v2813
      %v2988 = vpop.f32.mrb[0].mxu0
      %v2989 = vadd.f32 0.0, %v2988
      %v2990 = vpop.f32.mrb[0].mxu0
      %2991 = vmatprep.mubr.f32.mxu0 0.0
      %2992 = vmatmul.mubr.f32.gmra.mrb[0].mxu0 %v2816
      %v2993 = vpop.f32.mrb[0].mxu0
      %v2994 = vadd.f32 0.0, %v2993
      %v2995 = vpop.f32.mrb[0].mxu0
      %2996 = vmatprep.mubr.f32.mxu0 0.0
      %2997 = vmatmul.mubr.f32.gmra.mrb[0].mxu0 %v2819
      %v2998 = vpop.f32.mrb[0].mxu0
      %v2999 = vadd.f32 0.0, %v2998
      %v3000 = vpop.f32.mrb[0].mxu0
      %3001 = vmatprep.mubr.f32.mxu0 0.0
      %3002 = vmatmul.mubr.f32.gmra.mrb[0].mxu0 %v2822
      %v3003 = vpop.f32.mrb[0].mxu0
      %v3004 = vadd.f32 0.0, %v3003
      %v3005 = vpop.f32.mrb[0].mxu0
      %3006 = vmatprep.mubr.f32.mxu0 0.0
      %3007 = vmatmul.mubr.f32.gmra.mrb[0].mxu0 %v2825
      %v3008 = vpop.f32.mrb[0].mxu0
      %v3009 = vadd.f32 0.0, %v3008
      %v3010 = vpop.f32.mrb[0].mxu0
      %3011 = vmatprep.mubr.f32.mxu0 0.0
      %3012 = vmatmul.mubr.f32.gmra.mrb[0].mxu0 %v2828
      %v3013 = vpop.f32.mrb[0].mxu0
      %v3014 = vadd.f32 0.0, %v3013
      %v3015 = vpop.f32.mrb[0].mxu0
      %3016 = vmatprep.mubr.f32.mxu0 0.0
      %3017 = vmatmul.mubr.f32.gmra.mrb[0].mxu0 %v2831
      %v3018 = vpop.f32.mrb[0].mxu0
      %v3019 = vadd.f32 0.0, %v3018
      %v3020 = vpop.f32.mrb[0].mxu0
      %3021 = vmatprep.mubr.f32.mxu0 0.0
      %3022 = vmatmul.mubr.f32.gmra.mrb[0].mxu0 %v2834
      %v3023 = vpop.f32.mrb[0].mxu0
      %v3024 = vadd.f32 0.0, %v3023
      %v3025 = vpop.f32.mrb[0].mxu0
      %3026 = vmatprep.mubr.f32.mxu0 0.0
      %3027 = vmatmul.mubr.f32.gmra.mrb[0].mxu0 %v2837
      %v3028 = vpop.f32.mrb[0].mxu0
      %v3029 = vadd.f32 0.0, %v3028
      %v3030 = vpop.f32.mrb[0].mxu0
      %3031 = vmatprep.mubr.f32.mxu0 0.0
      %3032 = vmatmul.mubr.f32.gmra.mrb[0].mxu0 %v2840
      %v3033 = vpop.f32.mrb[0].mxu0
      %v3034 = vadd.f32 0.0, %v3033
      %v3035 = vpop.f32.mrb[0].mxu0
      %3036 = vmatprep.mubr.f32.mxu0 0.0
      %3037 = vmatmul.mubr.f32.gmra.mrb[0].mxu0 %v2843
      %v3038 = vpop.f32.mrb[0].mxu0
      %v3039 = vadd.f32 0.0, %v3038
      %v3040 = vpop.f32.mrb[0].mxu0
      %3041 = vmatprep.mubr.f32.mxu0 0.0
      %3042 = vmatmul.mubr.f32.gmra.mrb[0].mxu0 %v2846
      %v3043 = vpop.f32.mrb[0].mxu0
      %v3044 = vadd.f32 0.0, %v3043
      %v3045 = vpop.f32.mrb[0].mxu0
      %3046 = vmatprep.mubr.f32.mxu0 0.0
      %3047 = vmatmul.mubr.f32.gmra.mrb[0].mxu0 %v2849
      %v3048 = vpop.f32.mrb[0].mxu0
      %v3049 = vadd.f32 0.0, %v3048
      %v3050 = vpop.f32.mrb[0].mxu0
      %3051 = vmatprep.mubr.f32.mxu0 0.0
      %3052 = vmatmul.mubr.f32.gmra.mrb[0].mxu0 %v2852
      %v3053 = vpop.f32.mrb[0].mxu0
      %v3054 = vadd.f32 0.0, %v3053
      %v3055 = vpop.f32.mrb[0].mxu0
      %3056 = vmatprep.mubr.f32.mxu0 0.0
      %3057 = vmatmul.mubr.f32.gmra.mrb[0].mxu0 %v2855
      %v3058 = vpop.f32.mrb[0].mxu0
      %v3059 = vadd.f32 0.0, %v3058
      %v3060 = vpop.f32.mrb[0].mxu0
      %3061 = vmatprep.mubr.f32.mxu0 0.0
      %3062 = vmatmul.mubr.f32.gmra.mrb[0].mxu0 %v2858
      %v3063 = vpop.f32.mrb[0].mxu0
      %v3064 = vadd.f32 0.0, %v3063
      %v3065 = vpop.f32.mrb[0].mxu0
      %3066 = vmatprep.mubr.f32.mxu0 0.0
      %3067 = vmatmul.mubr.f32.gmra.mrb[0].mxu0 %v2861
      %v3068 = vpop.f32.mrb[0].mxu0
      %v3069 = vadd.f32 0.0, %v3068
      %v3070 = vpop.f32.mrb[0].mxu0
      %3071 = vmatprep.mubr.f32.mxu0 0.0
      %3072 = vmatmul.mubr.f32.gmra.mrb[0].mxu0 %v2864
      %v3073 = vpop.f32.mrb[0].mxu0
      %v3074 = vadd.f32 0.0, %v3073
      %v3075 = vpop.f32.mrb[0].mxu0
      %3076 = vmatprep.mubr.f32.mxu0 0.0
      %3077 = vmatmul.mubr.f32.gmra.mrb[0].mxu0 %v2867
      %v3078 = vpop.f32.mrb[0].mxu0
      %v3079 = vadd.f32 0.0, %v3078
      %v3080 = vpop.f32.mrb[0].mxu0
      %3081 = vmatprep.mubr.f32.mxu0 0.0
      %3082 = vmatmul.mubr.f32.gmra.mrb[0].mxu0 %v2870
      %v3083 = vpop.f32.mrb[0].mxu0
      %v3084 = vadd.f32 0.0, %v3083
      %v3085 = vpop.f32.mrb[0].mxu0
      %3086 = vmatprep.mubr.f32.mxu0 0.0
      %3087 = vmatmul.mubr.f32.gmra.mrb[0].mxu0 %v2873
      %v3088 = vpop.f32.mrb[0].mxu0
      %v3089 = vadd.f32 0.0, %v3088
      %v3090 = vpop.f32.mrb[0].mxu0
      %3091 = vmatprep.mubr.f32.mxu0 0.0
      %3092 = vmatmul.mubr.f32.gmra.mrb[0].mxu0 %v2876
      %v3093 = vpop.f32.mrb[0].mxu0
      %v3094 = vadd.f32 0.0, %v3093
      %v3095 = vpop.f32.mrb[0].mxu0
      %3096 = vmatprep.mubr.f32.mxu0 0.0
      %3097 = vmatmul.mubr.f32.gmra.mrb[0].mxu0 %v2879
      %v3098 = vpop.f32.mrb[0].mxu0
      %v3099 = vadd.f32 0.0, %v3098
      %v3100 = vpop.f32.mrb[0].mxu0
      %3101 = vmatprep.mubr.f32.mxu0 0.0
      %3102 = vmatmul.mubr.f32.gmra.mrb[0].mxu0 %v2882
      %v3103 = vpop.f32.mrb[0].mxu0
      %v3104 = vadd.f32 0.0, %v3103
      %v3105 = vpop.f32.mrb[0].mxu0
      %3106 = vmatprep.mubr.f32.mxu0 0.0
      %3107 = vmatmul.mubr.f32.gmra.mrb[0].mxu0 %v2885
      %v3108 = vpop.f32.mrb[0].mxu0
      %v3109 = vadd.f32 0.0, %v3108
      %v3110 = vpop.f32.mrb[0].mxu0
      %3111 = vmatprep.mubr.f32.mxu0 0.0
      %3112 = vmatmul.mubr.f32.gmra.mrb[0].mxu0 %v2888
      %v3113 = vpop.f32.mrb[0].mxu0
      %v3114 = vadd.f32 0.0, %v3113
      %v3115 = vpop.f32.mrb[0].mxu0
      %3116 = vmatprep.mubr.f32.mxu0 0.0
      %3117 = vmatmul.mubr.f32.gmra.mrb[0].mxu0 %v2891
      %v3118 = vpop.f32.mrb[0].mxu0
      %v3119 = vadd.f32 0.0, %v3118
      %v3120 = vpop.f32.mrb[0].mxu0
      %3121 = vmatprep.mubr.f32.mxu0 0.0
      %3122 = vmatmul.mubr.f32.gmra.mrb[0].mxu0 %v2894
      %v3123 = vpop.f32.mrb[0].mxu0
      %v3124 = vadd.f32 0.0, %v3123
      %v3125 = vpop.f32.mrb[0].mxu0
      %3126 = vmatprep.mubr.f32.mxu0 0.0
      %3127 = vmatmul.mubr.f32.gmra.mrb[0].mxu0 %v2897
      %v3128 = vpop.f32.mrb[0].mxu0
      %v3129 = vadd.f32 0.0, %v3128
      %v3130 = vpop.f32.mrb[0].mxu0
      %3131 = vmatprep.mubr.f32.mxu0 0.0
      %3132 = vmatmul.mubr.f32.gmra.mrb[0].mxu0 %v2900
      %v3133 = vpop.f32.mrb[0].mxu0
      %v3134 = vadd.f32 0.0, %v3133
      %v3135 = vpop.f32.mrb[0].mxu0
      %3136 = vmatprep.mubr.f32.mxu0 0.0
      %3137 = vmatmul.mubr.f32.gmra.mrb[0].mxu0 %v2903
      %v3138 = vpop.f32.mrb[0].mxu0
      %v3139 = vadd.f32 0.0, %v3138
      %v3140 = vpop.f32.mrb[0].mxu0
      %3141 = vmatprep.mubr.f32.mxu0 0.0
      %3142 = vmatmul.mubr.f32.gmra.mrb[0].mxu0 %v2906
      %v3143 = vpop.f32.mrb[0].mxu0
      %v3144 = vadd.f32 0.0, %v3143
      %v3145 = vpop.f32.mrb[0].mxu0
      %3146 = vmatprep.mubr.f32.mxu0 0.0
      %3147 = vmatmul.mubr.f32.gmra.mrb[0].mxu0 %v2909
      %v3148 = vpop.f32.mrb[0].mxu0
      %v3149 = vadd.f32 0.0, %v3148
      %v3150 = vpop.f32.mrb[0].mxu0
      %3151 = vmatprep.mubr.f32.mxu0 0.0
      %3152 = vmatmul.mubr.f32.gmra.mrb[0].mxu0 %v2912
      %v3153 = vpop.f32.mrb[0].mxu0
      %v3154 = vadd.f32 0.0, %v3153
      %v3155 = vpop.f32.mrb[0].mxu0
      %3156 = vmatprep.mubr.f32.mxu0 0.0
      %3157 = vmatmul.mubr.f32.gmra.mrb[0].mxu0 %v2915
      %v3158 = vpop.f32.mrb[0].mxu0
      %v3159 = vadd.f32 0.0, %v3158
      %v3160 = vpop.f32.mrb[0].mxu0
      %3161 = vdwg.mxu0
      %v3162 = vadd.f32 %v2735, %v2984
      %v3163 = vadd.f32 %v2736, %v2989
      %v3164 = vadd.f32 %v2737, %v2994
      %v3165 = vadd.f32 %v2738, %v2999
      %v3166 = vadd.f32 %v2739, %v3004
      %v3167 = vadd.f32 %v2740, %v3009
      %v3168 = vadd.f32 %v2741, %v3014
      %v3169 = vadd.f32 %v2742, %v3019
      %v3170 = vadd.f32 %v2743, %v3024
      %v3171 = vadd.f32 %v2744, %v3029
      %v3172 = vadd.f32 %v2745, %v3034
      %v3173 = vadd.f32 %v2746, %v3039
      %v3174 = vadd.f32 %v2747, %v3044
      %v3175 = vadd.f32 %v2748, %v3049
      %v3176 = vadd.f32 %v2749, %v3054
      %v3177 = vadd.f32 %v2750, %v3059
      %v3178 = vadd.f32 %v2751, %v3064
      %v3179 = vadd.f32 %v2752, %v3069
      %v3180 = vadd.f32 %v2753, %v3074
      %v3181 = vadd.f32 %v2754, %v3079
      %v3182 = vadd.f32 %v2755, %v3084
      %v3183 = vadd.f32 %v2756, %v3089
      %v3184 = vadd.f32 %v2757, %v3094
      %v3185 = vadd.f32 %v2758, %v3099
      %v3186 = vadd.f32 %v2759, %v3104
      %v3187 = vadd.f32 %v2760, %v3109
      %v3188 = vadd.f32 %v2761, %v3114
      %v3189 = vadd.f32 %v2762, %v3119
      %v3190 = vadd.f32 %v2763, %v3124
      %v3191 = vadd.f32 %v2764, %v3129
      %v3192 = vadd.f32 %v2765, %v3134
      %v3193 = vadd.f32 %v2766, %v3139
      %v3194 = vadd.f32 %v2767, %v3144
      %v3195 = vadd.f32 %v2768, %v3149
      %v3196 = vadd.f32 %v2769, %v3154
      %v3197 = vadd.f32 %v2770, %v3159
      %v3198 = vld [vmem:[%s225 + $0x25] sm:$0xff]
      %v3199 = vld [vmem:[%s225 + $0x2d] sm:$0xff]
      %v3200 = vld [vmem:[%s225 + $0x35] sm:$0xff]
      %v3201 = vld [vmem:[%s225 + $0x3d] sm:$0xff]
      %v3202 = vld [vmem:[%s225 + $0x45] sm:$0xff]
      %v3203 = vld [vmem:[%s225 + $0x4d] sm:$0xff]
      %v3204 = vld [vmem:[%s225 + $0x55] sm:$0xff]
      %v3205 = vld [vmem:[%s225 + $0x5d] sm:$0xff]
      %v3206 = vld [vmem:[%s225 + $0x65] sm:$0xff]
      %v3207 = vld [vmem:[%s225 + $0x6d] sm:$0xff]
      %v3208 = vld [vmem:[%s225 + $0x75] sm:$0xff]
      %v3209 = vld [vmem:[%s225 + $0x7d] sm:$0xff]
      %v3210 = vld [vmem:[%s225 + $0x85] sm:$0xff]
      %v3211 = vld [vmem:[%s225 + $0x8d] sm:$0xff]
      %v3212 = vld [vmem:[%s225 + $0x95] sm:$0xff]
      %v3213 = vld [vmem:[%s225 + $0x9d] sm:$0xff]
      %v3214 = vld [vmem:[%s225 + $0xa5] sm:$0xff]
      %v3215 = vld [vmem:[%s225 + $0xad] sm:$0xff]
      %v3216 = vld [vmem:[%s225 + $0xb5] sm:$0xff]
      %v3217 = vld [vmem:[%s225 + $0xbd] sm:$0xff]
      %v3218 = vld [vmem:[%s225 + $0xc5] sm:$0xff]
      %v3219 = vld [vmem:[%s225 + $0xcd] sm:$0xff]
      %v3220 = vld [vmem:[%s225 + $0xd5] sm:$0xff]
      %v3221 = vld [vmem:[%s225 + $0xdd] sm:$0xff]
      %v3222 = vld [vmem:[%s225 + $0xe5] sm:$0xff]
      %v3223 = vld [vmem:[%s225 + $0xed] sm:$0xff]
      %v3224 = vld [vmem:[%s225 + $0xf5] sm:$0xff]
      %v3225 = vld [vmem:[%s225 + $0xfd] sm:$0xff]
      %v3226 = vld [vmem:[%s225 + $0x105] sm:$0xff]
      %v3227 = vld [vmem:[%s225 + $0x10d] sm:$0xff]
      %v3228 = vld [vmem:[%s225 + $0x115] sm:$0xff]
      %v3229 = vld [vmem:[%s225 + $0x11d] sm:$0xff]
      %v3230 = vld [vmem:[%s225 + $0x125] sm:$0xff]
      %v3231 = vld [vmem:[%s225 + $0x12d] sm:$0xff]
      %v3232 = vld [vmem:[%s225 + $0x135] sm:$0xff]
      %v3233 = vld [vmem:[%s225 + $0x13d] sm:$0x3f]
      %s3234 = scalar_lea.vmem %s231, 56
      %v3235 = vld [vmem:[%s3234] sm:$0xff]
      %v3237 = vsel %vm356, %v3198, 0
      %v3240 = vsel %vm356, %v3199, 0
      %v3243 = vsel %vm356, %v3200, 0
      %v3246 = vsel %vm356, %v3201, 0
      %v3249 = vsel %vm356, %v3202, 0
      %v3252 = vsel %vm356, %v3203, 0
      %v3255 = vsel %vm356, %v3204, 0
      %v3258 = vsel %vm356, %v3205, 0
      %v3261 = vsel %vm356, %v3206, 0
      %v3264 = vsel %vm356, %v3207, 0
      %v3267 = vsel %vm356, %v3208, 0
      %v3270 = vsel %vm356, %v3209, 0
      %v3273 = vsel %vm356, %v3210, 0
      %v3276 = vsel %vm356, %v3211, 0
      %v3279 = vsel %vm356, %v3212, 0
      %v3282 = vsel %vm356, %v3213, 0
      %v3285 = vsel %vm356, %v3214, 0
      %v3288 = vsel %vm356, %v3215, 0
      %v3291 = vsel %vm356, %v3216, 0
      %v3294 = vsel %vm356, %v3217, 0
      %v3297 = vsel %vm356, %v3218, 0
      %v3300 = vsel %vm356, %v3219, 0
      %v3303 = vsel %vm356, %v3220, 0
      %v3306 = vsel %vm356, %v3221, 0
      %v3309 = vsel %vm356, %v3222, 0
      %v3312 = vsel %vm356, %v3223, 0
      %v3315 = vsel %vm356, %v3224, 0
      %v3318 = vsel %vm356, %v3225, 0
      %v3321 = vsel %vm356, %v3226, 0
      %v3324 = vsel %vm356, %v3227, 0
      %v3327 = vsel %vm356, %v3228, 0
      %v3330 = vsel %vm356, %v3229, 0
      %v3333 = vsel %vm356, %v3230, 0
      %v3336 = vsel %vm356, %v3231, 0
      %v3339 = vsel %vm356, %v3232, 0
      %v3342 = vsel %vm356, %v3233, 0
      %3344 = vmatprep.subr.mxu0 0.0
      %3345 = vmatpush1.msra.mxu0 %v3235
      %3346 = vmatprep.subr.mxu0 0.0
      %3347 = vmatpush1.msra.mxu0 0.0
      %3348 = vmatprep.subr.mxu0 0.0
      %3349 = vmatpush1.msra.mxu0 0.0
      %3350 = vmatprep.subr.mxu0 0.0
      %3351 = vmatpush1.msra.mxu0 0.0
      %3352 = vmatprep.subr.mxu0 0.0
      %3353 = vmatpush1.msra.mxu0 0.0
      %3354 = vmatprep.subr.mxu0 0.0
      %3355 = vmatpush1.msra.mxu0 0.0
      %3356 = vmatprep.subr.mxu0 0.0
      %3357 = vmatpush1.msra.mxu0 0.0
      %3358 = vmatprep.subr.mxu0 0.0
      %3359 = vmatpush1.msra.mxu0 0.0
      %3360 = vmatprep.subr.mxu0 0.0
      %3361 = vmatpush1.msra.mxu0 0.0
      %3362 = vmatprep.subr.mxu0 0.0
      %3363 = vmatpush1.msra.mxu0 0.0
      %3364 = vmatprep.subr.mxu0 0.0
      %3365 = vmatpush1.msra.mxu0 0.0
      %3366 = vmatprep.subr.mxu0 0.0
      %3367 = vmatpush1.msra.mxu0 0.0
      %3368 = vmatprep.subr.mxu0 0.0
      %3369 = vmatpush1.msra.mxu0 0.0
      %3370 = vmatprep.subr.mxu0 0.0
      %3371 = vmatpush1.msra.mxu0 0.0
      %3372 = vmatprep.subr.mxu0 0.0
      %3373 = vmatpush1.msra.mxu0 0.0
      %3374 = vmatprep.subr.mxu0 0.0
      %3375 = vmatpush1.msra.mxu0 0.0
      %3376 = vmatprep.subr.mxu0 0.0
      %3377 = vmatpush1.msra.mxu0 0.0
      %3378 = vmatprep.subr.mxu0 0.0
      %3379 = vmatpush1.msra.mxu0 0.0
      %3380 = vmatprep.subr.mxu0 0.0
      %3381 = vmatpush1.msra.mxu0 0.0
      %3382 = vmatprep.subr.mxu0 0.0
      %3383 = vmatpush1.msra.mxu0 0.0
      %3384 = vmatprep.subr.mxu0 0.0
      %3385 = vmatpush1.msra.mxu0 0.0
      %3386 = vmatprep.subr.mxu0 0.0
      %3387 = vmatpush1.msra.mxu0 0.0
      %3388 = vmatprep.subr.mxu0 0.0
      %3389 = vmatpush1.msra.mxu0 0.0
      %3390 = vmatprep.subr.mxu0 0.0
      %3391 = vmatpush1.msra.mxu0 0.0
      %3392 = vmatprep.subr.mxu0 0.0
      %3393 = vmatpush1.msra.mxu0 0.0
      %3394 = vmatprep.subr.mxu0 0.0
      %3395 = vmatpush1.msra.mxu0 0.0
      %3396 = vmatprep.subr.mxu0 0.0
      %3397 = vmatpush1.msra.mxu0 0.0
      %3398 = vmatprep.subr.mxu0 0.0
      %3399 = vmatpush1.msra.mxu0 0.0
      %3400 = vmatprep.subr.mxu0 0.0
      %3401 = vmatpush1.msra.mxu0 0.0
      %3402 = vmatprep.subr.mxu0 0.0
      %3403 = vmatpush1.msra.mxu0 0.0
      %3404 = vmatprep.subr.mxu0 0.0
      %3405 = vmatpush1.msra.mxu0 0.0
      %3406 = vmatprep.subr.mxu0 0.0
      %3407 = vmatpush1.msra.mxu0 0.0
      %3408 = vmatprep.mubr.f32.mxu0 0.0
      %3409 = vmatmul.mubr.f32.gmra.mrb[0].mxu0 %v3237
      %v3410 = vpop.f32.mrb[0].mxu0
      %v3411 = vadd.f32 0.0, %v3410
      %v3412 = vpop.f32.mrb[0].mxu0
      %3413 = vmatprep.mubr.f32.mxu0 0.0
      %3414 = vmatmul.mubr.f32.gmra.mrb[0].mxu0 %v3240
      %v3415 = vpop.f32.mrb[0].mxu0
      %v3416 = vadd.f32 0.0, %v3415
      %v3417 = vpop.f32.mrb[0].mxu0
      %3418 = vmatprep.mubr.f32.mxu0 0.0
      %3419 = vmatmul.mubr.f32.gmra.mrb[0].mxu0 %v3243
      %v3420 = vpop.f32.mrb[0].mxu0
      %v3421 = vadd.f32 0.0, %v3420
      %v3422 = vpop.f32.mrb[0].mxu0
      %3423 = vmatprep.mubr.f32.mxu0 0.0
      %3424 = vmatmul.mubr.f32.gmra.mrb[0].mxu0 %v3246
      %v3425 = vpop.f32.mrb[0].mxu0
      %v3426 = vadd.f32 0.0, %v3425
      %v3427 = vpop.f32.mrb[0].mxu0
      %3428 = vmatprep.mubr.f32.mxu0 0.0
      %3429 = vmatmul.mubr.f32.gmra.mrb[0].mxu0 %v3249
      %v3430 = vpop.f32.mrb[0].mxu0
      %v3431 = vadd.f32 0.0, %v3430
      %v3432 = vpop.f32.mrb[0].mxu0
      %3433 = vmatprep.mubr.f32.mxu0 0.0
      %3434 = vmatmul.mubr.f32.gmra.mrb[0].mxu0 %v3252
      %v3435 = vpop.f32.mrb[0].mxu0
      %v3436 = vadd.f32 0.0, %v3435
      %v3437 = vpop.f32.mrb[0].mxu0
      %3438 = vmatprep.mubr.f32.mxu0 0.0
      %3439 = vmatmul.mubr.f32.gmra.mrb[0].mxu0 %v3255
      %v3440 = vpop.f32.mrb[0].mxu0
      %v3441 = vadd.f32 0.0, %v3440
      %v3442 = vpop.f32.mrb[0].mxu0
      %3443 = vmatprep.mubr.f32.mxu0 0.0
      %3444 = vmatmul.mubr.f32.gmra.mrb[0].mxu0 %v3258
      %v3445 = vpop.f32.mrb[0].mxu0
      %v3446 = vadd.f32 0.0, %v3445
      %v3447 = vpop.f32.mrb[0].mxu0
      %3448 = vmatprep.mubr.f32.mxu0 0.0
      %3449 = vmatmul.mubr.f32.gmra.mrb[0].mxu0 %v3261
      %v3450 = vpop.f32.mrb[0].mxu0
      %v3451 = vadd.f32 0.0, %v3450
      %v3452 = vpop.f32.mrb[0].mxu0
      %3453 = vmatprep.mubr.f32.mxu0 0.0
      %3454 = vmatmul.mubr.f32.gmra.mrb[0].mxu0 %v3264
      %v3455 = vpop.f32.mrb[0].mxu0
      %v3456 = vadd.f32 0.0, %v3455
      %v3457 = vpop.f32.mrb[0].mxu0
      %3458 = vmatprep.mubr.f32.mxu0 0.0
      %3459 = vmatmul.mubr.f32.gmra.mrb[0].mxu0 %v3267
      %v3460 = vpop.f32.mrb[0].mxu0
      %v3461 = vadd.f32 0.0, %v3460
      %v3462 = vpop.f32.mrb[0].mxu0
      %3463 = vmatprep.mubr.f32.mxu0 0.0
      %3464 = vmatmul.mubr.f32.gmra.mrb[0].mxu0 %v3270
      %v3465 = vpop.f32.mrb[0].mxu0
      %v3466 = vadd.f32 0.0, %v3465
      %v3467 = vpop.f32.mrb[0].mxu0
      %3468 = vmatprep.mubr.f32.mxu0 0.0
      %3469 = vmatmul.mubr.f32.gmra.mrb[0].mxu0 %v3273
      %v3470 = vpop.f32.mrb[0].mxu0
      %v3471 = vadd.f32 0.0, %v3470
      %v3472 = vpop.f32.mrb[0].mxu0
      %3473 = vmatprep.mubr.f32.mxu0 0.0
      %3474 = vmatmul.mubr.f32.gmra.mrb[0].mxu0 %v3276
      %v3475 = vpop.f32.mrb[0].mxu0
      %v3476 = vadd.f32 0.0, %v3475
      %v3477 = vpop.f32.mrb[0].mxu0
      %3478 = vmatprep.mubr.f32.mxu0 0.0
      %3479 = vmatmul.mubr.f32.gmra.mrb[0].mxu0 %v3279
      %v3480 = vpop.f32.mrb[0].mxu0
      %v3481 = vadd.f32 0.0, %v3480
      %v3482 = vpop.f32.mrb[0].mxu0
      %3483 = vmatprep.mubr.f32.mxu0 0.0
      %3484 = vmatmul.mubr.f32.gmra.mrb[0].mxu0 %v3282
      %v3485 = vpop.f32.mrb[0].mxu0
      %v3486 = vadd.f32 0.0, %v3485
      %v3487 = vpop.f32.mrb[0].mxu0
      %3488 = vmatprep.mubr.f32.mxu0 0.0
      %3489 = vmatmul.mubr.f32.gmra.mrb[0].mxu0 %v3285
      %v3490 = vpop.f32.mrb[0].mxu0
      %v3491 = vadd.f32 0.0, %v3490
      %v3492 = vpop.f32.mrb[0].mxu0
      %3493 = vmatprep.mubr.f32.mxu0 0.0
      %3494 = vmatmul.mubr.f32.gmra.mrb[0].mxu0 %v3288
      %v3495 = vpop.f32.mrb[0].mxu0
      %v3496 = vadd.f32 0.0, %v3495
      %v3497 = vpop.f32.mrb[0].mxu0
      %3498 = vmatprep.mubr.f32.mxu0 0.0
      %3499 = vmatmul.mubr.f32.gmra.mrb[0].mxu0 %v3291
      %v3500 = vpop.f32.mrb[0].mxu0
      %v3501 = vadd.f32 0.0, %v3500
      %v3502 = vpop.f32.mrb[0].mxu0
      %3503 = vmatprep.mubr.f32.mxu0 0.0
      %3504 = vmatmul.mubr.f32.gmra.mrb[0].mxu0 %v3294
      %v3505 = vpop.f32.mrb[0].mxu0
      %v3506 = vadd.f32 0.0, %v3505
      %v3507 = vpop.f32.mrb[0].mxu0
      %3508 = vmatprep.mubr.f32.mxu0 0.0
      %3509 = vmatmul.mubr.f32.gmra.mrb[0].mxu0 %v3297
      %v3510 = vpop.f32.mrb[0].mxu0
      %v3511 = vadd.f32 0.0, %v3510
      %v3512 = vpop.f32.mrb[0].mxu0
      %3513 = vmatprep.mubr.f32.mxu0 0.0
      %3514 = vmatmul.mubr.f32.gmra.mrb[0].mxu0 %v3300
      %v3515 = vpop.f32.mrb[0].mxu0
      %v3516 = vadd.f32 0.0, %v3515
      %v3517 = vpop.f32.mrb[0].mxu0
      %3518 = vmatprep.mubr.f32.mxu0 0.0
      %3519 = vmatmul.mubr.f32.gmra.mrb[0].mxu0 %v3303
      %v3520 = vpop.f32.mrb[0].mxu0
      %v3521 = vadd.f32 0.0, %v3520
      %v3522 = vpop.f32.mrb[0].mxu0
      %3523 = vmatprep.mubr.f32.mxu0 0.0
      %3524 = vmatmul.mubr.f32.gmra.mrb[0].mxu0 %v3306
      %v3525 = vpop.f32.mrb[0].mxu0
      %v3526 = vadd.f32 0.0, %v3525
      %v3527 = vpop.f32.mrb[0].mxu0
      %3528 = vmatprep.mubr.f32.mxu0 0.0
      %3529 = vmatmul.mubr.f32.gmra.mrb[0].mxu0 %v3309
      %v3530 = vpop.f32.mrb[0].mxu0
      %v3531 = vadd.f32 0.0, %v3530
      %v3532 = vpop.f32.mrb[0].mxu0
      %3533 = vmatprep.mubr.f32.mxu0 0.0
      %3534 = vmatmul.mubr.f32.gmra.mrb[0].mxu0 %v3312
      %v3535 = vpop.f32.mrb[0].mxu0
      %v3536 = vadd.f32 0.0, %v3535
      %v3537 = vpop.f32.mrb[0].mxu0
      %3538 = vmatprep.mubr.f32.mxu0 0.0
      %3539 = vmatmul.mubr.f32.gmra.mrb[0].mxu0 %v3315
      %v3540 = vpop.f32.mrb[0].mxu0
      %v3541 = vadd.f32 0.0, %v3540
      %v3542 = vpop.f32.mrb[0].mxu0
      %3543 = vmatprep.mubr.f32.mxu0 0.0
      %3544 = vmatmul.mubr.f32.gmra.mrb[0].mxu0 %v3318
      %v3545 = vpop.f32.mrb[0].mxu0
      %v3546 = vadd.f32 0.0, %v3545
      %v3547 = vpop.f32.mrb[0].mxu0
      %3548 = vmatprep.mubr.f32.mxu0 0.0
      %3549 = vmatmul.mubr.f32.gmra.mrb[0].mxu0 %v3321
      %v3550 = vpop.f32.mrb[0].mxu0
      %v3551 = vadd.f32 0.0, %v3550
      %v3552 = vpop.f32.mrb[0].mxu0
      %3553 = vmatprep.mubr.f32.mxu0 0.0
      %3554 = vmatmul.mubr.f32.gmra.mrb[0].mxu0 %v3324
      %v3555 = vpop.f32.mrb[0].mxu0
      %v3556 = vadd.f32 0.0, %v3555
      %v3557 = vpop.f32.mrb[0].mxu0
      %3558 = vmatprep.mubr.f32.mxu0 0.0
      %3559 = vmatmul.mubr.f32.gmra.mrb[0].mxu0 %v3327
      %v3560 = vpop.f32.mrb[0].mxu0
      %v3561 = vadd.f32 0.0, %v3560
      %v3562 = vpop.f32.mrb[0].mxu0
      %3563 = vmatprep.mubr.f32.mxu0 0.0
      %3564 = vmatmul.mubr.f32.gmra.mrb[0].mxu0 %v3330
      %v3565 = vpop.f32.mrb[0].mxu0
      %v3566 = vadd.f32 0.0, %v3565
      %v3567 = vpop.f32.mrb[0].mxu0
      %3568 = vmatprep.mubr.f32.mxu0 0.0
      %3569 = vmatmul.mubr.f32.gmra.mrb[0].mxu0 %v3333
      %v3570 = vpop.f32.mrb[0].mxu0
      %v3571 = vadd.f32 0.0, %v3570
      %v3572 = vpop.f32.mrb[0].mxu0
      %3573 = vmatprep.mubr.f32.mxu0 0.0
      %3574 = vmatmul.mubr.f32.gmra.mrb[0].mxu0 %v3336
      %v3575 = vpop.f32.mrb[0].mxu0
      %v3576 = vadd.f32 0.0, %v3575
      %v3577 = vpop.f32.mrb[0].mxu0
      %3578 = vmatprep.mubr.f32.mxu0 0.0
      %3579 = vmatmul.mubr.f32.gmra.mrb[0].mxu0 %v3339
      %v3580 = vpop.f32.mrb[0].mxu0
      %v3581 = vadd.f32 0.0, %v3580
      %v3582 = vpop.f32.mrb[0].mxu0
      %3583 = vmatprep.mubr.f32.mxu0 0.0
      %3584 = vmatmul.mubr.f32.gmra.mrb[0].mxu0 %v3342
      %v3585 = vpop.f32.mrb[0].mxu0
      %v3586 = vadd.f32 0.0, %v3585
      %v3587 = vpop.f32.mrb[0].mxu0
      %3588 = vdwg.mxu0
      %v3589 = vadd.f32 %v3162, %v3411
      %v3590 = vadd.f32 %v3163, %v3416
      %v3591 = vadd.f32 %v3164, %v3421
      %v3592 = vadd.f32 %v3165, %v3426
      %v3593 = vadd.f32 %v3166, %v3431
      %v3594 = vadd.f32 %v3167, %v3436
      %v3595 = vadd.f32 %v3168, %v3441
      %v3596 = vadd.f32 %v3169, %v3446
      %v3597 = vadd.f32 %v3170, %v3451
      %v3598 = vadd.f32 %v3171, %v3456
      %v3599 = vadd.f32 %v3172, %v3461
      %v3600 = vadd.f32 %v3173, %v3466
      %v3601 = vadd.f32 %v3174, %v3471
      %v3602 = vadd.f32 %v3175, %v3476
      %v3603 = vadd.f32 %v3176, %v3481
      %v3604 = vadd.f32 %v3177, %v3486
      %v3605 = vadd.f32 %v3178, %v3491
      %v3606 = vadd.f32 %v3179, %v3496
      %v3607 = vadd.f32 %v3180, %v3501
      %v3608 = vadd.f32 %v3181, %v3506
      %v3609 = vadd.f32 %v3182, %v3511
      %v3610 = vadd.f32 %v3183, %v3516
      %v3611 = vadd.f32 %v3184, %v3521
      %v3612 = vadd.f32 %v3185, %v3526
      %v3613 = vadd.f32 %v3186, %v3531
      %v3614 = vadd.f32 %v3187, %v3536
      %v3615 = vadd.f32 %v3188, %v3541
      %v3616 = vadd.f32 %v3189, %v3546
      %v3617 = vadd.f32 %v3190, %v3551
      %v3618 = vadd.f32 %v3191, %v3556
      %v3619 = vadd.f32 %v3192, %v3561
      %v3620 = vadd.f32 %v3193, %v3566
      %v3621 = vadd.f32 %v3194, %v3571
      %v3622 = vadd.f32 %v3195, %v3576
      %v3623 = vadd.f32 %v3196, %v3581
      %v3624 = vadd.f32 %v3197, %v3586
      %v3625 = vld [vmem:[%s225 + $0x26] sm:$0xff]
      %v3626 = vld [vmem:[%s225 + $0x2e] sm:$0xff]
      %v3627 = vld [vmem:[%s225 + $0x36] sm:$0xff]
      %v3628 = vld [vmem:[%s225 + $0x3e] sm:$0xff]
      %v3629 = vld [vmem:[%s225 + $0x46] sm:$0xff]
      %v3630 = vld [vmem:[%s225 + $0x4e] sm:$0xff]
      %v3631 = vld [vmem:[%s225 + $0x56] sm:$0xff]
      %v3632 = vld [vmem:[%s225 + $0x5e] sm:$0xff]
      %v3633 = vld [vmem:[%s225 + $0x66] sm:$0xff]
      %v3634 = vld [vmem:[%s225 + $0x6e] sm:$0xff]
      %v3635 = vld [vmem:[%s225 + $0x76] sm:$0xff]
      %v3636 = vld [vmem:[%s225 + $0x7e] sm:$0xff]
      %v3637 = vld [vmem:[%s225 + $0x86] sm:$0xff]
      %v3638 = vld [vmem:[%s225 + $0x8e] sm:$0xff]
      %v3639 = vld [vmem:[%s225 + $0x96] sm:$0xff]
      %v3640 = vld [vmem:[%s225 + $0x9e] sm:$0xff]
      %v3641 = vld [vmem:[%s225 + $0xa6] sm:$0xff]
      %v3642 = vld [vmem:[%s225 + $0xae] sm:$0xff]
      %v3643 = vld [vmem:[%s225 + $0xb6] sm:$0xff]
      %v3644 = vld [vmem:[%s225 + $0xbe] sm:$0xff]
      %v3645 = vld [vmem:[%s225 + $0xc6] sm:$0xff]
      %v3646 = vld [vmem:[%s225 + $0xce] sm:$0xff]
      %v3647 = vld [vmem:[%s225 + $0xd6] sm:$0xff]
      %v3648 = vld [vmem:[%s225 + $0xde] sm:$0xff]
      %v3649 = vld [vmem:[%s225 + $0xe6] sm:$0xff]
      %v3650 = vld [vmem:[%s225 + $0xee] sm:$0xff]
      %v3651 = vld [vmem:[%s225 + $0xf6] sm:$0xff]
      %v3652 = vld [vmem:[%s225 + $0xfe] sm:$0xff]
      %v3653 = vld [vmem:[%s225 + $0x106] sm:$0xff]
      %v3654 = vld [vmem:[%s225 + $0x10e] sm:$0xff]
      %v3655 = vld [vmem:[%s225 + $0x116] sm:$0xff]
      %v3656 = vld [vmem:[%s225 + $0x11e] sm:$0xff]
      %v3657 = vld [vmem:[%s225 + $0x126] sm:$0xff]
      %v3658 = vld [vmem:[%s225 + $0x12e] sm:$0xff]
      %v3659 = vld [vmem:[%s225 + $0x136] sm:$0xff]
      %v3660 = vld [vmem:[%s225 + $0x13e] sm:$0x3f]
      %s3661 = scalar_lea.vmem %s231, 64
      %v3662 = vld [vmem:[%s3661] sm:$0xff]
      %v3664 = vsel %vm356, %v3625, 0
      %v3667 = vsel %vm356, %v3626, 0
      %v3670 = vsel %vm356, %v3627, 0
      %v3673 = vsel %vm356, %v3628, 0
      %v3676 = vsel %vm356, %v3629, 0
      %v3679 = vsel %vm356, %v3630, 0
      %v3682 = vsel %vm356, %v3631, 0
      %v3685 = vsel %vm356, %v3632, 0
      %v3688 = vsel %vm356, %v3633, 0
      %v3691 = vsel %vm356, %v3634, 0
      %v3694 = vsel %vm356, %v3635, 0
      %v3697 = vsel %vm356, %v3636, 0
      %v3700 = vsel %vm356, %v3637, 0
      %v3703 = vsel %vm356, %v3638, 0
      %v3706 = vsel %vm356, %v3639, 0
      %v3709 = vsel %vm356, %v3640, 0
      %v3712 = vsel %vm356, %v3641, 0
      %v3715 = vsel %vm356, %v3642, 0
      %v3718 = vsel %vm356, %v3643, 0
      %v3721 = vsel %vm356, %v3644, 0
      %v3724 = vsel %vm356, %v3645, 0
      %v3727 = vsel %vm356, %v3646, 0
      %v3730 = vsel %vm356, %v3647, 0
      %v3733 = vsel %vm356, %v3648, 0
      %v3736 = vsel %vm356, %v3649, 0
      %v3739 = vsel %vm356, %v3650, 0
      %v3742 = vsel %vm356, %v3651, 0
      %v3745 = vsel %vm356, %v3652, 0
      %v3748 = vsel %vm356, %v3653, 0
      %v3751 = vsel %vm356, %v3654, 0
      %v3754 = vsel %vm356, %v3655, 0
      %v3757 = vsel %vm356, %v3656, 0
      %v3760 = vsel %vm356, %v3657, 0
      %v3763 = vsel %vm356, %v3658, 0
      %v3766 = vsel %vm356, %v3659, 0
      %v3769 = vsel %vm356, %v3660, 0
      %3771 = vmatprep.subr.mxu0 0.0
      %3772 = vmatpush1.msra.mxu0 %v3662
      %3773 = vmatprep.subr.mxu0 0.0
      %3774 = vmatpush1.msra.mxu0 0.0
      %3775 = vmatprep.subr.mxu0 0.0
      %3776 = vmatpush1.msra.mxu0 0.0
      %3777 = vmatprep.subr.mxu0 0.0
      %3778 = vmatpush1.msra.mxu0 0.0
      %3779 = vmatprep.subr.mxu0 0.0
      %3780 = vmatpush1.msra.mxu0 0.0
      %3781 = vmatprep.subr.mxu0 0.0
      %3782 = vmatpush1.msra.mxu0 0.0
      %3783 = vmatprep.subr.mxu0 0.0
      %3784 = vmatpush1.msra.mxu0 0.0
      %3785 = vmatprep.subr.mxu0 0.0
      %3786 = vmatpush1.msra.mxu0 0.0
      %3787 = vmatprep.subr.mxu0 0.0
      %3788 = vmatpush1.msra.mxu0 0.0
      %3789 = vmatprep.subr.mxu0 0.0
      %3790 = vmatpush1.msra.mxu0 0.0
      %3791 = vmatprep.subr.mxu0 0.0
      %3792 = vmatpush1.msra.mxu0 0.0
      %3793 = vmatprep.subr.mxu0 0.0
      %3794 = vmatpush1.msra.mxu0 0.0
      %3795 = vmatprep.subr.mxu0 0.0
      %3796 = vmatpush1.msra.mxu0 0.0
      %3797 = vmatprep.subr.mxu0 0.0
      %3798 = vmatpush1.msra.mxu0 0.0
      %3799 = vmatprep.subr.mxu0 0.0
      %3800 = vmatpush1.msra.mxu0 0.0
      %3801 = vmatprep.subr.mxu0 0.0
      %3802 = vmatpush1.msra.mxu0 0.0
      %3803 = vmatprep.subr.mxu0 0.0
      %3804 = vmatpush1.msra.mxu0 0.0
      %3805 = vmatprep.subr.mxu0 0.0
      %3806 = vmatpush1.msra.mxu0 0.0
      %3807 = vmatprep.subr.mxu0 0.0
      %3808 = vmatpush1.msra.mxu0 0.0
      %3809 = vmatprep.subr.mxu0 0.0
      %3810 = vmatpush1.msra.mxu0 0.0
      %3811 = vmatprep.subr.mxu0 0.0
      %3812 = vmatpush1.msra.mxu0 0.0
      %3813 = vmatprep.subr.mxu0 0.0
      %3814 = vmatpush1.msra.mxu0 0.0
      %3815 = vmatprep.subr.mxu0 0.0
      %3816 = vmatpush1.msra.mxu0 0.0
      %3817 = vmatprep.subr.mxu0 0.0
      %3818 = vmatpush1.msra.mxu0 0.0
      %3819 = vmatprep.subr.mxu0 0.0
      %3820 = vmatpush1.msra.mxu0 0.0
      %3821 = vmatprep.subr.mxu0 0.0
      %3822 = vmatpush1.msra.mxu0 0.0
      %3823 = vmatprep.subr.mxu0 0.0
      %3824 = vmatpush1.msra.mxu0 0.0
      %3825 = vmatprep.subr.mxu0 0.0
      %3826 = vmatpush1.msra.mxu0 0.0
      %3827 = vmatprep.subr.mxu0 0.0
      %3828 = vmatpush1.msra.mxu0 0.0
      %3829 = vmatprep.subr.mxu0 0.0
      %3830 = vmatpush1.msra.mxu0 0.0
      %3831 = vmatprep.subr.mxu0 0.0
      %3832 = vmatpush1.msra.mxu0 0.0
      %3833 = vmatprep.subr.mxu0 0.0
      %3834 = vmatpush1.msra.mxu0 0.0
      %3835 = vmatprep.mubr.f32.mxu0 0.0
      %3836 = vmatmul.mubr.f32.gmra.mrb[0].mxu0 %v3664
      %v3837 = vpop.f32.mrb[0].mxu0
      %v3838 = vadd.f32 0.0, %v3837
      %v3839 = vpop.f32.mrb[0].mxu0
      %3840 = vmatprep.mubr.f32.mxu0 0.0
      %3841 = vmatmul.mubr.f32.gmra.mrb[0].mxu0 %v3667
      %v3842 = vpop.f32.mrb[0].mxu0
      %v3843 = vadd.f32 0.0, %v3842
      %v3844 = vpop.f32.mrb[0].mxu0
      %3845 = vmatprep.mubr.f32.mxu0 0.0
      %3846 = vmatmul.mubr.f32.gmra.mrb[0].mxu0 %v3670
      %v3847 = vpop.f32.mrb[0].mxu0
      %v3848 = vadd.f32 0.0, %v3847
      %v3849 = vpop.f32.mrb[0].mxu0
      %3850 = vmatprep.mubr.f32.mxu0 0.0
      %3851 = vmatmul.mubr.f32.gmra.mrb[0].mxu0 %v3673
      %v3852 = vpop.f32.mrb[0].mxu0
      %v3853 = vadd.f32 0.0, %v3852
      %v3854 = vpop.f32.mrb[0].mxu0
      %3855 = vmatprep.mubr.f32.mxu0 0.0
      %3856 = vmatmul.mubr.f32.gmra.mrb[0].mxu0 %v3676
      %v3857 = vpop.f32.mrb[0].mxu0
      %v3858 = vadd.f32 0.0, %v3857
      %v3859 = vpop.f32.mrb[0].mxu0
      %3860 = vmatprep.mubr.f32.mxu0 0.0
      %3861 = vmatmul.mubr.f32.gmra.mrb[0].mxu0 %v3679
      %v3862 = vpop.f32.mrb[0].mxu0
      %v3863 = vadd.f32 0.0, %v3862
      %v3864 = vpop.f32.mrb[0].mxu0
      %3865 = vmatprep.mubr.f32.mxu0 0.0
      %3866 = vmatmul.mubr.f32.gmra.mrb[0].mxu0 %v3682
      %v3867 = vpop.f32.mrb[0].mxu0
      %v3868 = vadd.f32 0.0, %v3867
      %v3869 = vpop.f32.mrb[0].mxu0
      %3870 = vmatprep.mubr.f32.mxu0 0.0
      %3871 = vmatmul.mubr.f32.gmra.mrb[0].mxu0 %v3685
      %v3872 = vpop.f32.mrb[0].mxu0
      %v3873 = vadd.f32 0.0, %v3872
      %v3874 = vpop.f32.mrb[0].mxu0
      %3875 = vmatprep.mubr.f32.mxu0 0.0
      %3876 = vmatmul.mubr.f32.gmra.mrb[0].mxu0 %v3688
      %v3877 = vpop.f32.mrb[0].mxu0
      %v3878 = vadd.f32 0.0, %v3877
      %v3879 = vpop.f32.mrb[0].mxu0
      %3880 = vmatprep.mubr.f32.mxu0 0.0
      %3881 = vmatmul.mubr.f32.gmra.mrb[0].mxu0 %v3691
      %v3882 = vpop.f32.mrb[0].mxu0
      %v3883 = vadd.f32 0.0, %v3882
      %v3884 = vpop.f32.mrb[0].mxu0
      %3885 = vmatprep.mubr.f32.mxu0 0.0
      %3886 = vmatmul.mubr.f32.gmra.mrb[0].mxu0 %v3694
      %v3887 = vpop.f32.mrb[0].mxu0
      %v3888 = vadd.f32 0.0, %v3887
      %v3889 = vpop.f32.mrb[0].mxu0
      %3890 = vmatprep.mubr.f32.mxu0 0.0
      %3891 = vmatmul.mubr.f32.gmra.mrb[0].mxu0 %v3697
      %v3892 = vpop.f32.mrb[0].mxu0
      %v3893 = vadd.f32 0.0, %v3892
      %v3894 = vpop.f32.mrb[0].mxu0
      %3895 = vmatprep.mubr.f32.mxu0 0.0
      %3896 = vmatmul.mubr.f32.gmra.mrb[0].mxu0 %v3700
      %v3897 = vpop.f32.mrb[0].mxu0
      %v3898 = vadd.f32 0.0, %v3897
      %v3899 = vpop.f32.mrb[0].mxu0
      %3900 = vmatprep.mubr.f32.mxu0 0.0
      %3901 = vmatmul.mubr.f32.gmra.mrb[0].mxu0 %v3703
      %v3902 = vpop.f32.mrb[0].mxu0
      %v3903 = vadd.f32 0.0, %v3902
      %v3904 = vpop.f32.mrb[0].mxu0
      %3905 = vmatprep.mubr.f32.mxu0 0.0
      %3906 = vmatmul.mubr.f32.gmra.mrb[0].mxu0 %v3706
      %v3907 = vpop.f32.mrb[0].mxu0
      %v3908 = vadd.f32 0.0, %v3907
      %v3909 = vpop.f32.mrb[0].mxu0
      %3910 = vmatprep.mubr.f32.mxu0 0.0
      %3911 = vmatmul.mubr.f32.gmra.mrb[0].mxu0 %v3709
      %v3912 = vpop.f32.mrb[0].mxu0
      %v3913 = vadd.f32 0.0, %v3912
      %v3914 = vpop.f32.mrb[0].mxu0
      %3915 = vmatprep.mubr.f32.mxu0 0.0
      %3916 = vmatmul.mubr.f32.gmra.mrb[0].mxu0 %v3712
      %v3917 = vpop.f32.mrb[0].mxu0
      %v3918 = vadd.f32 0.0, %v3917
      %v3919 = vpop.f32.mrb[0].mxu0
      %3920 = vmatprep.mubr.f32.mxu0 0.0
      %3921 = vmatmul.mubr.f32.gmra.mrb[0].mxu0 %v3715
      %v3922 = vpop.f32.mrb[0].mxu0
      %v3923 = vadd.f32 0.0, %v3922
      %v3924 = vpop.f32.mrb[0].mxu0
      %3925 = vmatprep.mubr.f32.mxu0 0.0
      %3926 = vmatmul.mubr.f32.gmra.mrb[0].mxu0 %v3718
      %v3927 = vpop.f32.mrb[0].mxu0
      %v3928 = vadd.f32 0.0, %v3927
      %v3929 = vpop.f32.mrb[0].mxu0
      %3930 = vmatprep.mubr.f32.mxu0 0.0
      %3931 = vmatmul.mubr.f32.gmra.mrb[0].mxu0 %v3721
      %v3932 = vpop.f32.mrb[0].mxu0
      %v3933 = vadd.f32 0.0, %v3932
      %v3934 = vpop.f32.mrb[0].mxu0
      %3935 = vmatprep.mubr.f32.mxu0 0.0
      %3936 = vmatmul.mubr.f32.gmra.mrb[0].mxu0 %v3724
      %v3937 = vpop.f32.mrb[0].mxu0
      %v3938 = vadd.f32 0.0, %v3937
      %v3939 = vpop.f32.mrb[0].mxu0
      %3940 = vmatprep.mubr.f32.mxu0 0.0
      %3941 = vmatmul.mubr.f32.gmra.mrb[0].mxu0 %v3727
      %v3942 = vpop.f32.mrb[0].mxu0
      %v3943 = vadd.f32 0.0, %v3942
      %v3944 = vpop.f32.mrb[0].mxu0
      %3945 = vmatprep.mubr.f32.mxu0 0.0
      %3946 = vmatmul.mubr.f32.gmra.mrb[0].mxu0 %v3730
      %v3947 = vpop.f32.mrb[0].mxu0
      %v3948 = vadd.f32 0.0, %v3947
      %v3949 = vpop.f32.mrb[0].mxu0
      %3950 = vmatprep.mubr.f32.mxu0 0.0
      %3951 = vmatmul.mubr.f32.gmra.mrb[0].mxu0 %v3733
      %v3952 = vpop.f32.mrb[0].mxu0
      %v3953 = vadd.f32 0.0, %v3952
      %v3954 = vpop.f32.mrb[0].mxu0
      %3955 = vmatprep.mubr.f32.mxu0 0.0
      %3956 = vmatmul.mubr.f32.gmra.mrb[0].mxu0 %v3736
      %v3957 = vpop.f32.mrb[0].mxu0
      %v3958 = vadd.f32 0.0, %v3957
      %v3959 = vpop.f32.mrb[0].mxu0
      %3960 = vmatprep.mubr.f32.mxu0 0.0
      %3961 = vmatmul.mubr.f32.gmra.mrb[0].mxu0 %v3739
      %v3962 = vpop.f32.mrb[0].mxu0
      %v3963 = vadd.f32 0.0, %v3962
      %v3964 = vpop.f32.mrb[0].mxu0
      %3965 = vmatprep.mubr.f32.mxu0 0.0
      %3966 = vmatmul.mubr.f32.gmra.mrb[0].mxu0 %v3742
      %v3967 = vpop.f32.mrb[0].mxu0
      %v3968 = vadd.f32 0.0, %v3967
      %v3969 = vpop.f32.mrb[0].mxu0
      %3970 = vmatprep.mubr.f32.mxu0 0.0
      %3971 = vmatmul.mubr.f32.gmra.mrb[0].mxu0 %v3745
      %v3972 = vpop.f32.mrb[0].mxu0
      %v3973 = vadd.f32 0.0, %v3972
      %v3974 = vpop.f32.mrb[0].mxu0
      %3975 = vmatprep.mubr.f32.mxu0 0.0
      %3976 = vmatmul.mubr.f32.gmra.mrb[0].mxu0 %v3748
      %v3977 = vpop.f32.mrb[0].mxu0
      %v3978 = vadd.f32 0.0, %v3977
      %v3979 = vpop.f32.mrb[0].mxu0
      %3980 = vmatprep.mubr.f32.mxu0 0.0
      %3981 = vmatmul.mubr.f32.gmra.mrb[0].mxu0 %v3751
      %v3982 = vpop.f32.mrb[0].mxu0
      %v3983 = vadd.f32 0.0, %v3982
      %v3984 = vpop.f32.mrb[0].mxu0
      %3985 = vmatprep.mubr.f32.mxu0 0.0
      %3986 = vmatmul.mubr.f32.gmra.mrb[0].mxu0 %v3754
      %v3987 = vpop.f32.mrb[0].mxu0
      %v3988 = vadd.f32 0.0, %v3987
      %v3989 = vpop.f32.mrb[0].mxu0
      %3990 = vmatprep.mubr.f32.mxu0 0.0
      %3991 = vmatmul.mubr.f32.gmra.mrb[0].mxu0 %v3757
      %v3992 = vpop.f32.mrb[0].mxu0
      %v3993 = vadd.f32 0.0, %v3992
      %v3994 = vpop.f32.mrb[0].mxu0
      %3995 = vmatprep.mubr.f32.mxu0 0.0
      %3996 = vmatmul.mubr.f32.gmra.mrb[0].mxu0 %v3760
      %v3997 = vpop.f32.mrb[0].mxu0
      %v3998 = vadd.f32 0.0, %v3997
      %v3999 = vpop.f32.mrb[0].mxu0
      %4000 = vmatprep.mubr.f32.mxu0 0.0
      %4001 = vmatmul.mubr.f32.gmra.mrb[0].mxu0 %v3763
      %v4002 = vpop.f32.mrb[0].mxu0
      %v4003 = vadd.f32 0.0, %v4002
      %v4004 = vpop.f32.mrb[0].mxu0
      %4005 = vmatprep.mubr.f32.mxu0 0.0
      %4006 = vmatmul.mubr.f32.gmra.mrb[0].mxu0 %v3766
      %v4007 = vpop.f32.mrb[0].mxu0
      %v4008 = vadd.f32 0.0, %v4007
      %v4009 = vpop.f32.mrb[0].mxu0
      %4010 = vmatprep.mubr.f32.mxu0 0.0
      %4011 = vmatmul.mubr.f32.gmra.mrb[0].mxu0 %v3769
      %v4012 = vpop.f32.mrb[0].mxu0
      %v4013 = vadd.f32 0.0, %v4012
      %v4014 = vpop.f32.mrb[0].mxu0
      %4015 = vdwg.mxu0
      %v4016 = vadd.f32 %v3589, %v3838
      %v4017 = vadd.f32 %v3590, %v3843
      %v4018 = vadd.f32 %v3591, %v3848
      %v4019 = vadd.f32 %v3592, %v3853
      %v4020 = vadd.f32 %v3593, %v3858
      %v4021 = vadd.f32 %v3594, %v3863
      %v4022 = vadd.f32 %v3595, %v3868
      %v4023 = vadd.f32 %v3596, %v3873
      %v4024 = vadd.f32 %v3597, %v3878
      %v4025 = vadd.f32 %v3598, %v3883
      %v4026 = vadd.f32 %v3599, %v3888
      %v4027 = vadd.f32 %v3600, %v3893
      %v4028 = vadd.f32 %v3601, %v3898
      %v4029 = vadd.f32 %v3602, %v3903
      %v4030 = vadd.f32 %v3603, %v3908
      %v4031 = vadd.f32 %v3604, %v3913
      %v4032 = vadd.f32 %v3605, %v3918
      %v4033 = vadd.f32 %v3606, %v3923
      %v4034 = vadd.f32 %v3607, %v3928
      %v4035 = vadd.f32 %v3608, %v3933
      %v4036 = vadd.f32 %v3609, %v3938
      %v4037 = vadd.f32 %v3610, %v3943
      %v4038 = vadd.f32 %v3611, %v3948
      %v4039 = vadd.f32 %v3612, %v3953
      %v4040 = vadd.f32 %v3613, %v3958
      %v4041 = vadd.f32 %v3614, %v3963
      %v4042 = vadd.f32 %v3615, %v3968
      %v4043 = vadd.f32 %v3616, %v3973
      %v4044 = vadd.f32 %v3617, %v3978
      %v4045 = vadd.f32 %v3618, %v3983
      %v4046 = vadd.f32 %v3619, %v3988
      %v4047 = vadd.f32 %v3620, %v3993
      %v4048 = vadd.f32 %v3621, %v3998
      %v4049 = vadd.f32 %v3622, %v4003
      %v4050 = vadd.f32 %v3623, %v4008
      %v4051 = vadd.f32 %v3624, %v4013
      %v4052 = vld [vmem:[#allocation2] sm:$0xff]
      %v4053 = vld [vmem:[#allocation2 + $0x8] sm:$0xff]
      %v4054 = vld [vmem:[#allocation2 + $0x10] sm:$0xff]
      %v4055 = vld [vmem:[#allocation2 + $0x18] sm:$0xff]
      %v4056 = vld [vmem:[#allocation2 + $0x20] sm:$0xff]
      %v4057 = vld [vmem:[#allocation2 + $0x28] sm:$0xff]
      %v4058 = vld [vmem:[#allocation2 + $0x30] sm:$0xff]
      %v4059 = vld [vmem:[#allocation2 + $0x38] sm:$0xff]
      %v4060 = vld [vmem:[#allocation2 + $0x40] sm:$0xff]
      %v4061 = vld [vmem:[#allocation2 + $0x48] sm:$0xff]
      %v4062 = vld [vmem:[#allocation2 + $0x50] sm:$0xff]
      %v4063 = vld [vmem:[#allocation2 + $0x58] sm:$0xff]
      %v4064 = vld [vmem:[#allocation2 + $0x60] sm:$0xff]
      %v4065 = vld [vmem:[#allocation2 + $0x68] sm:$0xff]
      %v4066 = vld [vmem:[#allocation2 + $0x70] sm:$0xff]
      %v4067 = vld [vmem:[#allocation2 + $0x78] sm:$0xff]
      %v4068 = vld [vmem:[#allocation2 + $0x80] sm:$0xff]
      %v4069 = vld [vmem:[#allocation2 + $0x88] sm:$0xff]
      %v4070 = vld [vmem:[#allocation2 + $0x90] sm:$0xff]
      %v4071 = vld [vmem:[#allocation2 + $0x98] sm:$0xff]
      %v4072 = vld [vmem:[#allocation2 + $0xa0] sm:$0xff]
      %v4073 = vld [vmem:[#allocation2 + $0xa8] sm:$0xff]
      %v4074 = vld [vmem:[#allocation2 + $0xb0] sm:$0xff]
      %v4075 = vld [vmem:[#allocation2 + $0xb8] sm:$0xff]
      %v4076 = vld [vmem:[#allocation2 + $0xc0] sm:$0xff]
      %v4077 = vld [vmem:[#allocation2 + $0xc8] sm:$0xff]
      %v4078 = vld [vmem:[#allocation2 + $0xd0] sm:$0xff]
      %v4079 = vld [vmem:[#allocation2 + $0xd8] sm:$0xff]
      %v4080 = vld [vmem:[#allocation2 + $0xe0] sm:$0xff]
      %v4081 = vld [vmem:[#allocation2 + $0xe8] sm:$0xff]
      %v4082 = vld [vmem:[#allocation2 + $0xf0] sm:$0xff]
      %v4083 = vld [vmem:[#allocation2 + $0xf8] sm:$0xff]
      %v4084 = vld [vmem:[#allocation2 + $0x100] sm:$0xff]
      %v4085 = vld [vmem:[#allocation2 + $0x108] sm:$0xff]
      %v4086 = vld [vmem:[#allocation2 + $0x110] sm:$0xff]
      %v4087 = vld [vmem:[#allocation2 + $0x118] sm:$0x3f]
      %v4088 = vadd.f32 %v4052, %v4016
      %v4089 = vadd.f32 %v4053, %v4017
      %v4090 = vadd.f32 %v4054, %v4018
      %v4091 = vadd.f32 %v4055, %v4019
      %v4092 = vadd.f32 %v4056, %v4020
      %v4093 = vadd.f32 %v4057, %v4021
      %v4094 = vadd.f32 %v4058, %v4022
      %v4095 = vadd.f32 %v4059, %v4023
      %v4096 = vadd.f32 %v4060, %v4024
      %v4097 = vadd.f32 %v4061, %v4025
      %v4098 = vadd.f32 %v4062, %v4026
      %v4099 = vadd.f32 %v4063, %v4027
      %v4100 = vadd.f32 %v4064, %v4028
      %v4101 = vadd.f32 %v4065, %v4029
      %v4102 = vadd.f32 %v4066, %v4030
      %v4103 = vadd.f32 %v4067, %v4031
      %v4104 = vadd.f32 %v4068, %v4032
      %v4105 = vadd.f32 %v4069, %v4033
      %v4106 = vadd.f32 %v4070, %v4034
      %v4107 = vadd.f32 %v4071, %v4035
      %v4108 = vadd.f32 %v4072, %v4036
      %v4109 = vadd.f32 %v4073, %v4037
      %v4110 = vadd.f32 %v4074, %v4038
      %v4111 = vadd.f32 %v4075, %v4039
      %v4112 = vadd.f32 %v4076, %v4040
      %v4113 = vadd.f32 %v4077, %v4041
      %v4114 = vadd.f32 %v4078, %v4042
      %v4115 = vadd.f32 %v4079, %v4043
      %v4116 = vadd.f32 %v4080, %v4044
      %v4117 = vadd.f32 %v4081, %v4045
      %v4118 = vadd.f32 %v4082, %v4046
      %v4119 = vadd.f32 %v4083, %v4047
      %v4120 = vadd.f32 %v4084, %v4048
      %v4121 = vadd.f32 %v4085, %v4049
      %v4122 = vadd.f32 %v4086, %v4050
      %v4123 = vadd.f32 %v4087, %v4051
      %4124 = vst [vmem:[#allocation2] sm:$0xff] %v4088
      %4125 = vst [vmem:[#allocation2 + $0x8] sm:$0xff] %v4089
      %4126 = vst [vmem:[#allocation2 + $0x10] sm:$0xff] %v4090
      %4127 = vst [vmem:[#allocation2 + $0x18] sm:$0xff] %v4091
      %4128 = vst [vmem:[#allocation2 + $0x20] sm:$0xff] %v4092
      %4129 = vst [vmem:[#allocation2 + $0x28] sm:$0xff] %v4093
      %4130 = vst [vmem:[#allocation2 + $0x30] sm:$0xff] %v4094
      %4131 = vst [vmem:[#allocation2 + $0x38] sm:$0xff] %v4095
      %4132 = vst [vmem:[#allocation2 + $0x40] sm:$0xff] %v4096
      %4133 = vst [vmem:[#allocation2 + $0x48] sm:$0xff] %v4097
      %4134 = vst [vmem:[#allocation2 + $0x50] sm:$0xff] %v4098
      %4135 = vst [vmem:[#allocation2 + $0x58] sm:$0xff] %v4099
      %4136 = vst [vmem:[#allocation2 + $0x60] sm:$0xff] %v4100
      %4137 = vst [vmem:[#allocation2 + $0x68] sm:$0xff] %v4101
      %4138 = vst [vmem:[#allocation2 + $0x70] sm:$0xff] %v4102
      %4139 = vst [vmem:[#allocation2 + $0x78] sm:$0xff] %v4103
      %4140 = vst [vmem:[#allocation2 + $0x80] sm:$0xff] %v4104
      %4141 = vst [vmem:[#allocation2 + $0x88] sm:$0xff] %v4105
      %4142 = vst [vmem:[#allocation2 + $0x90] sm:$0xff] %v4106
      %4143 = vst [vmem:[#allocation2 + $0x98] sm:$0xff] %v4107
      %4144 = vst [vmem:[#allocation2 + $0xa0] sm:$0xff] %v4108
      %4145 = vst [vmem:[#allocation2 + $0xa8] sm:$0xff] %v4109
      %4146 = vst [vmem:[#allocation2 + $0xb0] sm:$0xff] %v4110
      %4147 = vst [vmem:[#allocation2 + $0xb8] sm:$0xff] %v4111
      %4148 = vst [vmem:[#allocation2 + $0xc0] sm:$0xff] %v4112
      %4149 = vst [vmem:[#allocation2 + $0xc8] sm:$0xff] %v4113
      %4150 = vst [vmem:[#allocation2 + $0xd0] sm:$0xff] %v4114
      %4151 = vst [vmem:[#allocation2 + $0xd8] sm:$0xff] %v4115
      %4152 = vst [vmem:[#allocation2 + $0xe0] sm:$0xff] %v4116
      %4153 = vst [vmem:[#allocation2 + $0xe8] sm:$0xff] %v4117
      %4154 = vst [vmem:[#allocation2 + $0xf0] sm:$0xff] %v4118
      %4155 = vst [vmem:[#allocation2 + $0xf8] sm:$0xff] %v4119
      %4156 = vst [vmem:[#allocation2 + $0x100] sm:$0xff] %v4120
      %4157 = vst [vmem:[#allocation2 + $0x108] sm:$0xff] %v4121
      %4158 = vst [vmem:[#allocation2 + $0x110] sm:$0xff] %v4122
      %4159 = vst [vmem:[#allocation2 + $0x118] sm:$0x3f] %v4123
      %p4160 = scmp.eq.s32.totalorder %s21, 2
      // Predicated region
      $region37: #{a_call__.3} parent=31 // pred_check
        %p4161 = pneg %p4160
      $region38: #{a_call__.3} parent=31 // pred_check_branch
        %4163 = sbr.rel (%p4161) target = $region40
      $region39: #{a_call__.3} parent=31 // pred_region
        %v4164 = vld [vmem:[#allocation2] sm:$0xff]
        %v4165 = vld [vmem:[#allocation2 + $0x8] sm:$0xff]
        %v4166 = vld [vmem:[#allocation2 + $0x10] sm:$0xff]
        %v4167 = vld [vmem:[#allocation2 + $0x18] sm:$0xff]
        %v4168 = vld [vmem:[#allocation2 + $0x20] sm:$0xff]
        %v4169 = vld [vmem:[#allocation2 + $0x28] sm:$0xff]
        %v4170 = vld [vmem:[#allocation2 + $0x30] sm:$0xff]
        %v4171 = vld [vmem:[#allocation2 + $0x38] sm:$0xff]
        %v4172 = vld [vmem:[#allocation2 + $0x40] sm:$0xff]
        %v4173 = vld [vmem:[#allocation2 + $0x48] sm:$0xff]
        %v4174 = vld [vmem:[#allocation2 + $0x50] sm:$0xff]
        %v4175 = vld [vmem:[#allocation2 + $0x58] sm:$0xff]
        %v4176 = vld [vmem:[#allocation2 + $0x60] sm:$0xff]
        %v4177 = vld [vmem:[#allocation2 + $0x68] sm:$0xff]
        %v4178 = vld [vmem:[#allocation2 + $0x70] sm:$0xff]
        %v4179 = vld [vmem:[#allocation2 + $0x78] sm:$0xff]
        %v4180 = vld [vmem:[#allocation2 + $0x80] sm:$0xff]
        %v4181 = vld [vmem:[#allocation2 + $0x88] sm:$0xff]
        %v4182 = vld [vmem:[#allocation2 + $0x90] sm:$0xff]
        %v4183 = vld [vmem:[#allocation2 + $0x98] sm:$0xff]
        %v4184 = vld [vmem:[#allocation2 + $0xa0] sm:$0xff]
        %v4185 = vld [vmem:[#allocation2 + $0xa8] sm:$0xff]
        %v4186 = vld [vmem:[#allocation2 + $0xb0] sm:$0xff]
        %v4187 = vld [vmem:[#allocation2 + $0xb8] sm:$0xff]
        %v4188 = vld [vmem:[#allocation2 + $0xc0] sm:$0xff]
        %v4189 = vld [vmem:[#allocation2 + $0xc8] sm:$0xff]
        %v4190 = vld [vmem:[#allocation2 + $0xd0] sm:$0xff]
        %v4191 = vld [vmem:[#allocation2 + $0xd8] sm:$0xff]
        %v4192 = vld [vmem:[#allocation2 + $0xe0] sm:$0xff]
        %v4193 = vld [vmem:[#allocation2 + $0xe8] sm:$0xff]
        %v4194 = vld [vmem:[#allocation2 + $0xf0] sm:$0xff]
        %v4195 = vld [vmem:[#allocation2 + $0xf8] sm:$0xff]
        %v4196 = vld [vmem:[#allocation2 + $0x100] sm:$0xff]
        %v4197 = vld [vmem:[#allocation2 + $0x108] sm:$0xff]
        %v4198 = vld [vmem:[#allocation2 + $0x110] sm:$0xff]
        %v4199 = vld [vmem:[#allocation2 + $0x118] sm:$0x3f]
        %v4200 = vld [vmem:[%s2] sm:$0x1]
        %v4202 = vlaneseq
        %v4203 = vshrl.u32 %v4202, 7
        %v4204 = vsub.s32 0, %v4203
        %v4205 = vrot.slane %v4200, %v4204
        %v4207 = vadd.f32 %v4164, %v4205
        %v4208 = vadd.f32 %v4165, %v4205
        %v4209 = vadd.f32 %v4166, %v4205
        %v4210 = vadd.f32 %v4167, %v4205
        %v4211 = vadd.f32 %v4168, %v4205
        %v4212 = vadd.f32 %v4169, %v4205
        %v4213 = vadd.f32 %v4170, %v4205
        %v4214 = vadd.f32 %v4171, %v4205
        %v4215 = vadd.f32 %v4172, %v4205
        %v4216 = vadd.f32 %v4173, %v4205
        %v4217 = vadd.f32 %v4174, %v4205
        %v4218 = vadd.f32 %v4175, %v4205
        %v4219 = vadd.f32 %v4176, %v4205
        %v4220 = vadd.f32 %v4177, %v4205
        %v4221 = vadd.f32 %v4178, %v4205
        %v4222 = vadd.f32 %v4179, %v4205
        %v4223 = vadd.f32 %v4180, %v4205
        %v4224 = vadd.f32 %v4181, %v4205
        %v4225 = vadd.f32 %v4182, %v4205
        %v4226 = vadd.f32 %v4183, %v4205
        %v4227 = vadd.f32 %v4184, %v4205
        %v4228 = vadd.f32 %v4185, %v4205
        %v4229 = vadd.f32 %v4186, %v4205
        %v4230 = vadd.f32 %v4187, %v4205
        %v4231 = vadd.f32 %v4188, %v4205
        %v4232 = vadd.f32 %v4189, %v4205
        %v4233 = vadd.f32 %v4190, %v4205
        %v4234 = vadd.f32 %v4191, %v4205
        %v4235 = vadd.f32 %v4192, %v4205
        %v4236 = vadd.f32 %v4193, %v4205
        %v4237 = vadd.f32 %v4194, %v4205
        %v4238 = vadd.f32 %v4195, %v4205
        %v4239 = vadd.f32 %v4196, %v4205
        %v4240 = vadd.f32 %v4197, %v4205
        %v4241 = vadd.f32 %v4198, %v4205
        %v4242 = vadd.f32 %v4199, %v4205
        %v4243 = vmax.f32 %v4207, 0.0
        %v4244 = vmax.f32 %v4208, 0.0
        %v4245 = vmax.f32 %v4209, 0.0
        %v4246 = vmax.f32 %v4210, 0.0
        %v4247 = vmax.f32 %v4211, 0.0
        %v4248 = vmax.f32 %v4212, 0.0
        %v4249 = vmax.f32 %v4213, 0.0
        %v4250 = vmax.f32 %v4214, 0.0
        %v4251 = vmax.f32 %v4215, 0.0
        %v4252 = vmax.f32 %v4216, 0.0
        %v4253 = vmax.f32 %v4217, 0.0
        %v4254 = vmax.f32 %v4218, 0.0
        %v4255 = vmax.f32 %v4219, 0.0
        %v4256 = vmax.f32 %v4220, 0.0
        %v4257 = vmax.f32 %v4221, 0.0
        %v4258 = vmax.f32 %v4222, 0.0
        %v4259 = vmax.f32 %v4223, 0.0
        %v4260 = vmax.f32 %v4224, 0.0
        %v4261 = vmax.f32 %v4225, 0.0
        %v4262 = vmax.f32 %v4226, 0.0
        %v4263 = vmax.f32 %v4227, 0.0
        %v4264 = vmax.f32 %v4228, 0.0
        %v4265 = vmax.f32 %v4229, 0.0
        %v4266 = vmax.f32 %v4230, 0.0
        %v4267 = vmax.f32 %v4231, 0.0
        %v4268 = vmax.f32 %v4232, 0.0
        %v4269 = vmax.f32 %v4233, 0.0
        %v4270 = vmax.f32 %v4234, 0.0
        %v4271 = vmax.f32 %v4235, 0.0
        %v4272 = vmax.f32 %v4236, 0.0
        %v4273 = vmax.f32 %v4237, 0.0
        %v4274 = vmax.f32 %v4238, 0.0
        %v4275 = vmax.f32 %v4239, 0.0
        %v4276 = vmax.f32 %v4240, 0.0
        %v4277 = vmax.f32 %v4241, 0.0
        %v4278 = vmax.f32 %v4242, 0.0
        %4279 = vst [vmem:[%s240] sm:$0xff] %v4243
        %4280 = vst [vmem:[%s240 + $0x8] sm:$0xff] %v4244
        %4281 = vst [vmem:[%s240 + $0x10] sm:$0xff] %v4245
        %4282 = vst [vmem:[%s240 + $0x18] sm:$0xff] %v4246
        %4283 = vst [vmem:[%s240 + $0x20] sm:$0xff] %v4247
        %4284 = vst [vmem:[%s240 + $0x28] sm:$0xff] %v4248
        %4285 = vst [vmem:[%s240 + $0x30] sm:$0xff] %v4249
        %4286 = vst [vmem:[%s240 + $0x38] sm:$0xff] %v4250
        %4287 = vst [vmem:[%s240 + $0x40] sm:$0xff] %v4251
        %4288 = vst [vmem:[%s240 + $0x48] sm:$0xff] %v4252
        %4289 = vst [vmem:[%s240 + $0x50] sm:$0xff] %v4253
        %4290 = vst [vmem:[%s240 + $0x58] sm:$0xff] %v4254
        %4291 = vst [vmem:[%s240 + $0x60] sm:$0xff] %v4255
        %4292 = vst [vmem:[%s240 + $0x68] sm:$0xff] %v4256
        %4293 = vst [vmem:[%s240 + $0x70] sm:$0xff] %v4257
        %4294 = vst [vmem:[%s240 + $0x78] sm:$0xff] %v4258
        %4295 = vst [vmem:[%s240 + $0x80] sm:$0xff] %v4259
        %4296 = vst [vmem:[%s240 + $0x88] sm:$0xff] %v4260
        %4297 = vst [vmem:[%s240 + $0x90] sm:$0xff] %v4261
        %4298 = vst [vmem:[%s240 + $0x98] sm:$0xff] %v4262
        %4299 = vst [vmem:[%s240 + $0xa0] sm:$0xff] %v4263
        %4300 = vst [vmem:[%s240 + $0xa8] sm:$0xff] %v4264
        %4301 = vst [vmem:[%s240 + $0xb0] sm:$0xff] %v4265
        %4302 = vst [vmem:[%s240 + $0xb8] sm:$0xff] %v4266
        %4303 = vst [vmem:[%s240 + $0xc0] sm:$0xff] %v4267
        %4304 = vst [vmem:[%s240 + $0xc8] sm:$0xff] %v4268
        %4305 = vst [vmem:[%s240 + $0xd0] sm:$0xff] %v4269
        %4306 = vst [vmem:[%s240 + $0xd8] sm:$0xff] %v4270
        %4307 = vst [vmem:[%s240 + $0xe0] sm:$0xff] %v4271
        %4308 = vst [vmem:[%s240 + $0xe8] sm:$0xff] %v4272
        %4309 = vst [vmem:[%s240 + $0xf0] sm:$0xff] %v4273
        %4310 = vst [vmem:[%s240 + $0xf8] sm:$0xff] %v4274
        %4311 = vst [vmem:[%s240 + $0x100] sm:$0xff] %v4275
        %4312 = vst [vmem:[%s240 + $0x108] sm:$0xff] %v4276
        %4313 = vst [vmem:[%s240 + $0x110] sm:$0xff] %v4277
        %4314 = vst [vmem:[%s240 + $0x118] sm:$0x3f] %v4278
      $region40: #{a_call__.3} parent=31 // pred_fallthru
        _
      %p4315 = scmp.lt.s32.totalorder %s19, 1
      %s4316 = scalar_select %p4315, %s19, 1
      %p4317 = scmp.lt.s32.totalorder %s20, 15
      %s4318 = scalar_select %p4317, %s20, 15
      %s4319 = smul.addr %s4318, 36
      %s4320 = smul.addr %s4316, 576
      %s4321 = sadd.s32 %s4319, %s4320
      %s4322 = smul.addr %s4321, 8
      %s4323 = scalar_lea.vmem %s3, %s4322
      // Predicated region
      $region41: #{a_call__.3} parent=31 // pred_check
        %p4324 = pneg %p130
      $region42: #{a_call__.3} parent=31 // pred_check_branch
        %4326 = sbr.rel (%p4324) target = $region44
      $region43: #{a_call__.3} parent=31 // pred_region
        _
      $region44: #{a_call__.3} parent=31 // pred_fallthru
        _
    $region32: #{a_call__.3} parent=5 // pred_fallthru
      _
    %p4327 = scmp.le.s32.totalorder 2, %s9
    // Predicated region
    $region45: #{a_call__.3} parent=5 // pred_check
      %p4328 = pneg %p4327
    $region46: #{a_call__.3} parent=5 // pred_check_branch
      %4330 = sbr.rel (%p4328) target = $region48
    $region47: #{a_call__.3} parent=5 // pred_region
      %s4331 = ssub.s32 %s9, 2
      // Predicated region
      $region49: #{a_call__.3} parent=47 // pred_check
        %p4332 = pneg %p136
      $region50: #{a_call__.3} parent=47 // pred_check_branch
        %4334 = sbr.rel (%p4332) target = $region52
      $region51: #{a_call__.3} parent=47 // pred_region
        %p4335 = scmp.lt.s32.totalorder %s22, 1
        %s4336 = scalar_select %p4335, %s22, 1
        %p4337 = scmp.lt.s32.totalorder %s23, 15
        %s4338 = scalar_select %p4337, %s23, 15
        %s4339 = smul.addr %s4338, 36
        %s4340 = smul.addr %s4336, 576
        %s4341 = sadd.s32 %s4339, %s4340
        %s4342 = smul.addr %s4341, 8
        %s4343 = scalar_lea.vmem %s3, %s4342
      $region52: #{a_call__.3} parent=47 // pred_fallthru
        _
    $region48: #{a_call__.3} parent=5 // pred_fallthru
      _
  $region6: #{a_call__.3} parent=0 // loop_footer
    %s13 = sadd.s32 1, %s9
  $region7: #{a_call__.3} parent=0 // loop_footer_branch
    %8 = sbr.rel target = $region3
  $region8: #{a_call__.3} parent=0 // loop_exit
    _

</llo_original>
